<compile_context>
chip_gen: v7x
topology: tpu7x:2x2x1
jax: 0.10.0
libtpu: 0.0.40
codegen_flags: <defaults>
</compile_context>

<pallas_src>
import jax
import jax.numpy as jnp
from jax import lax
from jax.experimental import pallas as pl
from jax.experimental.pallas import tpu as pltpu

HIDDEN = 60
NUM_LSTM_LAYERS = 2
NUM_CLASSES = 2
INPUT_SIZE = 22            # nn.LSTM(22, hidden_size, ...)
IN_PAD = 32                # input feature dim padded for a tile-aligned matmul
LANE = 128                 # TPU lane tile; each gate gets a 128-wide slot
GATES = 4
GATE_W = GATES * LANE      # 512
# Fused slot order (i, f, o, g); slot s holds PyTorch gate _SLOT2GATE[s]
# (PyTorch order is i, f, g, o).
_SLOT2GATE = (0, 1, 3, 2)


def rnn_kernel(x_ref, wih0_ref, b0_ref, whh0_hbm, w1_hbm, b1_ref, wfc_hbm,
               bfc_ref, out_ref, xp_ref, whh0_v, w1_v, wfc_v, sem):
    SB = x_ref.shape[0]
    Bp = out_ref.shape[0]
    S = SB // Bp

    # ---- start the recurrent-weight DMAs so they overlap the hoisted matmul -
    cp_whh0 = pltpu.make_async_copy(whh0_hbm, whh0_v, sem.at[0])
    cp_w1 = pltpu.make_async_copy(w1_hbm, w1_v, sem.at[1])
    cp_wfc = pltpu.make_async_copy(wfc_hbm, wfc_v, sem.at[2])
    cp_whh0.start(); cp_w1.start(); cp_wfc.start()

    # ---- hoisted layer-0 input projection for ALL timesteps (one fat matmul),
    #      with layer-0 bias (b_ih + b_hh) folded in --------------------------
    xp_ref[...] = (jnp.dot(x_ref[...], wih0_ref[...],
                           preferred_element_type=jnp.float32) + b0_ref[...])

    cp_whh0.wait(); cp_w1.wait(); cp_wfc.wait()

    b1 = jnp.broadcast_to(b1_ref[...], (Bp, GATE_W))     # hoisted broadcast

    def cell(pre, c):
        # pre: (Bp, 4*128), slots [i | f | o | g], each 128-lane aligned.
        sig = jax.nn.sigmoid(pre[:, :3 * LANE])           # i, f, o in one EUP slab
        g = jnp.tanh(pre[:, 3 * LANE:])
        i = sig[:, :LANE]
        f = sig[:, LANE:2 * LANE]
        o = sig[:, 2 * LANE:3 * LANE]
        c_new = f * c + i * g
        h_new = o * jnp.tanh(c_new)
        return h_new, c_new

    def step(t, carry):
        # Wavefront: pre0 (layer-0 pre-activation for step t) was computed in
        # the previous iteration, so layer-0(t+1) overlaps layer-1(t).
        h0, c0, h1, c1, pre0 = carry
        h0n, c0n = cell(pre0, c0)

        # Next step's layer-0 recurrent projection (clamped on the last step;
        # that result is dead and never used).
        nrow = pl.multiple_of(jnp.minimum(t + 1, S - 1) * Bp, Bp)
        pre0_next = xp_ref[pl.ds(nrow, Bp), :] + jnp.dot(
            h0n.astype(jnp.bfloat16), whh0_v[...],
            preferred_element_type=jnp.float32)

        # Layer 1: single fused 256-deep contraction against [wih1; whh1].
        lhs1 = jnp.concatenate([h0n, h1], axis=-1).astype(jnp.bfloat16)
        pre1 = jnp.dot(lhs1, w1_v[...],
                       preferred_element_type=jnp.float32) + b1
        h1n, c1n = cell(pre1, c1)
        return (h0n, c0n, h1n, c1n, pre0_next)

    zeros = jnp.zeros((Bp, LANE), jnp.float32)
    pre0_init = xp_ref[pl.ds(0, Bp), :]        # h0 starts at 0 -> no whh0 term
    carry = (zeros, zeros, zeros, zeros, pre0_init)
    _, _, h1, _, _ = lax.fori_loop(0, S, step, carry, unroll=True)

    # Final Linear on the last timestep's top-layer hidden state.
    # wfc / bfc are lane-padded to 128 so this store is unmasked.
    out_ref[...] = (jnp.dot(h1.astype(jnp.bfloat16), wfc_v[...],
                            preferred_element_type=jnp.float32) + bfc_ref[...])


@jax.jit
def rnn_with_embed_forward(cat_ids, cont, packed):
    """cat_ids: (B, S) int32; cont: (B, S, cont_dim) float32 -> (B, NUM_CLASSES)."""
    B, S = cat_ids.shape
    # --- glue: embedding lookup + concat, as in the PyTorch forward (fused by jit) ---
    emb = jnp.take(packed["emb"], cat_ids, axis=0)                  # (B, S, emb_dim)
    # emb_dropout: identity in eval mode
    x = jnp.concatenate([emb, cont.astype(jnp.float32)], axis=-1)   # (B, S, 22)
    x = jnp.transpose(x, (1, 0, 2))                                  # (S, B, 22)

    Bp = ((B + 7) // 8) * 8                                          # sublane-pad batch
    x = jnp.pad(x, ((0, 0), (0, Bp - B), (0, IN_PAD - x.shape[-1]))) # lane-pad 22 -> 32
    x = x.reshape(S * Bp, IN_PAD).astype(jnp.bfloat16)               # time-major rows

    vmem = pl.BlockSpec(memory_space=pltpu.MemorySpace.VMEM)
    hbm = pl.BlockSpec(memory_space=pl.ANY)
    out_pad = pl.pallas_call(
        rnn_kernel,
        out_shape=jax.ShapeDtypeStruct((Bp, LANE), jnp.float32),
        in_specs=[vmem, vmem, vmem, hbm, hbm, vmem, hbm, vmem],
        out_specs=vmem,
        scratch_shapes=[
            pltpu.VMEM((S * Bp, GATE_W), jnp.float32),      # hoisted layer-0 proj
            pltpu.VMEM((LANE, GATE_W), jnp.bfloat16),       # whh0
            pltpu.VMEM((2 * LANE, GATE_W), jnp.bfloat16),   # fused [wih1; whh1]
            pltpu.VMEM((LANE, LANE), jnp.bfloat16),         # wfc
            pltpu.SemaphoreType.DMA((3,)),
        ],
    )(x,
      packed["wih0"], packed["b0"], packed["whh0"],
      packed["w1"], packed["b1"], packed["wfc"], packed["bfc"])
    return out_pad[:B, :NUM_CLASSES]


# ----------------------------- parameters -----------------------------------

def init_raw_params(key, vocab_size, emb_dim, cont_dim):
    """PyTorch-style params: per-gate (i,f,g,o), right-multiply form."""
    ks = jax.random.split(key, 12)
    bound = 1.0 / float(HIDDEN) ** 0.5

    def u(k, shape):
        return jax.random.uniform(k, shape, jnp.float32, -bound, bound)

    d_in0 = emb_dim + cont_dim
    assert d_in0 == INPUT_SIZE, "emb_dim + cont_dim must equal LSTM input size 22"
    return {
        "emb": jax.random.normal(ks[0], (vocab_size, emb_dim), jnp.float32),
        "wih0": u(ks[1], (GATES, d_in0, HIDDEN)),
        "whh0": u(ks[2], (GATES, HIDDEN, HIDDEN)),
        "b0": u(ks[3], (GATES, HIDDEN)) + u(ks[4], (GATES, HIDDEN)),   # b_ih + b_hh
        "wih1": u(ks[5], (GATES, HIDDEN, HIDDEN)),
        "whh1": u(ks[6], (GATES, HIDDEN, HIDDEN)),
        "b1": u(ks[7], (GATES, HIDDEN)) + u(ks[8], (GATES, HIDDEN)),
        "wfc": u(ks[9], (HIDDEN, NUM_CLASSES)),
        "bfc": u(ks[10], (NUM_CLASSES,)),
    }


def _pack_gate_w(w, in_rows):
    # w: (4, in_dim, H) PyTorch gate order -> (in_rows, 4*128) f32, slots
    # (i,f,o,g), zero-padded in unused input rows and lanes H..127 of each slot.
    _, in_dim, h = w.shape
    out = jnp.zeros((in_rows, GATE_W), jnp.float32)
    for slot, gate in enumerate(_SLOT2GATE):
        out = out.at[:in_dim, slot * LANE: slot * LANE + h].set(w[gate])
    return out


def _pack_gate_b(b):
    # b: (4, H) -> (1, 4*128) f32, zero-padded per slot.
    _, h = b.shape
    out = jnp.zeros((1, GATE_W), jnp.float32)
    for slot, gate in enumerate(_SLOT2GATE):
        out = out.at[0, slot * LANE: slot * LANE + h].set(b[gate])
    return out


def _check_zero_padding(p):
    """The recurrence relies on padded gate lanes / padded weight rows being
    exactly zero (sigmoid(0)=0.5 and tanh(0)=0 keep padded h/c lanes at 0)."""
    def pad_lanes(a):
        return jnp.stack([a[..., s * LANE + HIDDEN:(s + 1) * LANE]
                          for s in range(GATES)])
    ok = True
    for name in ("wih0", "whh0", "w1", "b0", "b1"):
        ok &= bool(jnp.all(pad_lanes(p[name].astype(jnp.float32)) == 0))
    ok &= bool(jnp.all(p["wih0"].astype(jnp.float32)[INPUT_SIZE:] == 0))
    ok &= bool(jnp.all(p["whh0"].astype(jnp.float32)[HIDDEN:] == 0))
    ok &= bool(jnp.all(p["w1"].astype(jnp.float32)[HIDDEN:LANE] == 0))
    ok &= bool(jnp.all(p["w1"].astype(jnp.float32)[LANE + HIDDEN:] == 0))
    assert ok, "packed-weight padding must be exactly zero"


def pack_params(raw):
    # Fused layer-1 weight: rows 0..127 <- wih1 (input is h0), rows 128..255
    # <- whh1 (input is h1); matches LHS = concat([h0, h1], axis=-1).
    w1 = jnp.concatenate([_pack_gate_w(raw["wih1"], LANE),
                          _pack_gate_w(raw["whh1"], LANE)], axis=0)
    wfc = jnp.zeros((LANE, LANE), jnp.float32).at[:HIDDEN, :NUM_CLASSES].set(raw["wfc"])
    bfc = jnp.zeros((1, LANE), jnp.float32).at[0, :NUM_CLASSES].set(raw["bfc"])
    packed = {
        "emb": raw["emb"],
        "wih0": _pack_gate_w(raw["wih0"], IN_PAD).astype(jnp.bfloat16),  # (32, 512)
        "whh0": _pack_gate_w(raw["whh0"], LANE).astype(jnp.bfloat16),    # (128, 512)
        "b0": _pack_gate_b(raw["b0"]),                                   # (1, 512) f32
        "w1": w1.astype(jnp.bfloat16),                                   # (256, 512)
        "b1": _pack_gate_b(raw["b1"]),                                   # (1, 512) f32
        "wfc": wfc.astype(jnp.bfloat16),                                 # (128, 128)
        "bfc": bfc,                                                      # (1, 128) f32
    }
    _check_zero_padding(packed)
    return packed


# ------------------------ pure-JAX reference (for checking) ------------------

def _dot32(a, b):
    return jnp.dot(a, b, precision=lax.Precision.HIGHEST)


def reference_forward(cat_ids, cont, raw):
    emb = jnp.take(raw["emb"], cat_ids, axis=0)
    x = jnp.concatenate([emb, cont.astype(jnp.float32)], axis=-1)
    B = x.shape[0]
    xs = jnp.transpose(x, (1, 0, 2))                     # (S, B, 22)

    def run_layer(seq, wih, whh, b):
        def step(carry, x_t):
            h, c = carry
            gate = [_dot32(x_t, wih[k]) + _dot32(h, whh[k]) + b[k]
                    for k in range(GATES)]
            i = jax.nn.sigmoid(gate[0])
            f = jax.nn.sigmoid(gate[1])
            g = jnp.tanh(gate[2])
            o = jax.nn.sigmoid(gate[3])
            c = f * c + i * g
            h = o * jnp.tanh(c)
            return (h, c), h
        init = (jnp.zeros((B, HIDDEN), jnp.float32),
                jnp.zeros((B, HIDDEN), jnp.float32))
        _, hs = lax.scan(step, init, seq)
        return hs

    h0s = run_layer(xs, raw["wih0"], raw["whh0"], raw["b0"])
    h1s = run_layer(h0s, raw["wih1"], raw["whh1"], raw["b1"])
    return _dot32(h1s[-1], raw["wfc"]) + raw["bfc"]


if __name__ == "__main__":
    # config consistent with the module:
    # vocab_size = 20 -> emb_dim = min(50, (20+1)//2) = 10, cont_dim = 12, total 22
    vocab_size = 20
    emb_dim = min(50, (vocab_size + 1) // 2)
    cont_dim = INPUT_SIZE - emb_dim
    B, S = 2, 8

    key = jax.random.PRNGKey(0)
    kp, kc, kx = jax.random.split(key, 3)

    raw = init_raw_params(kp, vocab_size, emb_dim, cont_dim)
    packed = pack_params(raw)

    cat_ids = jax.random.randint(kc, (B, S), 0, vocab_size, dtype=jnp.int32)
    cont = jax.random.normal(kx, (B, S, cont_dim), jnp.float32)

    out = jax.block_until_ready(rnn_with_embed_forward(cat_ids, cont, packed))
    assert out.shape == (B, NUM_CLASSES) and out.dtype == jnp.float32

    ref = jax.block_until_ready(reference_forward(cat_ids, cont, raw))
    err = float(jnp.max(jnp.abs(out - ref)))
    # Kernel matmuls run at bf16 (MXU default / bf16-stored weights) vs. the
    # f32 HIGHEST-precision reference, hence the loose-ish tolerance.
    assert err < 2e-2, f"kernel/reference mismatch: {err}"

    print("KERNEL_OK")
</pallas_src>

<mosaic_0001>
module attributes {stable_mosaic.version = 11 : i64} {
  func.func @rnn_kernel(%arg0: memref<64x32xbf16, #tpu.memory_space<vmem>>, %arg1: memref<32x512xbf16, #tpu.memory_space<vmem>>, %arg2: memref<1x512xf32, #tpu.memory_space<vmem>>, %arg3: memref<128x512xbf16, #tpu.memory_space<any>>, %arg4: memref<256x512xbf16, #tpu.memory_space<any>>, %arg5: memref<1x512xf32, #tpu.memory_space<vmem>>, %arg6: memref<128x128xbf16, #tpu.memory_space<any>>, %arg7: memref<1x128xf32, #tpu.memory_space<vmem>>, %arg8: memref<8x128xf32, #tpu.memory_space<vmem>>, %arg9: memref<64x512xf32, #tpu.memory_space<vmem>>, %arg10: memref<128x512xbf16, #tpu.memory_space<vmem>>, %arg11: memref<256x512xbf16, #tpu.memory_space<vmem>>, %arg12: memref<128x128xbf16, #tpu.memory_space<vmem>>, %arg13: memref<3x!tpu.dma_semaphore, #tpu.memory_space<semaphore_mem>>) attributes {dimension_semantics = [], scalar_prefetch = 0 : i64, scratch_operands = 5 : i64, tpu.core_type = #tpu.core_type<tc>} {
    %c0_i32 = arith.constant 0 : i32
    %0 = tpu.memref_slice %arg13[%c0_i32] : memref<3x!tpu.dma_semaphore, #tpu.memory_space<semaphore_mem>> -> memref<1x!tpu.dma_semaphore, #tpu.memory_space<semaphore_mem>>
    %1 = tpu.memref_squeeze %0 : memref<1x!tpu.dma_semaphore, #tpu.memory_space<semaphore_mem>> -> memref<!tpu.dma_semaphore, #tpu.memory_space<semaphore_mem>>
    tpu.enqueue_dma source(%arg3 : memref<128x512xbf16, #tpu.memory_space<any>>) target(%arg10 : memref<128x512xbf16, #tpu.memory_space<vmem>>) target_semaphore(%1 : memref<!tpu.dma_semaphore, #tpu.memory_space<semaphore_mem>>)
    %c1_i32 = arith.constant 1 : i32
    %2 = tpu.memref_slice %arg13[%c1_i32] : memref<3x!tpu.dma_semaphore, #tpu.memory_space<semaphore_mem>> -> memref<1x!tpu.dma_semaphore, #tpu.memory_space<semaphore_mem>>
    %3 = tpu.memref_squeeze %2 : memref<1x!tpu.dma_semaphore, #tpu.memory_space<semaphore_mem>> -> memref<!tpu.dma_semaphore, #tpu.memory_space<semaphore_mem>>
    tpu.enqueue_dma source(%arg4 : memref<256x512xbf16, #tpu.memory_space<any>>) target(%arg11 : memref<256x512xbf16, #tpu.memory_space<vmem>>) target_semaphore(%3 : memref<!tpu.dma_semaphore, #tpu.memory_space<semaphore_mem>>)
    %c2_i32 = arith.constant 2 : i32
    %4 = tpu.memref_slice %arg13[%c2_i32] : memref<3x!tpu.dma_semaphore, #tpu.memory_space<semaphore_mem>> -> memref<1x!tpu.dma_semaphore, #tpu.memory_space<semaphore_mem>>
    %5 = tpu.memref_squeeze %4 : memref<1x!tpu.dma_semaphore, #tpu.memory_space<semaphore_mem>> -> memref<!tpu.dma_semaphore, #tpu.memory_space<semaphore_mem>>
    tpu.enqueue_dma source(%arg6 : memref<128x128xbf16, #tpu.memory_space<any>>) target(%arg12 : memref<128x128xbf16, #tpu.memory_space<vmem>>) target_semaphore(%5 : memref<!tpu.dma_semaphore, #tpu.memory_space<semaphore_mem>>)
    %c0 = arith.constant 0 : index
    %c0_0 = arith.constant 0 : index
    %6 = vector.load %arg0[%c0, %c0_0] : memref<64x32xbf16, #tpu.memory_space<vmem>>, vector<64x32xbf16>
    %c0_1 = arith.constant 0 : index
    %c0_2 = arith.constant 0 : index
    %7 = vector.load %arg1[%c0_1, %c0_2] : memref<32x512xbf16, #tpu.memory_space<vmem>>, vector<32x512xbf16>
    %cst = arith.constant dense<0.000000e+00> : vector<64x512xf32>
    %8 = tpu.matmul %6, %7, %cst {dimension_numbers = #tpu.dot_dimension_numbers<[1], [0], [0], [1], [0, 0, 1, 1], [], []>} : vector<64x32xbf16>, vector<32x512xbf16>, vector<64x512xf32> -> vector<64x512xf32>
    %c0_3 = arith.constant 0 : index
    %c0_4 = arith.constant 0 : index
    %9 = vector.load %arg2[%c0_3, %c0_4] : memref<1x512xf32, #tpu.memory_space<vmem>>, vector<1x512xf32>
    %10 = vector.broadcast %9 : vector<1x512xf32> to vector<64x512xf32>
    %11 = arith.addf %8, %10 : vector<64x512xf32>
    %c0_5 = arith.constant 0 : index
    %c0_6 = arith.constant 0 : index
    %12 = vector.load %arg9[%c0_5, %c0_6] : memref<64x512xf32, #tpu.memory_space<vmem>>, vector<64x512xf32>
    tpu.vector_store %arg9[%c0_5, %c0_6], %11 {strides = array<i32>} : memref<64x512xf32, #tpu.memory_space<vmem>>, vector<64x512xf32>,
    %c0_i32_7 = arith.constant 0 : i32
    %13 = tpu.memref_slice %arg13[%c0_i32_7] : memref<3x!tpu.dma_semaphore, #tpu.memory_space<semaphore_mem>> -> memref<1x!tpu.dma_semaphore, #tpu.memory_space<semaphore_mem>>
    %14 = tpu.memref_squeeze %13 : memref<1x!tpu.dma_semaphore, #tpu.memory_space<semaphore_mem>> -> memref<!tpu.dma_semaphore, #tpu.memory_space<semaphore_mem>>
    tpu.wait_dma2 semaphore(%14 : memref<!tpu.dma_semaphore, #tpu.memory_space<semaphore_mem>>) src(%arg3 : memref<128x512xbf16, #tpu.memory_space<any>>) dst(%arg10 : memref<128x512xbf16, #tpu.memory_space<vmem>>)
    %c1_i32_8 = arith.constant 1 : i32
    %15 = tpu.memref_slice %arg13[%c1_i32_8] : memref<3x!tpu.dma_semaphore, #tpu.memory_space<semaphore_mem>> -> memref<1x!tpu.dma_semaphore, #tpu.memory_space<semaphore_mem>>
    %16 = tpu.memref_squeeze %15 : memref<1x!tpu.dma_semaphore, #tpu.memory_space<semaphore_mem>> -> memref<!tpu.dma_semaphore, #tpu.memory_space<semaphore_mem>>
    tpu.wait_dma2 semaphore(%16 : memref<!tpu.dma_semaphore, #tpu.memory_space<semaphore_mem>>) src(%arg4 : memref<256x512xbf16, #tpu.memory_space<any>>) dst(%arg11 : memref<256x512xbf16, #tpu.memory_space<vmem>>)
    %c2_i32_9 = arith.constant 2 : i32
    %17 = tpu.memref_slice %arg13[%c2_i32_9] : memref<3x!tpu.dma_semaphore, #tpu.memory_space<semaphore_mem>> -> memref<1x!tpu.dma_semaphore, #tpu.memory_space<semaphore_mem>>
    %18 = tpu.memref_squeeze %17 : memref<1x!tpu.dma_semaphore, #tpu.memory_space<semaphore_mem>> -> memref<!tpu.dma_semaphore, #tpu.memory_space<semaphore_mem>>
    tpu.wait_dma2 semaphore(%18 : memref<!tpu.dma_semaphore, #tpu.memory_space<semaphore_mem>>) src(%arg6 : memref<128x128xbf16, #tpu.memory_space<any>>) dst(%arg12 : memref<128x128xbf16, #tpu.memory_space<vmem>>)
    %c0_10 = arith.constant 0 : index
    %c0_11 = arith.constant 0 : index
    %19 = vector.load %arg5[%c0_10, %c0_11] : memref<1x512xf32, #tpu.memory_space<vmem>>, vector<1x512xf32>
    %20 = vector.shape_cast %19 : vector<1x512xf32> to vector<1x512xf32>
    %21 = vector.broadcast %20 : vector<1x512xf32> to vector<8x512xf32>
    %cst_12 = arith.constant 0.000000e+00 : f32
    %22 = vector.broadcast %cst_12 : f32 to vector<8x128xf32>
    %c0_13 = arith.constant 0 : index
    %c0_14 = arith.constant 0 : index
    %23 = vector.load %arg9[%c0_13, %c0_14] : memref<64x512xf32, #tpu.memory_space<vmem>>, vector<8x512xf32>
    %c0_i32_15 = arith.constant 0 : i32
    %24 = vector.extract_strided_slice %23 {offsets = [0, 0], sizes = [8, 384], strides = [1, 1]} : vector<8x512xf32> to vector<8x384xf32>
    %25 = arith.negf %24 : vector<8x384xf32>
    %26 = math.exp %25 : vector<8x384xf32>
    %cst_16 = arith.constant 1.000000e+00 : f32
    %27 = vector.broadcast %cst_16 : f32 to vector<8x384xf32>
    %28 = arith.addf %27, %26 : vector<8x384xf32>
    %29 = arith.divf %27, %28 : vector<8x384xf32>
    %30 = vector.extract_strided_slice %23 {offsets = [0, 384], sizes = [8, 128], strides = [1, 1]} : vector<8x512xf32> to vector<8x128xf32>
    %31 = math.tanh %30 : vector<8x128xf32>
    %32 = vector.extract_strided_slice %29 {offsets = [0, 0], sizes = [8, 128], strides = [1, 1]} : vector<8x384xf32> to vector<8x128xf32>
    %33 = vector.extract_strided_slice %29 {offsets = [0, 128], sizes = [8, 128], strides = [1, 1]} : vector<8x384xf32> to vector<8x128xf32>
    %34 = vector.extract_strided_slice %29 {offsets = [0, 256], sizes = [8, 128], strides = [1, 1]} : vector<8x384xf32> to vector<8x128xf32>
    %35 = arith.mulf %33, %22 : vector<8x128xf32>
    %36 = arith.mulf %32, %31 : vector<8x128xf32>
    %37 = arith.addf %35, %36 : vector<8x128xf32>
    %38 = math.tanh %37 : vector<8x128xf32>
    %39 = arith.mulf %34, %38 : vector<8x128xf32>
    %c1_i32_17 = arith.constant 1 : i32
    %40 = arith.addi %c0_i32_15, %c1_i32_17 : i32
    %c7_i32 = arith.constant 7 : i32
    %41 = arith.minsi %40, %c7_i32 : i32
    %c8_i32 = arith.constant 8 : i32
    %42 = arith.muli %41, %c8_i32 : i32
    %43 = tpu.assume_multiple %42, 8 : i32
    %44 = arith.index_cast %43 : i32 to index
    %c0_18 = arith.constant 0 : index
    %45 = vector.load %arg9[%44, %c0_18] : memref<64x512xf32, #tpu.memory_space<vmem>>, vector<8x512xf32>
    %46 = arith.truncf %39 : vector<8x128xf32> to vector<8x128xbf16>
    %c0_19 = arith.constant 0 : index
    %c0_20 = arith.constant 0 : index
    %47 = vector.load %arg10[%c0_19, %c0_20] : memref<128x512xbf16, #tpu.memory_space<vmem>>, vector<128x512xbf16>
    %cst_21 = arith.constant dense<0.000000e+00> : vector<8x512xf32>
    %48 = tpu.matmul %46, %47, %cst_21 {dimension_numbers = #tpu.dot_dimension_numbers<[1], [0], [0], [1], [0, 0, 1, 1], [], []>} : vector<8x128xbf16>, vector<128x512xbf16>, vector<8x512xf32> -> vector<8x512xf32>
    %49 = arith.addf %45, %48 : vector<8x512xf32>
    %50 = tpu.concatenate %39, %22 in 1 : vector<8x128xf32>, vector<8x128xf32> -> vector<8x256xf32>
    %51 = arith.truncf %50 : vector<8x256xf32> to vector<8x256xbf16>
    %c0_22 = arith.constant 0 : index
    %c0_23 = arith.constant 0 : index
    %52 = vector.load %arg11[%c0_22, %c0_23] : memref<256x512xbf16, #tpu.memory_space<vmem>>, vector<256x512xbf16>
    %cst_24 = arith.constant dense<0.000000e+00> : vector<8x512xf32>
    %53 = tpu.matmul %51, %52, %cst_24 {dimension_numbers = #tpu.dot_dimension_numbers<[1], [0], [0], [1], [0, 0, 1, 1], [], []>} : vector<8x256xbf16>, vector<256x512xbf16>, vector<8x512xf32> -> vector<8x512xf32>
    %54 = arith.addf %53, %21 : vector<8x512xf32>
    %55 = vector.extract_strided_slice %54 {offsets = [0, 0], sizes = [8, 384], strides = [1, 1]} : vector<8x512xf32> to vector<8x384xf32>
    %56 = arith.negf %55 : vector<8x384xf32>
    %57 = math.exp %56 : vector<8x384xf32>
    %cst_25 = arith.constant 1.000000e+00 : f32
    %58 = vector.broadcast %cst_25 : f32 to vector<8x384xf32>
    %59 = arith.addf %58, %57 : vector<8x384xf32>
    %60 = arith.divf %58, %59 : vector<8x384xf32>
    %61 = vector.extract_strided_slice %54 {offsets = [0, 384], sizes = [8, 128], strides = [1, 1]} : vector<8x512xf32> to vector<8x128xf32>
    %62 = math.tanh %61 : vector<8x128xf32>
    %63 = vector.extract_strided_slice %60 {offsets = [0, 0], sizes = [8, 128], strides = [1, 1]} : vector<8x384xf32> to vector<8x128xf32>
    %64 = vector.extract_strided_slice %60 {offsets = [0, 128], sizes = [8, 128], strides = [1, 1]} : vector<8x384xf32> to vector<8x128xf32>
    %65 = vector.extract_strided_slice %60 {offsets = [0, 256], sizes = [8, 128], strides = [1, 1]} : vector<8x384xf32> to vector<8x128xf32>
    %66 = arith.mulf %64, %22 : vector<8x128xf32>
    %67 = arith.mulf %63, %62 : vector<8x128xf32>
    %68 = arith.addf %66, %67 : vector<8x128xf32>
    %69 = math.tanh %68 : vector<8x128xf32>
    %70 = arith.mulf %65, %69 : vector<8x128xf32>
    %c1_i32_26 = arith.constant 1 : i32
    %71 = vector.extract_strided_slice %49 {offsets = [0, 0], sizes = [8, 384], strides = [1, 1]} : vector<8x512xf32> to vector<8x384xf32>
    %72 = arith.negf %71 : vector<8x384xf32>
    %73 = math.exp %72 : vector<8x384xf32>
    %cst_27 = arith.constant 1.000000e+00 : f32
    %74 = vector.broadcast %cst_27 : f32 to vector<8x384xf32>
    %75 = arith.addf %74, %73 : vector<8x384xf32>
    %76 = arith.divf %74, %75 : vector<8x384xf32>
    %77 = vector.extract_strided_slice %49 {offsets = [0, 384], sizes = [8, 128], strides = [1, 1]} : vector<8x512xf32> to vector<8x128xf32>
    %78 = math.tanh %77 : vector<8x128xf32>
    %79 = vector.extract_strided_slice %76 {offsets = [0, 0], sizes = [8, 128], strides = [1, 1]} : vector<8x384xf32> to vector<8x128xf32>
    %80 = vector.extract_strided_slice %76 {offsets = [0, 128], sizes = [8, 128], strides = [1, 1]} : vector<8x384xf32> to vector<8x128xf32>
    %81 = vector.extract_strided_slice %76 {offsets = [0, 256], sizes = [8, 128], strides = [1, 1]} : vector<8x384xf32> to vector<8x128xf32>
    %82 = arith.mulf %80, %37 : vector<8x128xf32>
    %83 = arith.mulf %79, %78 : vector<8x128xf32>
    %84 = arith.addf %82, %83 : vector<8x128xf32>
    %85 = math.tanh %84 : vector<8x128xf32>
    %86 = arith.mulf %81, %85 : vector<8x128xf32>
    %c1_i32_28 = arith.constant 1 : i32
    %87 = arith.addi %c1_i32_26, %c1_i32_28 : i32
    %c7_i32_29 = arith.constant 7 : i32
    %88 = arith.minsi %87, %c7_i32_29 : i32
    %c8_i32_30 = arith.constant 8 : i32
    %89 = arith.muli %88, %c8_i32_30 : i32
    %90 = tpu.assume_multiple %89, 8 : i32
    %91 = arith.index_cast %90 : i32 to index
    %c0_31 = arith.constant 0 : index
    %92 = vector.load %arg9[%91, %c0_31] : memref<64x512xf32, #tpu.memory_space<vmem>>, vector<8x512xf32>
    %93 = arith.truncf %86 : vector<8x128xf32> to vector<8x128xbf16>
    %c0_32 = arith.constant 0 : index
    %c0_33 = arith.constant 0 : index
    %94 = vector.load %arg10[%c0_32, %c0_33] : memref<128x512xbf16, #tpu.memory_space<vmem>>, vector<128x512xbf16>
    %cst_34 = arith.constant dense<0.000000e+00> : vector<8x512xf32>
    %95 = tpu.matmul %93, %94, %cst_34 {dimension_numbers = #tpu.dot_dimension_numbers<[1], [0], [0], [1], [0, 0, 1, 1], [], []>} : vector<8x128xbf16>, vector<128x512xbf16>, vector<8x512xf32> -> vector<8x512xf32>
    %96 = arith.addf %92, %95 : vector<8x512xf32>
    %97 = tpu.concatenate %86, %70 in 1 : vector<8x128xf32>, vector<8x128xf32> -> vector<8x256xf32>
    %98 = arith.truncf %97 : vector<8x256xf32> to vector<8x256xbf16>
    %c0_35 = arith.constant 0 : index
    %c0_36 = arith.constant 0 : index
    %99 = vector.load %arg11[%c0_35, %c0_36] : memref<256x512xbf16, #tpu.memory_space<vmem>>, vector<256x512xbf16>
    %cst_37 = arith.constant dense<0.000000e+00> : vector<8x512xf32>
    %100 = tpu.matmul %98, %99, %cst_37 {dimension_numbers = #tpu.dot_dimension_numbers<[1], [0], [0], [1], [0, 0, 1, 1], [], []>} : vector<8x256xbf16>, vector<256x512xbf16>, vector<8x512xf32> -> vector<8x512xf32>
    %101 = arith.addf %100, %21 : vector<8x512xf32>
    %102 = vector.extract_strided_slice %101 {offsets = [0, 0], sizes = [8, 384], strides = [1, 1]} : vector<8x512xf32> to vector<8x384xf32>
    %103 = arith.negf %102 : vector<8x384xf32>
    %104 = math.exp %103 : vector<8x384xf32>
    %cst_38 = arith.constant 1.000000e+00 : f32
    %105 = vector.broadcast %cst_38 : f32 to vector<8x384xf32>
    %106 = arith.addf %105, %104 : vector<8x384xf32>
    %107 = arith.divf %105, %106 : vector<8x384xf32>
    %108 = vector.extract_strided_slice %101 {offsets = [0, 384], sizes = [8, 128], strides = [1, 1]} : vector<8x512xf32> to vector<8x128xf32>
    %109 = math.tanh %108 : vector<8x128xf32>
    %110 = vector.extract_strided_slice %107 {offsets = [0, 0], sizes = [8, 128], strides = [1, 1]} : vector<8x384xf32> to vector<8x128xf32>
    %111 = vector.extract_strided_slice %107 {offsets = [0, 128], sizes = [8, 128], strides = [1, 1]} : vector<8x384xf32> to vector<8x128xf32>
    %112 = vector.extract_strided_slice %107 {offsets = [0, 256], sizes = [8, 128], strides = [1, 1]} : vector<8x384xf32> to vector<8x128xf32>
    %113 = arith.mulf %111, %68 : vector<8x128xf32>
    %114 = arith.mulf %110, %109 : vector<8x128xf32>
    %115 = arith.addf %113, %114 : vector<8x128xf32>
    %116 = math.tanh %115 : vector<8x128xf32>
    %117 = arith.mulf %112, %116 : vector<8x128xf32>
    %c2_i32_39 = arith.constant 2 : i32
    %118 = vector.extract_strided_slice %96 {offsets = [0, 0], sizes = [8, 384], strides = [1, 1]} : vector<8x512xf32> to vector<8x384xf32>
    %119 = arith.negf %118 : vector<8x384xf32>
    %120 = math.exp %119 : vector<8x384xf32>
    %cst_40 = arith.constant 1.000000e+00 : f32
    %121 = vector.broadcast %cst_40 : f32 to vector<8x384xf32>
    %122 = arith.addf %121, %120 : vector<8x384xf32>
    %123 = arith.divf %121, %122 : vector<8x384xf32>
    %124 = vector.extract_strided_slice %96 {offsets = [0, 384], sizes = [8, 128], strides = [1, 1]} : vector<8x512xf32> to vector<8x128xf32>
    %125 = math.tanh %124 : vector<8x128xf32>
    %126 = vector.extract_strided_slice %123 {offsets = [0, 0], sizes = [8, 128], strides = [1, 1]} : vector<8x384xf32> to vector<8x128xf32>
    %127 = vector.extract_strided_slice %123 {offsets = [0, 128], sizes = [8, 128], strides = [1, 1]} : vector<8x384xf32> to vector<8x128xf32>
    %128 = vector.extract_strided_slice %123 {offsets = [0, 256], sizes = [8, 128], strides = [1, 1]} : vector<8x384xf32> to vector<8x128xf32>
    %129 = arith.mulf %127, %84 : vector<8x128xf32>
    %130 = arith.mulf %126, %125 : vector<8x128xf32>
    %131 = arith.addf %129, %130 : vector<8x128xf32>
    %132 = math.tanh %131 : vector<8x128xf32>
    %133 = arith.mulf %128, %132 : vector<8x128xf32>
    %c1_i32_41 = arith.constant 1 : i32
    %134 = arith.addi %c2_i32_39, %c1_i32_41 : i32
    %c7_i32_42 = arith.constant 7 : i32
    %135 = arith.minsi %134, %c7_i32_42 : i32
    %c8_i32_43 = arith.constant 8 : i32
    %136 = arith.muli %135, %c8_i32_43 : i32
    %137 = tpu.assume_multiple %136, 8 : i32
    %138 = arith.index_cast %137 : i32 to index
    %c0_44 = arith.constant 0 : index
    %139 = vector.load %arg9[%138, %c0_44] : memref<64x512xf32, #tpu.memory_space<vmem>>, vector<8x512xf32>
    %140 = arith.truncf %133 : vector<8x128xf32> to vector<8x128xbf16>
    %c0_45 = arith.constant 0 : index
    %c0_46 = arith.constant 0 : index
    %141 = vector.load %arg10[%c0_45, %c0_46] : memref<128x512xbf16, #tpu.memory_space<vmem>>, vector<128x512xbf16>
    %cst_47 = arith.constant dense<0.000000e+00> : vector<8x512xf32>
    %142 = tpu.matmul %140, %141, %cst_47 {dimension_numbers = #tpu.dot_dimension_numbers<[1], [0], [0], [1], [0, 0, 1, 1], [], []>} : vector<8x128xbf16>, vector<128x512xbf16>, vector<8x512xf32> -> vector<8x512xf32>
    %143 = arith.addf %139, %142 : vector<8x512xf32>
    %144 = tpu.concatenate %133, %117 in 1 : vector<8x128xf32>, vector<8x128xf32> -> vector<8x256xf32>
    %145 = arith.truncf %144 : vector<8x256xf32> to vector<8x256xbf16>
    %c0_48 = arith.constant 0 : index
    %c0_49 = arith.constant 0 : index
    %146 = vector.load %arg11[%c0_48, %c0_49] : memref<256x512xbf16, #tpu.memory_space<vmem>>, vector<256x512xbf16>
    %cst_50 = arith.constant dense<0.000000e+00> : vector<8x512xf32>
    %147 = tpu.matmul %145, %146, %cst_50 {dimension_numbers = #tpu.dot_dimension_numbers<[1], [0], [0], [1], [0, 0, 1, 1], [], []>} : vector<8x256xbf16>, vector<256x512xbf16>, vector<8x512xf32> -> vector<8x512xf32>
    %148 = arith.addf %147, %21 : vector<8x512xf32>
    %149 = vector.extract_strided_slice %148 {offsets = [0, 0], sizes = [8, 384], strides = [1, 1]} : vector<8x512xf32> to vector<8x384xf32>
    %150 = arith.negf %149 : vector<8x384xf32>
    %151 = math.exp %150 : vector<8x384xf32>
    %cst_51 = arith.constant 1.000000e+00 : f32
    %152 = vector.broadcast %cst_51 : f32 to vector<8x384xf32>
    %153 = arith.addf %152, %151 : vector<8x384xf32>
    %154 = arith.divf %152, %153 : vector<8x384xf32>
    %155 = vector.extract_strided_slice %148 {offsets = [0, 384], sizes = [8, 128], strides = [1, 1]} : vector<8x512xf32> to vector<8x128xf32>
    %156 = math.tanh %155 : vector<8x128xf32>
    %157 = vector.extract_strided_slice %154 {offsets = [0, 0], sizes = [8, 128], strides = [1, 1]} : vector<8x384xf32> to vector<8x128xf32>
    %158 = vector.extract_strided_slice %154 {offsets = [0, 128], sizes = [8, 128], strides = [1, 1]} : vector<8x384xf32> to vector<8x128xf32>
    %159 = vector.extract_strided_slice %154 {offsets = [0, 256], sizes = [8, 128], strides = [1, 1]} : vector<8x384xf32> to vector<8x128xf32>
    %160 = arith.mulf %158, %115 : vector<8x128xf32>
    %161 = arith.mulf %157, %156 : vector<8x128xf32>
    %162 = arith.addf %160, %161 : vector<8x128xf32>
    %163 = math.tanh %162 : vector<8x128xf32>
    %164 = arith.mulf %159, %163 : vector<8x128xf32>
    %c3_i32 = arith.constant 3 : i32
    %165 = vector.extract_strided_slice %143 {offsets = [0, 0], sizes = [8, 384], strides = [1, 1]} : vector<8x512xf32> to vector<8x384xf32>
    %166 = arith.negf %165 : vector<8x384xf32>
    %167 = math.exp %166 : vector<8x384xf32>
    %cst_52 = arith.constant 1.000000e+00 : f32
    %168 = vector.broadcast %cst_52 : f32 to vector<8x384xf32>
    %169 = arith.addf %168, %167 : vector<8x384xf32>
    %170 = arith.divf %168, %169 : vector<8x384xf32>
    %171 = vector.extract_strided_slice %143 {offsets = [0, 384], sizes = [8, 128], strides = [1, 1]} : vector<8x512xf32> to vector<8x128xf32>
    %172 = math.tanh %171 : vector<8x128xf32>
    %173 = vector.extract_strided_slice %170 {offsets = [0, 0], sizes = [8, 128], strides = [1, 1]} : vector<8x384xf32> to vector<8x128xf32>
    %174 = vector.extract_strided_slice %170 {offsets = [0, 128], sizes = [8, 128], strides = [1, 1]} : vector<8x384xf32> to vector<8x128xf32>
    %175 = vector.extract_strided_slice %170 {offsets = [0, 256], sizes = [8, 128], strides = [1, 1]} : vector<8x384xf32> to vector<8x128xf32>
    %176 = arith.mulf %174, %131 : vector<8x128xf32>
    %177 = arith.mulf %173, %172 : vector<8x128xf32>
    %178 = arith.addf %176, %177 : vector<8x128xf32>
    %179 = math.tanh %178 : vector<8x128xf32>
    %180 = arith.mulf %175, %179 : vector<8x128xf32>
    %c1_i32_53 = arith.constant 1 : i32
    %181 = arith.addi %c3_i32, %c1_i32_53 : i32
    %c7_i32_54 = arith.constant 7 : i32
    %182 = arith.minsi %181, %c7_i32_54 : i32
    %c8_i32_55 = arith.constant 8 : i32
    %183 = arith.muli %182, %c8_i32_55 : i32
    %184 = tpu.assume_multiple %183, 8 : i32
    %185 = arith.index_cast %184 : i32 to index
    %c0_56 = arith.constant 0 : index
    %186 = vector.load %arg9[%185, %c0_56] : memref<64x512xf32, #tpu.memory_space<vmem>>, vector<8x512xf32>
    %187 = arith.truncf %180 : vector<8x128xf32> to vector<8x128xbf16>
    %c0_57 = arith.constant 0 : index
    %c0_58 = arith.constant 0 : index
    %188 = vector.load %arg10[%c0_57, %c0_58] : memref<128x512xbf16, #tpu.memory_space<vmem>>, vector<128x512xbf16>
    %cst_59 = arith.constant dense<0.000000e+00> : vector<8x512xf32>
    %189 = tpu.matmul %187, %188, %cst_59 {dimension_numbers = #tpu.dot_dimension_numbers<[1], [0], [0], [1], [0, 0, 1, 1], [], []>} : vector<8x128xbf16>, vector<128x512xbf16>, vector<8x512xf32> -> vector<8x512xf32>
    %190 = arith.addf %186, %189 : vector<8x512xf32>
    %191 = tpu.concatenate %180, %164 in 1 : vector<8x128xf32>, vector<8x128xf32> -> vector<8x256xf32>
    %192 = arith.truncf %191 : vector<8x256xf32> to vector<8x256xbf16>
    %c0_60 = arith.constant 0 : index
    %c0_61 = arith.constant 0 : index
    %193 = vector.load %arg11[%c0_60, %c0_61] : memref<256x512xbf16, #tpu.memory_space<vmem>>, vector<256x512xbf16>
    %cst_62 = arith.constant dense<0.000000e+00> : vector<8x512xf32>
    %194 = tpu.matmul %192, %193, %cst_62 {dimension_numbers = #tpu.dot_dimension_numbers<[1], [0], [0], [1], [0, 0, 1, 1], [], []>} : vector<8x256xbf16>, vector<256x512xbf16>, vector<8x512xf32> -> vector<8x512xf32>
    %195 = arith.addf %194, %21 : vector<8x512xf32>
    %196 = vector.extract_strided_slice %195 {offsets = [0, 0], sizes = [8, 384], strides = [1, 1]} : vector<8x512xf32> to vector<8x384xf32>
    %197 = arith.negf %196 : vector<8x384xf32>
    %198 = math.exp %197 : vector<8x384xf32>
    %cst_63 = arith.constant 1.000000e+00 : f32
    %199 = vector.broadcast %cst_63 : f32 to vector<8x384xf32>
    %200 = arith.addf %199, %198 : vector<8x384xf32>
    %201 = arith.divf %199, %200 : vector<8x384xf32>
    %202 = vector.extract_strided_slice %195 {offsets = [0, 384], sizes = [8, 128], strides = [1, 1]} : vector<8x512xf32> to vector<8x128xf32>
    %203 = math.tanh %202 : vector<8x128xf32>
    %204 = vector.extract_strided_slice %201 {offsets = [0, 0], sizes = [8, 128], strides = [1, 1]} : vector<8x384xf32> to vector<8x128xf32>
    %205 = vector.extract_strided_slice %201 {offsets = [0, 128], sizes = [8, 128], strides = [1, 1]} : vector<8x384xf32> to vector<8x128xf32>
    %206 = vector.extract_strided_slice %201 {offsets = [0, 256], sizes = [8, 128], strides = [1, 1]} : vector<8x384xf32> to vector<8x128xf32>
    %207 = arith.mulf %205, %162 : vector<8x128xf32>
    %208 = arith.mulf %204, %203 : vector<8x128xf32>
    %209 = arith.addf %207, %208 : vector<8x128xf32>
    %210 = math.tanh %209 : vector<8x128xf32>
    %211 = arith.mulf %206, %210 : vector<8x128xf32>
    %c4_i32 = arith.constant 4 : i32
    %212 = vector.extract_strided_slice %190 {offsets = [0, 0], sizes = [8, 384], strides = [1, 1]} : vector<8x512xf32> to vector<8x384xf32>
    %213 = arith.negf %212 : vector<8x384xf32>
    %214 = math.exp %213 : vector<8x384xf32>
    %cst_64 = arith.constant 1.000000e+00 : f32
    %215 = vector.broadcast %cst_64 : f32 to vector<8x384xf32>
    %216 = arith.addf %215, %214 : vector<8x384xf32>
    %217 = arith.divf %215, %216 : vector<8x384xf32>
    %218 = vector.extract_strided_slice %190 {offsets = [0, 384], sizes = [8, 128], strides = [1, 1]} : vector<8x512xf32> to vector<8x128xf32>
    %219 = math.tanh %218 : vector<8x128xf32>
    %220 = vector.extract_strided_slice %217 {offsets = [0, 0], sizes = [8, 128], strides = [1, 1]} : vector<8x384xf32> to vector<8x128xf32>
    %221 = vector.extract_strided_slice %217 {offsets = [0, 128], sizes = [8, 128], strides = [1, 1]} : vector<8x384xf32> to vector<8x128xf32>
    %222 = vector.extract_strided_slice %217 {offsets = [0, 256], sizes = [8, 128], strides = [1, 1]} : vector<8x384xf32> to vector<8x128xf32>
    %223 = arith.mulf %221, %178 : vector<8x128xf32>
    %224 = arith.mulf %220, %219 : vector<8x128xf32>
    %225 = arith.addf %223, %224 : vector<8x128xf32>
    %226 = math.tanh %225 : vector<8x128xf32>
    %227 = arith.mulf %222, %226 : vector<8x128xf32>
    %c1_i32_65 = arith.constant 1 : i32
    %228 = arith.addi %c4_i32, %c1_i32_65 : i32
    %c7_i32_66 = arith.constant 7 : i32
    %229 = arith.minsi %228, %c7_i32_66 : i32
    %c8_i32_67 = arith.constant 8 : i32
    %230 = arith.muli %229, %c8_i32_67 : i32
    %231 = tpu.assume_multiple %230, 8 : i32
    %232 = arith.index_cast %231 : i32 to index
    %c0_68 = arith.constant 0 : index
    %233 = vector.load %arg9[%232, %c0_68] : memref<64x512xf32, #tpu.memory_space<vmem>>, vector<8x512xf32>
    %234 = arith.truncf %227 : vector<8x128xf32> to vector<8x128xbf16>
    %c0_69 = arith.constant 0 : index
    %c0_70 = arith.constant 0 : index
    %235 = vector.load %arg10[%c0_69, %c0_70] : memref<128x512xbf16, #tpu.memory_space<vmem>>, vector<128x512xbf16>
    %cst_71 = arith.constant dense<0.000000e+00> : vector<8x512xf32>
    %236 = tpu.matmul %234, %235, %cst_71 {dimension_numbers = #tpu.dot_dimension_numbers<[1], [0], [0], [1], [0, 0, 1, 1], [], []>} : vector<8x128xbf16>, vector<128x512xbf16>, vector<8x512xf32> -> vector<8x512xf32>
    %237 = arith.addf %233, %236 : vector<8x512xf32>
    %238 = tpu.concatenate %227, %211 in 1 : vector<8x128xf32>, vector<8x128xf32> -> vector<8x256xf32>
    %239 = arith.truncf %238 : vector<8x256xf32> to vector<8x256xbf16>
    %c0_72 = arith.constant 0 : index
    %c0_73 = arith.constant 0 : index
    %240 = vector.load %arg11[%c0_72, %c0_73] : memref<256x512xbf16, #tpu.memory_space<vmem>>, vector<256x512xbf16>
    %cst_74 = arith.constant dense<0.000000e+00> : vector<8x512xf32>
    %241 = tpu.matmul %239, %240, %cst_74 {dimension_numbers = #tpu.dot_dimension_numbers<[1], [0], [0], [1], [0, 0, 1, 1], [], []>} : vector<8x256xbf16>, vector<256x512xbf16>, vector<8x512xf32> -> vector<8x512xf32>
    %242 = arith.addf %241, %21 : vector<8x512xf32>
    %243 = vector.extract_strided_slice %242 {offsets = [0, 0], sizes = [8, 384], strides = [1, 1]} : vector<8x512xf32> to vector<8x384xf32>
    %244 = arith.negf %243 : vector<8x384xf32>
    %245 = math.exp %244 : vector<8x384xf32>
    %cst_75 = arith.constant 1.000000e+00 : f32
    %246 = vector.broadcast %cst_75 : f32 to vector<8x384xf32>
    %247 = arith.addf %246, %245 : vector<8x384xf32>
    %248 = arith.divf %246, %247 : vector<8x384xf32>
    %249 = vector.extract_strided_slice %242 {offsets = [0, 384], sizes = [8, 128], strides = [1, 1]} : vector<8x512xf32> to vector<8x128xf32>
    %250 = math.tanh %249 : vector<8x128xf32>
    %251 = vector.extract_strided_slice %248 {offsets = [0, 0], sizes = [8, 128], strides = [1, 1]} : vector<8x384xf32> to vector<8x128xf32>
    %252 = vector.extract_strided_slice %248 {offsets = [0, 128], sizes = [8, 128], strides = [1, 1]} : vector<8x384xf32> to vector<8x128xf32>
    %253 = vector.extract_strided_slice %248 {offsets = [0, 256], sizes = [8, 128], strides = [1, 1]} : vector<8x384xf32> to vector<8x128xf32>
    %254 = arith.mulf %252, %209 : vector<8x128xf32>
    %255 = arith.mulf %251, %250 : vector<8x128xf32>
    %256 = arith.addf %254, %255 : vector<8x128xf32>
    %257 = math.tanh %256 : vector<8x128xf32>
    %258 = arith.mulf %253, %257 : vector<8x128xf32>
    %c5_i32 = arith.constant 5 : i32
    %259 = vector.extract_strided_slice %237 {offsets = [0, 0], sizes = [8, 384], strides = [1, 1]} : vector<8x512xf32> to vector<8x384xf32>
    %260 = arith.negf %259 : vector<8x384xf32>
    %261 = math.exp %260 : vector<8x384xf32>
    %cst_76 = arith.constant 1.000000e+00 : f32
    %262 = vector.broadcast %cst_76 : f32 to vector<8x384xf32>
    %263 = arith.addf %262, %261 : vector<8x384xf32>
    %264 = arith.divf %262, %263 : vector<8x384xf32>
    %265 = vector.extract_strided_slice %237 {offsets = [0, 384], sizes = [8, 128], strides = [1, 1]} : vector<8x512xf32> to vector<8x128xf32>
    %266 = math.tanh %265 : vector<8x128xf32>
    %267 = vector.extract_strided_slice %264 {offsets = [0, 0], sizes = [8, 128], strides = [1, 1]} : vector<8x384xf32> to vector<8x128xf32>
    %268 = vector.extract_strided_slice %264 {offsets = [0, 128], sizes = [8, 128], strides = [1, 1]} : vector<8x384xf32> to vector<8x128xf32>
    %269 = vector.extract_strided_slice %264 {offsets = [0, 256], sizes = [8, 128], strides = [1, 1]} : vector<8x384xf32> to vector<8x128xf32>
    %270 = arith.mulf %268, %225 : vector<8x128xf32>
    %271 = arith.mulf %267, %266 : vector<8x128xf32>
    %272 = arith.addf %270, %271 : vector<8x128xf32>
    %273 = math.tanh %272 : vector<8x128xf32>
    %274 = arith.mulf %269, %273 : vector<8x128xf32>
    %c1_i32_77 = arith.constant 1 : i32
    %275 = arith.addi %c5_i32, %c1_i32_77 : i32
    %c7_i32_78 = arith.constant 7 : i32
    %276 = arith.minsi %275, %c7_i32_78 : i32
    %c8_i32_79 = arith.constant 8 : i32
    %277 = arith.muli %276, %c8_i32_79 : i32
    %278 = tpu.assume_multiple %277, 8 : i32
    %279 = arith.index_cast %278 : i32 to index
    %c0_80 = arith.constant 0 : index
    %280 = vector.load %arg9[%279, %c0_80] : memref<64x512xf32, #tpu.memory_space<vmem>>, vector<8x512xf32>
    %281 = arith.truncf %274 : vector<8x128xf32> to vector<8x128xbf16>
    %c0_81 = arith.constant 0 : index
    %c0_82 = arith.constant 0 : index
    %282 = vector.load %arg10[%c0_81, %c0_82] : memref<128x512xbf16, #tpu.memory_space<vmem>>, vector<128x512xbf16>
    %cst_83 = arith.constant dense<0.000000e+00> : vector<8x512xf32>
    %283 = tpu.matmul %281, %282, %cst_83 {dimension_numbers = #tpu.dot_dimension_numbers<[1], [0], [0], [1], [0, 0, 1, 1], [], []>} : vector<8x128xbf16>, vector<128x512xbf16>, vector<8x512xf32> -> vector<8x512xf32>
    %284 = arith.addf %280, %283 : vector<8x512xf32>
    %285 = tpu.concatenate %274, %258 in 1 : vector<8x128xf32>, vector<8x128xf32> -> vector<8x256xf32>
    %286 = arith.truncf %285 : vector<8x256xf32> to vector<8x256xbf16>
    %c0_84 = arith.constant 0 : index
    %c0_85 = arith.constant 0 : index
    %287 = vector.load %arg11[%c0_84, %c0_85] : memref<256x512xbf16, #tpu.memory_space<vmem>>, vector<256x512xbf16>
    %cst_86 = arith.constant dense<0.000000e+00> : vector<8x512xf32>
    %288 = tpu.matmul %286, %287, %cst_86 {dimension_numbers = #tpu.dot_dimension_numbers<[1], [0], [0], [1], [0, 0, 1, 1], [], []>} : vector<8x256xbf16>, vector<256x512xbf16>, vector<8x512xf32> -> vector<8x512xf32>
    %289 = arith.addf %288, %21 : vector<8x512xf32>
    %290 = vector.extract_strided_slice %289 {offsets = [0, 0], sizes = [8, 384], strides = [1, 1]} : vector<8x512xf32> to vector<8x384xf32>
    %291 = arith.negf %290 : vector<8x384xf32>
    %292 = math.exp %291 : vector<8x384xf32>
    %cst_87 = arith.constant 1.000000e+00 : f32
    %293 = vector.broadcast %cst_87 : f32 to vector<8x384xf32>
    %294 = arith.addf %293, %292 : vector<8x384xf32>
    %295 = arith.divf %293, %294 : vector<8x384xf32>
    %296 = vector.extract_strided_slice %289 {offsets = [0, 384], sizes = [8, 128], strides = [1, 1]} : vector<8x512xf32> to vector<8x128xf32>
    %297 = math.tanh %296 : vector<8x128xf32>
    %298 = vector.extract_strided_slice %295 {offsets = [0, 0], sizes = [8, 128], strides = [1, 1]} : vector<8x384xf32> to vector<8x128xf32>
    %299 = vector.extract_strided_slice %295 {offsets = [0, 128], sizes = [8, 128], strides = [1, 1]} : vector<8x384xf32> to vector<8x128xf32>
    %300 = vector.extract_strided_slice %295 {offsets = [0, 256], sizes = [8, 128], strides = [1, 1]} : vector<8x384xf32> to vector<8x128xf32>
    %301 = arith.mulf %299, %256 : vector<8x128xf32>
    %302 = arith.mulf %298, %297 : vector<8x128xf32>
    %303 = arith.addf %301, %302 : vector<8x128xf32>
    %304 = math.tanh %303 : vector<8x128xf32>
    %305 = arith.mulf %300, %304 : vector<8x128xf32>
    %c6_i32 = arith.constant 6 : i32
    %306 = vector.extract_strided_slice %284 {offsets = [0, 0], sizes = [8, 384], strides = [1, 1]} : vector<8x512xf32> to vector<8x384xf32>
    %307 = arith.negf %306 : vector<8x384xf32>
    %308 = math.exp %307 : vector<8x384xf32>
    %cst_88 = arith.constant 1.000000e+00 : f32
    %309 = vector.broadcast %cst_88 : f32 to vector<8x384xf32>
    %310 = arith.addf %309, %308 : vector<8x384xf32>
    %311 = arith.divf %309, %310 : vector<8x384xf32>
    %312 = vector.extract_strided_slice %284 {offsets = [0, 384], sizes = [8, 128], strides = [1, 1]} : vector<8x512xf32> to vector<8x128xf32>
    %313 = math.tanh %312 : vector<8x128xf32>
    %314 = vector.extract_strided_slice %311 {offsets = [0, 0], sizes = [8, 128], strides = [1, 1]} : vector<8x384xf32> to vector<8x128xf32>
    %315 = vector.extract_strided_slice %311 {offsets = [0, 128], sizes = [8, 128], strides = [1, 1]} : vector<8x384xf32> to vector<8x128xf32>
    %316 = vector.extract_strided_slice %311 {offsets = [0, 256], sizes = [8, 128], strides = [1, 1]} : vector<8x384xf32> to vector<8x128xf32>
    %317 = arith.mulf %315, %272 : vector<8x128xf32>
    %318 = arith.mulf %314, %313 : vector<8x128xf32>
    %319 = arith.addf %317, %318 : vector<8x128xf32>
    %320 = math.tanh %319 : vector<8x128xf32>
    %321 = arith.mulf %316, %320 : vector<8x128xf32>
    %c1_i32_89 = arith.constant 1 : i32
    %322 = arith.addi %c6_i32, %c1_i32_89 : i32
    %c7_i32_90 = arith.constant 7 : i32
    %323 = arith.minsi %322, %c7_i32_90 : i32
    %c8_i32_91 = arith.constant 8 : i32
    %324 = arith.muli %323, %c8_i32_91 : i32
    %325 = tpu.assume_multiple %324, 8 : i32
    %326 = arith.index_cast %325 : i32 to index
    %c0_92 = arith.constant 0 : index
    %327 = vector.load %arg9[%326, %c0_92] : memref<64x512xf32, #tpu.memory_space<vmem>>, vector<8x512xf32>
    %328 = arith.truncf %321 : vector<8x128xf32> to vector<8x128xbf16>
    %c0_93 = arith.constant 0 : index
    %c0_94 = arith.constant 0 : index
    %329 = vector.load %arg10[%c0_93, %c0_94] : memref<128x512xbf16, #tpu.memory_space<vmem>>, vector<128x512xbf16>
    %cst_95 = arith.constant dense<0.000000e+00> : vector<8x512xf32>
    %330 = tpu.matmul %328, %329, %cst_95 {dimension_numbers = #tpu.dot_dimension_numbers<[1], [0], [0], [1], [0, 0, 1, 1], [], []>} : vector<8x128xbf16>, vector<128x512xbf16>, vector<8x512xf32> -> vector<8x512xf32>
    %331 = arith.addf %327, %330 : vector<8x512xf32>
    %332 = tpu.concatenate %321, %305 in 1 : vector<8x128xf32>, vector<8x128xf32> -> vector<8x256xf32>
    %333 = arith.truncf %332 : vector<8x256xf32> to vector<8x256xbf16>
    %c0_96 = arith.constant 0 : index
    %c0_97 = arith.constant 0 : index
    %334 = vector.load %arg11[%c0_96, %c0_97] : memref<256x512xbf16, #tpu.memory_space<vmem>>, vector<256x512xbf16>
    %cst_98 = arith.constant dense<0.000000e+00> : vector<8x512xf32>
    %335 = tpu.matmul %333, %334, %cst_98 {dimension_numbers = #tpu.dot_dimension_numbers<[1], [0], [0], [1], [0, 0, 1, 1], [], []>} : vector<8x256xbf16>, vector<256x512xbf16>, vector<8x512xf32> -> vector<8x512xf32>
    %336 = arith.addf %335, %21 : vector<8x512xf32>
    %337 = vector.extract_strided_slice %336 {offsets = [0, 0], sizes = [8, 384], strides = [1, 1]} : vector<8x512xf32> to vector<8x384xf32>
    %338 = arith.negf %337 : vector<8x384xf32>
    %339 = math.exp %338 : vector<8x384xf32>
    %cst_99 = arith.constant 1.000000e+00 : f32
    %340 = vector.broadcast %cst_99 : f32 to vector<8x384xf32>
    %341 = arith.addf %340, %339 : vector<8x384xf32>
    %342 = arith.divf %340, %341 : vector<8x384xf32>
    %343 = vector.extract_strided_slice %336 {offsets = [0, 384], sizes = [8, 128], strides = [1, 1]} : vector<8x512xf32> to vector<8x128xf32>
    %344 = math.tanh %343 : vector<8x128xf32>
    %345 = vector.extract_strided_slice %342 {offsets = [0, 0], sizes = [8, 128], strides = [1, 1]} : vector<8x384xf32> to vector<8x128xf32>
    %346 = vector.extract_strided_slice %342 {offsets = [0, 128], sizes = [8, 128], strides = [1, 1]} : vector<8x384xf32> to vector<8x128xf32>
    %347 = vector.extract_strided_slice %342 {offsets = [0, 256], sizes = [8, 128], strides = [1, 1]} : vector<8x384xf32> to vector<8x128xf32>
    %348 = arith.mulf %346, %303 : vector<8x128xf32>
    %349 = arith.mulf %345, %344 : vector<8x128xf32>
    %350 = arith.addf %348, %349 : vector<8x128xf32>
    %351 = math.tanh %350 : vector<8x128xf32>
    %352 = arith.mulf %347, %351 : vector<8x128xf32>
    %c7_i32_100 = arith.constant 7 : i32
    %353 = vector.extract_strided_slice %331 {offsets = [0, 0], sizes = [8, 384], strides = [1, 1]} : vector<8x512xf32> to vector<8x384xf32>
    %354 = arith.negf %353 : vector<8x384xf32>
    %355 = math.exp %354 : vector<8x384xf32>
    %cst_101 = arith.constant 1.000000e+00 : f32
    %356 = vector.broadcast %cst_101 : f32 to vector<8x384xf32>
    %357 = arith.addf %356, %355 : vector<8x384xf32>
    %358 = arith.divf %356, %357 : vector<8x384xf32>
    %359 = vector.extract_strided_slice %331 {offsets = [0, 384], sizes = [8, 128], strides = [1, 1]} : vector<8x512xf32> to vector<8x128xf32>
    %360 = math.tanh %359 : vector<8x128xf32>
    %361 = vector.extract_strided_slice %358 {offsets = [0, 0], sizes = [8, 128], strides = [1, 1]} : vector<8x384xf32> to vector<8x128xf32>
    %362 = vector.extract_strided_slice %358 {offsets = [0, 128], sizes = [8, 128], strides = [1, 1]} : vector<8x384xf32> to vector<8x128xf32>
    %363 = vector.extract_strided_slice %358 {offsets = [0, 256], sizes = [8, 128], strides = [1, 1]} : vector<8x384xf32> to vector<8x128xf32>
    %364 = arith.mulf %362, %319 : vector<8x128xf32>
    %365 = arith.mulf %361, %360 : vector<8x128xf32>
    %366 = arith.addf %364, %365 : vector<8x128xf32>
    %367 = math.tanh %366 : vector<8x128xf32>
    %368 = arith.mulf %363, %367 : vector<8x128xf32>
    %c1_i32_102 = arith.constant 1 : i32
    %369 = arith.addi %c7_i32_100, %c1_i32_102 : i32
    %c7_i32_103 = arith.constant 7 : i32
    %370 = arith.minsi %369, %c7_i32_103 : i32
    %c8_i32_104 = arith.constant 8 : i32
    %371 = arith.muli %370, %c8_i32_104 : i32
    %372 = tpu.assume_multiple %371, 8 : i32
    %373 = arith.index_cast %372 : i32 to index
    %c0_105 = arith.constant 0 : index
    %374 = vector.load %arg9[%373, %c0_105] : memref<64x512xf32, #tpu.memory_space<vmem>>, vector<8x512xf32>
    %375 = arith.truncf %368 : vector<8x128xf32> to vector<8x128xbf16>
    %c0_106 = arith.constant 0 : index
    %c0_107 = arith.constant 0 : index
    %376 = vector.load %arg10[%c0_106, %c0_107] : memref<128x512xbf16, #tpu.memory_space<vmem>>, vector<128x512xbf16>
    %cst_108 = arith.constant dense<0.000000e+00> : vector<8x512xf32>
    %377 = tpu.matmul %375, %376, %cst_108 {dimension_numbers = #tpu.dot_dimension_numbers<[1], [0], [0], [1], [0, 0, 1, 1], [], []>} : vector<8x128xbf16>, vector<128x512xbf16>, vector<8x512xf32> -> vector<8x512xf32>
    %378 = arith.addf %374, %377 : vector<8x512xf32>
    %379 = tpu.concatenate %368, %352 in 1 : vector<8x128xf32>, vector<8x128xf32> -> vector<8x256xf32>
    %380 = arith.truncf %379 : vector<8x256xf32> to vector<8x256xbf16>
    %c0_109 = arith.constant 0 : index
    %c0_110 = arith.constant 0 : index
    %381 = vector.load %arg11[%c0_109, %c0_110] : memref<256x512xbf16, #tpu.memory_space<vmem>>, vector<256x512xbf16>
    %cst_111 = arith.constant dense<0.000000e+00> : vector<8x512xf32>
    %382 = tpu.matmul %380, %381, %cst_111 {dimension_numbers = #tpu.dot_dimension_numbers<[1], [0], [0], [1], [0, 0, 1, 1], [], []>} : vector<8x256xbf16>, vector<256x512xbf16>, vector<8x512xf32> -> vector<8x512xf32>
    %383 = arith.addf %382, %21 : vector<8x512xf32>
    %384 = vector.extract_strided_slice %383 {offsets = [0, 0], sizes = [8, 384], strides = [1, 1]} : vector<8x512xf32> to vector<8x384xf32>
    %385 = arith.negf %384 : vector<8x384xf32>
    %386 = math.exp %385 : vector<8x384xf32>
    %cst_112 = arith.constant 1.000000e+00 : f32
    %387 = vector.broadcast %cst_112 : f32 to vector<8x384xf32>
    %388 = arith.addf %387, %386 : vector<8x384xf32>
    %389 = arith.divf %387, %388 : vector<8x384xf32>
    %390 = vector.extract_strided_slice %383 {offsets = [0, 384], sizes = [8, 128], strides = [1, 1]} : vector<8x512xf32> to vector<8x128xf32>
    %391 = math.tanh %390 : vector<8x128xf32>
    %392 = vector.extract_strided_slice %389 {offsets = [0, 0], sizes = [8, 128], strides = [1, 1]} : vector<8x384xf32> to vector<8x128xf32>
    %393 = vector.extract_strided_slice %389 {offsets = [0, 128], sizes = [8, 128], strides = [1, 1]} : vector<8x384xf32> to vector<8x128xf32>
    %394 = vector.extract_strided_slice %389 {offsets = [0, 256], sizes = [8, 128], strides = [1, 1]} : vector<8x384xf32> to vector<8x128xf32>
    %395 = arith.mulf %393, %350 : vector<8x128xf32>
    %396 = arith.mulf %392, %391 : vector<8x128xf32>
    %397 = arith.addf %395, %396 : vector<8x128xf32>
    %398 = math.tanh %397 : vector<8x128xf32>
    %399 = arith.mulf %394, %398 : vector<8x128xf32>
    %c8_i32_113 = arith.constant 8 : i32
    %400 = arith.truncf %399 : vector<8x128xf32> to vector<8x128xbf16>
    %c0_114 = arith.constant 0 : index
    %c0_115 = arith.constant 0 : index
    %401 = vector.load %arg12[%c0_114, %c0_115] : memref<128x128xbf16, #tpu.memory_space<vmem>>, vector<128x128xbf16>
    %cst_116 = arith.constant dense<0.000000e+00> : vector<8x128xf32>
    %402 = tpu.matmul %400, %401, %cst_116 {dimension_numbers = #tpu.dot_dimension_numbers<[1], [0], [0], [1], [0, 0, 1, 1], [], []>} : vector<8x128xbf16>, vector<128x128xbf16>, vector<8x128xf32> -> vector<8x128xf32>
    %c0_117 = arith.constant 0 : index
    %c0_118 = arith.constant 0 : index
    %403 = vector.load %arg7[%c0_117, %c0_118] : memref<1x128xf32, #tpu.memory_space<vmem>>, vector<1x128xf32>
    %404 = vector.broadcast %403 : vector<1x128xf32> to vector<8x128xf32>
    %405 = arith.addf %402, %404 : vector<8x128xf32>
    %c0_119 = arith.constant 0 : index
    %c0_120 = arith.constant 0 : index
    %406 = vector.load %arg8[%c0_119, %c0_120] : memref<8x128xf32, #tpu.memory_space<vmem>>, vector<8x128xf32>
    tpu.vector_store %arg8[%c0_119, %c0_120], %405 {strides = array<i32>} : memref<8x128xf32, #tpu.memory_space<vmem>>, vector<8x128xf32>,
    return
  }
}

</mosaic_0001>

<llo_original>
// kernel: rnn_with_embed_forward.1
$region0: #{rnn_with_embed_forward.1}
  #allocation0 [shape = 'u32[]', space=smem, size = 0x4, offset = 0x4, fixed_abs, tag = 'smem constant byte address 0x4 - core index']
  #allocation1 [shape = 'u32[144,128]{1,0:T(1,128)}', space=vmem, size = 0x12000, scoped, tag = 'internal scratch']
  #allocation2 [shape = 'f32[64,512]{1,0:T(8,128)}', space=vmem, size = 0x20000, scoped, tag = 'scratch operand']
  #allocation3 [shape = 'bf16[128,512]{1,0:T(16,128)(2,1)}', space=vmem, size = 0x20000, scoped, tag = 'scratch operand']
  #allocation4 [shape = 'bf16[256,512]{1,0:T(16,128)(2,1)}', space=vmem, size = 0x40000, scoped, tag = 'scratch operand']
  #allocation5 [shape = 'bf16[128,128]{1,0:T(16,128)(2,1)}', space=vmem, size = 0x8000, scoped, tag = 'scratch operand']
  #allocation6 [shape = 's32[3]{0}', space=sflag, size = 0xc, scoped, tag = 'scratch operand']
  #allocation9 [shape = 's32[]', space=sflag, size = 0x4, offset = 0, fixed_abs, tag = 'sflag constant byte address 0x0 - dummy sync flag']
  #allocation10 [shape = 's32[]', space=sflag, size = 0x4, offset = 0, fixed_abs, tag = 'sflag constant byte address 0x0 - dummy sync flag']
  #allocation12 [shape = 's32[]', space=sflag, size = 0x4, offset = 0, fixed_abs, tag = 'sflag constant byte address 0x0 - dummy sync flag']
  #allocation13 [shape = 's32[]', space=sflag, size = 0x4, offset = 0, fixed_abs, tag = 'sflag constant byte address 0x0 - dummy sync flag']
  #allocation14 [shape = 'u32[]', space=smem, size = 0x4, offset = 0x44, fixed_abs, tag = 'smem constant byte address 0x44 - assertion arg 0']
  #allocation15 [shape = 'u32[]', space=smem, size = 0x4, offset = 0x48, fixed_abs, tag = 'smem constant byte address 0x48 - assertion arg 1']
  %s0 = inlined_call_operand.vmem [shape: bf16[64,32], index: 0, kind: input, shape index: {}]
  %s1 = inlined_call_operand.hbm [shape: bf16[32,512], index: 1, kind: input, shape index: {}]
  %s2 = inlined_call_operand.vmem [shape: f32[1,512], index: 2, kind: input, shape index: {}]
  %s3 = inlined_call_operand.vmem [shape: bf16[128,512], index: 3, kind: input, shape index: {}]
  %s4 = inlined_call_operand.hbm [shape: bf16[256,512], index: 4, kind: input, shape index: {}]
  %s5 = inlined_call_operand.vmem [shape: f32[1,512], index: 5, kind: input, shape index: {}]
  %s6 = inlined_call_operand.hbm [shape: bf16[128,128], index: 6, kind: input, shape index: {}]
  %s7 = inlined_call_operand.vmem [shape: f32[1,128], index: 7, kind: input, shape index: {}]
  %s8 = inlined_call_operand.vmem [shape: f32[8,128], index: 8, kind: output, shape index: {}]
  %s9 = sld [smem:[#allocation0]]
  $region75: #{rnn_with_embed_forward.1} parent=0
    _
  %s11 = ssub.s32 1, %s9
  %s12 = scalar_select 0, %s11, %s9
  $region1: #{rnn_with_embed_forward.1} parent=0
    #allocation7 [shape = 'u8[32768]{0}', space=vmem, size = 0x8000, scoped, tag = 'input window, operand 1, single buffered']
    #allocation8 [shape = 's32[1]{0}', space=sflag, size = 0x4, scoped, tag = 'scoped memory for rnn_with_embed_forward.1']
    #allocation11 [shape = 'u32[9]{0}', space=smem, size = 0x24, scoped, tag = 'DMA stride descriptor']
    %13 = vsyncpa [#allocation8], 0
    // Predicated region
    $region2: #{rnn_with_embed_forward.1} parent=1 // pred_check
      _
    $region3: #{rnn_with_embed_forward.1} parent=1 // pred_check_branch
      %15 = sbr.rel (0) target = $region5
    $region4: #{rnn_with_embed_forward.1} parent=1 // pred_region
      _
    $region5: #{rnn_with_embed_forward.1} parent=1 // pred_fallthru
      _
    // Predicated region
    $region6: #{rnn_with_embed_forward.1} parent=1 // pred_check
      _
    $region7: #{rnn_with_embed_forward.1} parent=1 // pred_check_branch
      %17 = sbr.rel (0) target = $region9
    $region8: #{rnn_with_embed_forward.1} parent=1 // pred_region
      %s19 = ssub.s32 1024, 1024
      %20 = vsyncadd [#allocation8], %s19
      %s21 = sshll.u32 [#allocation7], 4
      %s22 = int_to_ptr.vmem [resolvable:$true] %s21
      %27 = dma.hbm_to_vmem [thread:$0]  %s1, 1024, %s22, [#allocation8], 256, 256, 16
    $region9: #{rnn_with_embed_forward.1} parent=1 // pred_fallthru
      _
    // Predicated region
    $region10: #{rnn_with_embed_forward.1} parent=1 // pred_check
      _
    $region11: #{rnn_with_embed_forward.1} parent=1 // pred_check_branch
      %29 = sbr.rel (0) target = $region13
    $region12: #{rnn_with_embed_forward.1} parent=1 // pred_region
      _
    $region13: #{rnn_with_embed_forward.1} parent=1 // pred_fallthru
      _
    // Predicated region
    $region14: #{rnn_with_embed_forward.1} parent=1 // pred_check
      _
    $region15: #{rnn_with_embed_forward.1} parent=1 // pred_check_branch
      %31 = sbr.rel (0) target = $region17
    $region16: #{rnn_with_embed_forward.1} parent=1 // pred_region
      _
    $region17: #{rnn_with_embed_forward.1} parent=1 // pred_fallthru
      _
    // Predicated region
    $region18: #{rnn_with_embed_forward.1} parent=1 // pred_check
      _
    $region19: #{rnn_with_embed_forward.1} parent=1 // pred_check_branch
      %33 = sbr.rel (0) target = $region21
    $region20: #{rnn_with_embed_forward.1} parent=1 // pred_region
      _
    $region21: #{rnn_with_embed_forward.1} parent=1 // pred_fallthru
      _
    // Predicated region
    $region22: #{rnn_with_embed_forward.1} parent=1 // pred_check
      _
    $region23: #{rnn_with_embed_forward.1} parent=1 // pred_check_branch
      %35 = sbr.rel (0) target = $region25
    $region24: #{rnn_with_embed_forward.1} parent=1 // pred_region
      %36 = dma.done [#allocation8], 1024
    $region25: #{rnn_with_embed_forward.1} parent=1 // pred_fallthru
      _
    %p39 = scmp.lt.u32.totalorder 4, 8
    %p40 = pneg %p39
    // Predicated region
    $region26: #{rnn_with_embed_forward.1} parent=1 // pred_check
      _
    $region27: #{rnn_with_embed_forward.1} parent=1 // pred_check_branch
      %42 = sbr.rel (%p39) target = $region29
    $region28: #{rnn_with_embed_forward.1} parent=1 // pred_region
      %s183 = sand.u32 4, 7
      %p184 = scmp.eq.s32.totalorder %s183, 0
      %p185 = pneg %p184
      // Predicated region
      $region41: #{rnn_with_embed_forward.1} parent=28 // pred_check
        _
      $region42: #{rnn_with_embed_forward.1} parent=28 // pred_check_branch
        %187 = sbr.rel (%p184) target = $region44
      $region43: #{rnn_with_embed_forward.1} parent=28 // pred_region
        %s188 = sand.u32 4, 7
        %s189 = ssub.s32 4, %s188
        %s190 = scalar_lea.vmem %s3, %s189
        %s191 = ssub.s32 4, %s188
        %s192 = scalar_lea.vmem [#allocation3], %s191
        loop: start=0, step=1, limit=1
        $region45: #{rnn_with_embed_forward.1} parent=43 // loop_pre_header
          _
        $region46: #{rnn_with_embed_forward.1} parent=43 // loop_header
          %s194 = sphi 0, %s198
          %p195 = scmp.ge.s32.totalorder %s194, 1
          %s199 = sphi %s3, %s3
          %s200 = sphi [#allocation3], [#allocation3]
        $region47: #{rnn_with_embed_forward.1} parent=43 // loop_header_branch
          %197 = sbr.rel (%p195) target = $region51
        $region48: #{rnn_with_embed_forward.1} parent=43 // loop_body
          _
        $region49: #{rnn_with_embed_forward.1} parent=43 // loop_footer
          %s198 = sadd.s32 1, %s194
        $region50: #{rnn_with_embed_forward.1} parent=43 // loop_footer_branch
          %193 = sbr.rel target = $region46
        $region51: #{rnn_with_embed_forward.1} parent=43 // loop_exit
          _
        %s201 = sshllo.u32 0, %s188
        loop: start=0, step=1, limit=1
        $region52: #{rnn_with_embed_forward.1} parent=43 // loop_pre_header
          _
        $region53: #{rnn_with_embed_forward.1} parent=43 // loop_header
          %s203 = sphi 0, %s207
          %p204 = scmp.ge.s32.totalorder %s203, 1
          %s208 = sphi %s190, %s190
          %s209 = sphi %s192, %s192
        $region54: #{rnn_with_embed_forward.1} parent=43 // loop_header_branch
          %206 = sbr.rel (%p204) target = $region58
        $region55: #{rnn_with_embed_forward.1} parent=43 // loop_body
          %v210 = vld [vmem:[%s208] sm:%s201]
          %211 = vst [vmem:[%s209] sm:%s201] %v210
          %v212 = vld [vmem:[%s208 + $0x10] sm:%s201]
          %213 = vst [vmem:[%s209 + $0x4] sm:%s201] %v212
          %v214 = vld [vmem:[%s208 + $0x4] sm:%s201]
          %215 = vst [vmem:[%s209 + $0x8] sm:%s201] %v214
          %v216 = vld [vmem:[%s208 + $0x14] sm:%s201]
          %217 = vst [vmem:[%s209 + $0xc] sm:%s201] %v216
          %v218 = vld [vmem:[%s208 + $0x8] sm:%s201]
          %219 = vst [vmem:[%s209 + $0x10] sm:%s201] %v218
          %v220 = vld [vmem:[%s208 + $0x18] sm:%s201]
          %221 = vst [vmem:[%s209 + $0x14] sm:%s201] %v220
          %v222 = vld [vmem:[%s208 + $0xc] sm:%s201]
          %223 = vst [vmem:[%s209 + $0x18] sm:%s201] %v222
          %v224 = vld [vmem:[%s208 + $0x1c] sm:%s201]
          %225 = vst [vmem:[%s209 + $0x1c] sm:%s201] %v224
          %v226 = vld [vmem:[%s208 + $0x20] sm:%s201]
          %227 = vst [vmem:[%s209 + $0x20] sm:%s201] %v226
          %v228 = vld [vmem:[%s208 + $0x30] sm:%s201]
          %229 = vst [vmem:[%s209 + $0x24] sm:%s201] %v228
          %v230 = vld [vmem:[%s208 + $0x24] sm:%s201]
          %231 = vst [vmem:[%s209 + $0x28] sm:%s201] %v230
          %v232 = vld [vmem:[%s208 + $0x34] sm:%s201]
          %233 = vst [vmem:[%s209 + $0x2c] sm:%s201] %v232
          %v234 = vld [vmem:[%s208 + $0x28] sm:%s201]
          %235 = vst [vmem:[%s209 + $0x30] sm:%s201] %v234
          %v236 = vld [vmem:[%s208 + $0x38] sm:%s201]
          %237 = vst [vmem:[%s209 + $0x34] sm:%s201] %v236
          %v238 = vld [vmem:[%s208 + $0x2c] sm:%s201]
          %239 = vst [vmem:[%s209 + $0x38] sm:%s201] %v238
          %v240 = vld [vmem:[%s208 + $0x3c] sm:%s201]
          %241 = vst [vmem:[%s209 + $0x3c] sm:%s201] %v240
          %v242 = vld [vmem:[%s208 + $0x40] sm:%s201]
          %243 = vst [vmem:[%s209 + $0x40] sm:%s201] %v242
          %v244 = vld [vmem:[%s208 + $0x50] sm:%s201]
          %245 = vst [vmem:[%s209 + $0x44] sm:%s201] %v244
          %v246 = vld [vmem:[%s208 + $0x44] sm:%s201]
          %247 = vst [vmem:[%s209 + $0x48] sm:%s201] %v246
          %v248 = vld [vmem:[%s208 + $0x54] sm:%s201]
          %249 = vst [vmem:[%s209 + $0x4c] sm:%s201] %v248
          %v250 = vld [vmem:[%s208 + $0x48] sm:%s201]
          %251 = vst [vmem:[%s209 + $0x50] sm:%s201] %v250
          %v252 = vld [vmem:[%s208 + $0x58] sm:%s201]
          %253 = vst [vmem:[%s209 + $0x54] sm:%s201] %v252
          %v254 = vld [vmem:[%s208 + $0x4c] sm:%s201]
          %255 = vst [vmem:[%s209 + $0x58] sm:%s201] %v254
          %v256 = vld [vmem:[%s208 + $0x5c] sm:%s201]
          %257 = vst [vmem:[%s209 + $0x5c] sm:%s201] %v256
          %v258 = vld [vmem:[%s208 + $0x60] sm:%s201]
          %259 = vst [vmem:[%s209 + $0x60] sm:%s201] %v258
          %v260 = vld [vmem:[%s208 + $0x70] sm:%s201]
          %261 = vst [vmem:[%s209 + $0x64] sm:%s201] %v260
          %v262 = vld [vmem:[%s208 + $0x64] sm:%s201]
          %263 = vst [vmem:[%s209 + $0x68] sm:%s201] %v262
          %v264 = vld [vmem:[%s208 + $0x74] sm:%s201]
          %265 = vst [vmem:[%s209 + $0x6c] sm:%s201] %v264
          %v266 = vld [vmem:[%s208 + $0x68] sm:%s201]
          %267 = vst [vmem:[%s209 + $0x70] sm:%s201] %v266
          %v268 = vld [vmem:[%s208 + $0x78] sm:%s201]
          %269 = vst [vmem:[%s209 + $0x74] sm:%s201] %v268
          %v270 = vld [vmem:[%s208 + $0x6c] sm:%s201]
          %271 = vst [vmem:[%s209 + $0x78] sm:%s201] %v270
          %v272 = vld [vmem:[%s208 + $0x7c] sm:%s201]
          %273 = vst [vmem:[%s209 + $0x7c] sm:%s201] %v272
          %v274 = vld [vmem:[%s208 + $0x80] sm:%s201]
          %275 = vst [vmem:[%s209 + $0x80] sm:%s201] %v274
          %v276 = vld [vmem:[%s208 + $0x90] sm:%s201]
          %277 = vst [vmem:[%s209 + $0x84] sm:%s201] %v276
          %v278 = vld [vmem:[%s208 + $0x84] sm:%s201]
          %279 = vst [vmem:[%s209 + $0x88] sm:%s201] %v278
          %v280 = vld [vmem:[%s208 + $0x94] sm:%s201]
          %281 = vst [vmem:[%s209 + $0x8c] sm:%s201] %v280
          %v282 = vld [vmem:[%s208 + $0x88] sm:%s201]
          %283 = vst [vmem:[%s209 + $0x90] sm:%s201] %v282
          %v284 = vld [vmem:[%s208 + $0x98] sm:%s201]
          %285 = vst [vmem:[%s209 + $0x94] sm:%s201] %v284
          %v286 = vld [vmem:[%s208 + $0x8c] sm:%s201]
          %287 = vst [vmem:[%s209 + $0x98] sm:%s201] %v286
          %v288 = vld [vmem:[%s208 + $0x9c] sm:%s201]
          %289 = vst [vmem:[%s209 + $0x9c] sm:%s201] %v288
          %v290 = vld [vmem:[%s208 + $0xa0] sm:%s201]
          %291 = vst [vmem:[%s209 + $0xa0] sm:%s201] %v290
          %v292 = vld [vmem:[%s208 + $0xb0] sm:%s201]
          %293 = vst [vmem:[%s209 + $0xa4] sm:%s201] %v292
          %v294 = vld [vmem:[%s208 + $0xa4] sm:%s201]
          %295 = vst [vmem:[%s209 + $0xa8] sm:%s201] %v294
          %v296 = vld [vmem:[%s208 + $0xb4] sm:%s201]
          %297 = vst [vmem:[%s209 + $0xac] sm:%s201] %v296
          %v298 = vld [vmem:[%s208 + $0xa8] sm:%s201]
          %299 = vst [vmem:[%s209 + $0xb0] sm:%s201] %v298
          %v300 = vld [vmem:[%s208 + $0xb8] sm:%s201]
          %301 = vst [vmem:[%s209 + $0xb4] sm:%s201] %v300
          %v302 = vld [vmem:[%s208 + $0xac] sm:%s201]
          %303 = vst [vmem:[%s209 + $0xb8] sm:%s201] %v302
          %v304 = vld [vmem:[%s208 + $0xbc] sm:%s201]
          %305 = vst [vmem:[%s209 + $0xbc] sm:%s201] %v304
          %v306 = vld [vmem:[%s208 + $0xc0] sm:%s201]
          %307 = vst [vmem:[%s209 + $0xc0] sm:%s201] %v306
          %v308 = vld [vmem:[%s208 + $0xd0] sm:%s201]
          %309 = vst [vmem:[%s209 + $0xc4] sm:%s201] %v308
          %v310 = vld [vmem:[%s208 + $0xc4] sm:%s201]
          %311 = vst [vmem:[%s209 + $0xc8] sm:%s201] %v310
          %v312 = vld [vmem:[%s208 + $0xd4] sm:%s201]
          %313 = vst [vmem:[%s209 + $0xcc] sm:%s201] %v312
          %v314 = vld [vmem:[%s208 + $0xc8] sm:%s201]
          %315 = vst [vmem:[%s209 + $0xd0] sm:%s201] %v314
          %v316 = vld [vmem:[%s208 + $0xd8] sm:%s201]
          %317 = vst [vmem:[%s209 + $0xd4] sm:%s201] %v316
          %v318 = vld [vmem:[%s208 + $0xcc] sm:%s201]
          %319 = vst [vmem:[%s209 + $0xd8] sm:%s201] %v318
          %v320 = vld [vmem:[%s208 + $0xdc] sm:%s201]
          %321 = vst [vmem:[%s209 + $0xdc] sm:%s201] %v320
          %v322 = vld [vmem:[%s208 + $0xe0] sm:%s201]
          %323 = vst [vmem:[%s209 + $0xe0] sm:%s201] %v322
          %v324 = vld [vmem:[%s208 + $0xf0] sm:%s201]
          %325 = vst [vmem:[%s209 + $0xe4] sm:%s201] %v324
          %v326 = vld [vmem:[%s208 + $0xe4] sm:%s201]
          %327 = vst [vmem:[%s209 + $0xe8] sm:%s201] %v326
          %v328 = vld [vmem:[%s208 + $0xf4] sm:%s201]
          %329 = vst [vmem:[%s209 + $0xec] sm:%s201] %v328
          %v330 = vld [vmem:[%s208 + $0xe8] sm:%s201]
          %331 = vst [vmem:[%s209 + $0xf0] sm:%s201] %v330
          %v332 = vld [vmem:[%s208 + $0xf8] sm:%s201]
          %333 = vst [vmem:[%s209 + $0xf4] sm:%s201] %v332
          %v334 = vld [vmem:[%s208 + $0xec] sm:%s201]
          %335 = vst [vmem:[%s209 + $0xf8] sm:%s201] %v334
          %v336 = vld [vmem:[%s208 + $0xfc] sm:%s201]
          %337 = vst [vmem:[%s209 + $0xfc] sm:%s201] %v336
        $region56: #{rnn_with_embed_forward.1} parent=43 // loop_footer
          %s207 = sadd.s32 1, %s203
        $region57: #{rnn_with_embed_forward.1} parent=43 // loop_footer_branch
          %202 = sbr.rel target = $region53
        $region58: #{rnn_with_embed_forward.1} parent=43 // loop_exit
          _
      $region44: #{rnn_with_embed_forward.1} parent=28 // pred_fallthru
        _
    $region29: #{rnn_with_embed_forward.1} parent=1 // pred_fallthru
      _
    // Predicated region
    $region30: #{rnn_with_embed_forward.1} parent=1 // pred_check
      %p43 = pneg %p39
    $region31: #{rnn_with_embed_forward.1} parent=1 // pred_check_branch
      %45 = sbr.rel (%p43) target = $region33
    $region32: #{rnn_with_embed_forward.1} parent=1 // pred_region
      %s46 = sshllo.u32 0, 4
      loop: start=0, step=1, limit=1
      $region34: #{rnn_with_embed_forward.1} parent=32 // loop_pre_header
        _
      $region35: #{rnn_with_embed_forward.1} parent=32 // loop_header
        %s48 = sphi 0, %s52
        %p49 = scmp.ge.s32.totalorder %s48, 1
        %s53 = sphi %s3, %s3
        %s54 = sphi [#allocation3], [#allocation3]
      $region36: #{rnn_with_embed_forward.1} parent=32 // loop_header_branch
        %51 = sbr.rel (%p49) target = $region40
      $region37: #{rnn_with_embed_forward.1} parent=32 // loop_body
        %v55 = vld [vmem:[%s53] sm:%s46]
        %56 = vst [vmem:[%s54] sm:%s46] %v55
        %v57 = vld [vmem:[%s53 + $0x10] sm:%s46]
        %58 = vst [vmem:[%s54 + $0x4] sm:%s46] %v57
        %v59 = vld [vmem:[%s53 + $0x4] sm:%s46]
        %60 = vst [vmem:[%s54 + $0x8] sm:%s46] %v59
        %v61 = vld [vmem:[%s53 + $0x14] sm:%s46]
        %62 = vst [vmem:[%s54 + $0xc] sm:%s46] %v61
        %v63 = vld [vmem:[%s53 + $0x8] sm:%s46]
        %64 = vst [vmem:[%s54 + $0x10] sm:%s46] %v63
        %v65 = vld [vmem:[%s53 + $0x18] sm:%s46]
        %66 = vst [vmem:[%s54 + $0x14] sm:%s46] %v65
        %v67 = vld [vmem:[%s53 + $0xc] sm:%s46]
        %68 = vst [vmem:[%s54 + $0x18] sm:%s46] %v67
        %v69 = vld [vmem:[%s53 + $0x1c] sm:%s46]
        %70 = vst [vmem:[%s54 + $0x1c] sm:%s46] %v69
        %v71 = vld [vmem:[%s53 + $0x20] sm:%s46]
        %72 = vst [vmem:[%s54 + $0x20] sm:%s46] %v71
        %v73 = vld [vmem:[%s53 + $0x30] sm:%s46]
        %74 = vst [vmem:[%s54 + $0x24] sm:%s46] %v73
        %v75 = vld [vmem:[%s53 + $0x24] sm:%s46]
        %76 = vst [vmem:[%s54 + $0x28] sm:%s46] %v75
        %v77 = vld [vmem:[%s53 + $0x34] sm:%s46]
        %78 = vst [vmem:[%s54 + $0x2c] sm:%s46] %v77
        %v79 = vld [vmem:[%s53 + $0x28] sm:%s46]
        %80 = vst [vmem:[%s54 + $0x30] sm:%s46] %v79
        %v81 = vld [vmem:[%s53 + $0x38] sm:%s46]
        %82 = vst [vmem:[%s54 + $0x34] sm:%s46] %v81
        %v83 = vld [vmem:[%s53 + $0x2c] sm:%s46]
        %84 = vst [vmem:[%s54 + $0x38] sm:%s46] %v83
        %v85 = vld [vmem:[%s53 + $0x3c] sm:%s46]
        %86 = vst [vmem:[%s54 + $0x3c] sm:%s46] %v85
        %v87 = vld [vmem:[%s53 + $0x40] sm:%s46]
        %88 = vst [vmem:[%s54 + $0x40] sm:%s46] %v87
        %v89 = vld [vmem:[%s53 + $0x50] sm:%s46]
        %90 = vst [vmem:[%s54 + $0x44] sm:%s46] %v89
        %v91 = vld [vmem:[%s53 + $0x44] sm:%s46]
        %92 = vst [vmem:[%s54 + $0x48] sm:%s46] %v91
        %v93 = vld [vmem:[%s53 + $0x54] sm:%s46]
        %94 = vst [vmem:[%s54 + $0x4c] sm:%s46] %v93
        %v95 = vld [vmem:[%s53 + $0x48] sm:%s46]
        %96 = vst [vmem:[%s54 + $0x50] sm:%s46] %v95
        %v97 = vld [vmem:[%s53 + $0x58] sm:%s46]
        %98 = vst [vmem:[%s54 + $0x54] sm:%s46] %v97
        %v99 = vld [vmem:[%s53 + $0x4c] sm:%s46]
        %100 = vst [vmem:[%s54 + $0x58] sm:%s46] %v99
        %v101 = vld [vmem:[%s53 + $0x5c] sm:%s46]
        %102 = vst [vmem:[%s54 + $0x5c] sm:%s46] %v101
        %v103 = vld [vmem:[%s53 + $0x60] sm:%s46]
        %104 = vst [vmem:[%s54 + $0x60] sm:%s46] %v103
        %v105 = vld [vmem:[%s53 + $0x70] sm:%s46]
        %106 = vst [vmem:[%s54 + $0x64] sm:%s46] %v105
        %v107 = vld [vmem:[%s53 + $0x64] sm:%s46]
        %108 = vst [vmem:[%s54 + $0x68] sm:%s46] %v107
        %v109 = vld [vmem:[%s53 + $0x74] sm:%s46]
        %110 = vst [vmem:[%s54 + $0x6c] sm:%s46] %v109
        %v111 = vld [vmem:[%s53 + $0x68] sm:%s46]
        %112 = vst [vmem:[%s54 + $0x70] sm:%s46] %v111
        %v113 = vld [vmem:[%s53 + $0x78] sm:%s46]
        %114 = vst [vmem:[%s54 + $0x74] sm:%s46] %v113
        %v115 = vld [vmem:[%s53 + $0x6c] sm:%s46]
        %116 = vst [vmem:[%s54 + $0x78] sm:%s46] %v115
        %v117 = vld [vmem:[%s53 + $0x7c] sm:%s46]
        %118 = vst [vmem:[%s54 + $0x7c] sm:%s46] %v117
        %v119 = vld [vmem:[%s53 + $0x80] sm:%s46]
        %120 = vst [vmem:[%s54 + $0x80] sm:%s46] %v119
        %v121 = vld [vmem:[%s53 + $0x90] sm:%s46]
        %122 = vst [vmem:[%s54 + $0x84] sm:%s46] %v121
        %v123 = vld [vmem:[%s53 + $0x84] sm:%s46]
        %124 = vst [vmem:[%s54 + $0x88] sm:%s46] %v123
        %v125 = vld [vmem:[%s53 + $0x94] sm:%s46]
        %126 = vst [vmem:[%s54 + $0x8c] sm:%s46] %v125
        %v127 = vld [vmem:[%s53 + $0x88] sm:%s46]
        %128 = vst [vmem:[%s54 + $0x90] sm:%s46] %v127
        %v129 = vld [vmem:[%s53 + $0x98] sm:%s46]
        %130 = vst [vmem:[%s54 + $0x94] sm:%s46] %v129
        %v131 = vld [vmem:[%s53 + $0x8c] sm:%s46]
        %132 = vst [vmem:[%s54 + $0x98] sm:%s46] %v131
        %v133 = vld [vmem:[%s53 + $0x9c] sm:%s46]
        %134 = vst [vmem:[%s54 + $0x9c] sm:%s46] %v133
        %v135 = vld [vmem:[%s53 + $0xa0] sm:%s46]
        %136 = vst [vmem:[%s54 + $0xa0] sm:%s46] %v135
        %v137 = vld [vmem:[%s53 + $0xb0] sm:%s46]
        %138 = vst [vmem:[%s54 + $0xa4] sm:%s46] %v137
        %v139 = vld [vmem:[%s53 + $0xa4] sm:%s46]
        %140 = vst [vmem:[%s54 + $0xa8] sm:%s46] %v139
        %v141 = vld [vmem:[%s53 + $0xb4] sm:%s46]
        %142 = vst [vmem:[%s54 + $0xac] sm:%s46] %v141
        %v143 = vld [vmem:[%s53 + $0xa8] sm:%s46]
        %144 = vst [vmem:[%s54 + $0xb0] sm:%s46] %v143
        %v145 = vld [vmem:[%s53 + $0xb8] sm:%s46]
        %146 = vst [vmem:[%s54 + $0xb4] sm:%s46] %v145
        %v147 = vld [vmem:[%s53 + $0xac] sm:%s46]
        %148 = vst [vmem:[%s54 + $0xb8] sm:%s46] %v147
        %v149 = vld [vmem:[%s53 + $0xbc] sm:%s46]
        %150 = vst [vmem:[%s54 + $0xbc] sm:%s46] %v149
        %v151 = vld [vmem:[%s53 + $0xc0] sm:%s46]
        %152 = vst [vmem:[%s54 + $0xc0] sm:%s46] %v151
        %v153 = vld [vmem:[%s53 + $0xd0] sm:%s46]
        %154 = vst [vmem:[%s54 + $0xc4] sm:%s46] %v153
        %v155 = vld [vmem:[%s53 + $0xc4] sm:%s46]
        %156 = vst [vmem:[%s54 + $0xc8] sm:%s46] %v155
        %v157 = vld [vmem:[%s53 + $0xd4] sm:%s46]
        %158 = vst [vmem:[%s54 + $0xcc] sm:%s46] %v157
        %v159 = vld [vmem:[%s53 + $0xc8] sm:%s46]
        %160 = vst [vmem:[%s54 + $0xd0] sm:%s46] %v159
        %v161 = vld [vmem:[%s53 + $0xd8] sm:%s46]
        %162 = vst [vmem:[%s54 + $0xd4] sm:%s46] %v161
        %v163 = vld [vmem:[%s53 + $0xcc] sm:%s46]
        %164 = vst [vmem:[%s54 + $0xd8] sm:%s46] %v163
        %v165 = vld [vmem:[%s53 + $0xdc] sm:%s46]
        %166 = vst [vmem:[%s54 + $0xdc] sm:%s46] %v165
        %v167 = vld [vmem:[%s53 + $0xe0] sm:%s46]
        %168 = vst [vmem:[%s54 + $0xe0] sm:%s46] %v167
        %v169 = vld [vmem:[%s53 + $0xf0] sm:%s46]
        %170 = vst [vmem:[%s54 + $0xe4] sm:%s46] %v169
        %v171 = vld [vmem:[%s53 + $0xe4] sm:%s46]
        %172 = vst [vmem:[%s54 + $0xe8] sm:%s46] %v171
        %v173 = vld [vmem:[%s53 + $0xf4] sm:%s46]
        %174 = vst [vmem:[%s54 + $0xec] sm:%s46] %v173
        %v175 = vld [vmem:[%s53 + $0xe8] sm:%s46]
        %176 = vst [vmem:[%s54 + $0xf0] sm:%s46] %v175
        %v177 = vld [vmem:[%s53 + $0xf8] sm:%s46]
        %178 = vst [vmem:[%s54 + $0xf4] sm:%s46] %v177
        %v179 = vld [vmem:[%s53 + $0xec] sm:%s46]
        %180 = vst [vmem:[%s54 + $0xf8] sm:%s46] %v179
        %v181 = vld [vmem:[%s53 + $0xfc] sm:%s46]
        %182 = vst [vmem:[%s54 + $0xfc] sm:%s46] %v181
      $region38: #{rnn_with_embed_forward.1} parent=32 // loop_footer
        %s52 = sadd.s32 1, %s48
      $region39: #{rnn_with_embed_forward.1} parent=32 // loop_footer_branch
        %47 = sbr.rel target = $region35
      $region40: #{rnn_with_embed_forward.1} parent=32 // loop_exit
        _
    $region33: #{rnn_with_embed_forward.1} parent=1 // pred_fallthru
      _
    // Predicated region
    $region59: #{rnn_with_embed_forward.1} parent=1 // pred_check
      _
    $region60: #{rnn_with_embed_forward.1} parent=1 // pred_check_branch
      %340 = sbr.rel (0) target = $region62
    $region61: #{rnn_with_embed_forward.1} parent=1 // pred_region
      %341 = vsyncadd [#allocation6], 4096
    $region62: #{rnn_with_embed_forward.1} parent=1 // pred_fallthru
      _
    %s342 = scalar_lea.sflag [#allocation6], 1
    %s344 = sshll.u32 1, 14
    %s345 = sxor.u32 4294967295, %s344
    %s347 = sld [smem:[#allocation0]]
    %s348 = sadd.s32 2, %s347
    %s350 = sshll.u32 7, 26
    %s351 = sxor.u32 4294967295, %s350
    %s352 = sand.u32 0, %s351
    %s353 = sshll.u32 %s348, 26
    %s354 = sor.u32 %s352, %s353
    %s355 = sshll.u32 [#allocation4], 4
    %s356 = int_to_ptr.vmem [resolvable:$true] %s355
    %359 = sst [smem:[#allocation11]] 512
    %s360 = scalar_lea.smem [#allocation11], 1
    %361 = sst [smem:[%s360]] 512
    %s362 = scalar_lea.smem [#allocation11], 2
    %363 = sst [smem:[%s362]] 4
    %s364 = scalar_lea.smem [#allocation11], 3
    %365 = sst [smem:[%s364]] 64
    %s366 = scalar_lea.smem [#allocation11], 4
    %367 = sst [smem:[%s366]] 128
    %s368 = scalar_lea.smem [#allocation11], 5
    %369 = sst [smem:[%s368]] 2
    %s370 = scalar_lea.smem [#allocation11], 6
    %371 = sst [smem:[%s370]] 256
    %s372 = scalar_lea.smem [#allocation11], 7
    %373 = sst [smem:[%s372]] 64
    %s374 = scalar_lea.smem [#allocation11], 8
    %375 = sst [smem:[%s374]] 4
    %377 = dma.general %s4, 8192, %s356, %s342, [#allocation10], [#allocation11], %s354, 0
    %s378 = scalar_lea.sflag [#allocation6], 2
    // Predicated region
    $region63: #{rnn_with_embed_forward.1} parent=1 // pred_check
      _
    $region64: #{rnn_with_embed_forward.1} parent=1 // pred_check_branch
      %380 = sbr.rel target = $region66
    $region65: #{rnn_with_embed_forward.1} parent=1 // pred_region
      %381 = sst [smem:[#allocation14]] [#allocation13]
      %382 = sst [smem:[#allocation15]] [#allocation12]
    $region66: #{rnn_with_embed_forward.1} parent=1 // pred_fallthru
      _
    %384 = shalt.err (0)
    %s386 = sshll.u32 [#allocation5], 4
    %s387 = int_to_ptr.vmem [resolvable:$true] %s386
    %389 = dma.hbm_to_vmem [thread:$0]  %s6, 1024, %s387, %s378
    %v390 = vld [vmem:[%s0] sm:$0xf]
    %v391 = vld [vmem:[%s0 + $0x4] sm:$0xf]
    %v392 = vld [vmem:[%s0 + $0x8] sm:$0xf]
    %v393 = vld [vmem:[%s0 + $0xc] sm:$0xf]
    %v394 = vld [vmem:[%s0 + $0x10] sm:$0xf]
    %v395 = vld [vmem:[%s0 + $0x14] sm:$0xf]
    %v396 = vld [vmem:[%s0 + $0x18] sm:$0xf]
    %v397 = vld [vmem:[%s0 + $0x1c] sm:$0xf]
    %v398 = vld [vmem:[#allocation7] sm:$0xff]
    %v399 = vld [vmem:[#allocation7 + $0x8] sm:$0xff]
    %v400 = vld [vmem:[#allocation7 + $0x10] sm:$0xff]
    %v401 = vld [vmem:[#allocation7 + $0x18] sm:$0xff]
    %v402 = vld [vmem:[#allocation7 + $0x20] sm:$0xff]
    %v403 = vld [vmem:[#allocation7 + $0x28] sm:$0xff]
    %v404 = vld [vmem:[#allocation7 + $0x30] sm:$0xff]
    %v405 = vld [vmem:[#allocation7 + $0x38] sm:$0xff]
    %v406 = vld [vmem:[%s2] sm:$0xf]
    %v408 = vlaneseq
    %v409 = vshrl.u32 %v408, 7
    %v410 = vsub.s32 0, %v409
    %v411 = vrot.slane %v406, %v410
    %v412 = vlaneseq
    %v413 = vshrl.u32 %v412, 7
    %v414 = vsub.s32 1, %v413
    %v415 = vrot.slane %v406, %v414
    %v416 = vlaneseq
    %v417 = vshrl.u32 %v416, 7
    %v418 = vsub.s32 2, %v417
    %v419 = vrot.slane %v406, %v418
    %v420 = vlaneseq
    %v421 = vshrl.u32 %v420, 7
    %v422 = vsub.s32 3, %v421
    %v423 = vrot.slane %v406, %v422
    %v436 = vunpack.c.l.b16 %v390
    %v437 = vunpack.c.l.b16 %v391
    %v438 = vunpack.c.l.b16 %v392
    %v439 = vunpack.c.l.b16 %v393
    %v440 = vunpack.c.l.b16 %v394
    %v441 = vunpack.c.l.b16 %v395
    %v442 = vunpack.c.l.b16 %v396
    %v443 = vunpack.c.l.b16 %v397
    %v444 = vpack.c.b16 %v437, %v436
    %v445 = vpack.c.b16 %v439, %v438
    %v446 = vpack.c.b16 %v441, %v440
    %v447 = vpack.c.b16 %v443, %v442
    %v456 = vunpack.c.l.b16 %v398
    %v457 = vunpack.c.h.b16 %v398
    %v458 = vunpack.c.l.b16 %v399
    %v459 = vunpack.c.h.b16 %v399
    %v460 = vunpack.c.l.b16 %v400
    %v461 = vunpack.c.h.b16 %v400
    %v462 = vunpack.c.l.b16 %v401
    %v463 = vunpack.c.h.b16 %v401
    %v464 = vunpack.c.l.b16 %v402
    %v465 = vunpack.c.h.b16 %v402
    %v466 = vunpack.c.l.b16 %v403
    %v467 = vunpack.c.h.b16 %v403
    %v468 = vunpack.c.l.b16 %v404
    %v469 = vunpack.c.h.b16 %v404
    %v470 = vunpack.c.l.b16 %v405
    %v471 = vunpack.c.h.b16 %v405
    %v472 = vpack.c.b16 %v460, %v456
    %v473 = vpack.c.b16 %v461, %v457
    %v474 = vpack.c.b16 %v462, %v458
    %v475 = vpack.c.b16 %v463, %v459
    %v476 = vpack.c.b16 %v468, %v464
    %v477 = vpack.c.b16 %v469, %v465
    %v478 = vpack.c.b16 %v470, %v466
    %v479 = vpack.c.b16 %v471, %v467
    %vm488 = vcmask 261120
    %v490 = vsel %vm488, %v444, 0
    %v493 = vsel %vm488, %v445, 0
    %v496 = vsel %vm488, %v446, 0
    %v499 = vsel %vm488, %v447, 0
    %501 = vmatprep.subr.bf16.mxu0 %v473
    %502 = vmatpush1.bf16.msra.mxu0 %v472
    %503 = vmatprep.subr.bf16.mxu0 %v477
    %504 = vmatpush1.bf16.msra.mxu0 %v476
    %505 = vmatprep.subr.bf16.mxu0 0
    %506 = vmatpush1.bf16.msra.mxu0 0
    %507 = vmatprep.subr.bf16.mxu0 0
    %508 = vmatpush1.bf16.msra.mxu0 0
    %509 = vmatprep.subr.bf16.mxu0 0
    %510 = vmatpush1.bf16.msra.mxu0 0
    %511 = vmatprep.subr.bf16.mxu0 0
    %512 = vmatpush1.bf16.msra.mxu0 0
    %513 = vmatprep.subr.bf16.mxu0 0
    %514 = vmatpush1.bf16.msra.mxu0 0
    %515 = vmatprep.subr.bf16.mxu0 0
    %516 = vmatpush1.bf16.msra.mxu0 0
    %517 = vmatprep.subr.bf16.mxu0 0
    %518 = vmatpush1.bf16.msra.mxu0 0
    %519 = vmatprep.subr.bf16.mxu0 0
    %520 = vmatpush1.bf16.msra.mxu0 0
    %521 = vmatprep.subr.bf16.mxu0 0
    %522 = vmatpush1.bf16.msra.mxu0 0
    %523 = vmatprep.subr.bf16.mxu0 0
    %524 = vmatpush1.bf16.msra.mxu0 0
    %525 = vmatprep.subr.bf16.mxu0 0
    %526 = vmatpush1.bf16.msra.mxu0 0
    %527 = vmatprep.subr.bf16.mxu0 0
    %528 = vmatpush1.bf16.msra.mxu0 0
    %529 = vmatprep.subr.bf16.mxu0 0
    %530 = vmatpush1.bf16.msra.mxu0 0
    %531 = vmatprep.subr.bf16.mxu0 0
    %532 = vmatpush1.bf16.msra.mxu0 0
    %533 = vmatprep.mubr.bf16.mxu0 0
    %534 = vmatmul.mubr.bf16.gmra.mrb[0].mxu0 %v490
    %v535 = vpop.f32.mrb[0].mxu0
    %v536 = vadd.f32 %v411, %v535
    %v537 = vpop.f32.mrb[0].mxu0
    %v538 = vadd.f32 %v415, %v537
    %v539 = vpop.f32.mrb[0].mxu0
    %v540 = vadd.f32 %v411, %v539
    %v541 = vpop.f32.mrb[0].mxu0
    %v542 = vadd.f32 %v415, %v541
    %543 = vmatprep.mubr.bf16.mxu0 0
    %544 = vmatmul.mubr.bf16.gmra.mrb[0].mxu0 %v493
    %v545 = vpop.f32.mrb[0].mxu0
    %v546 = vadd.f32 %v411, %v545
    %v547 = vpop.f32.mrb[0].mxu0
    %v548 = vadd.f32 %v415, %v547
    %v549 = vpop.f32.mrb[0].mxu0
    %v550 = vadd.f32 %v411, %v549
    %v551 = vpop.f32.mrb[0].mxu0
    %v552 = vadd.f32 %v415, %v551
    %553 = vmatprep.mubr.bf16.mxu0 0
    %554 = vmatmul.mubr.bf16.gmra.mrb[0].mxu0 %v496
    %v555 = vpop.f32.mrb[0].mxu0
    %v556 = vadd.f32 %v411, %v555
    %v557 = vpop.f32.mrb[0].mxu0
    %v558 = vadd.f32 %v415, %v557
    %v559 = vpop.f32.mrb[0].mxu0
    %v560 = vadd.f32 %v411, %v559
    %v561 = vpop.f32.mrb[0].mxu0
    %v562 = vadd.f32 %v415, %v561
    %563 = vmatprep.mubr.bf16.mxu0 0
    %564 = vmatmul.mubr.bf16.gmra.mrb[0].mxu0 %v499
    %v565 = vpop.f32.mrb[0].mxu0
    %v566 = vadd.f32 %v411, %v565
    %v567 = vpop.f32.mrb[0].mxu0
    %v568 = vadd.f32 %v415, %v567
    %v569 = vpop.f32.mrb[0].mxu0
    %v570 = vadd.f32 %v411, %v569
    %v571 = vpop.f32.mrb[0].mxu0
    %v572 = vadd.f32 %v415, %v571
    %573 = vdwg.mxu0
    %574 = vmatprep.subr.bf16.mxu0 %v475
    %575 = vmatpush1.bf16.msra.mxu0 %v474
    %576 = vmatprep.subr.bf16.mxu0 %v479
    %577 = vmatpush1.bf16.msra.mxu0 %v478
    %578 = vmatprep.subr.bf16.mxu0 0
    %579 = vmatpush1.bf16.msra.mxu0 0
    %580 = vmatprep.subr.bf16.mxu0 0
    %581 = vmatpush1.bf16.msra.mxu0 0
    %582 = vmatprep.subr.bf16.mxu0 0
    %583 = vmatpush1.bf16.msra.mxu0 0
    %584 = vmatprep.subr.bf16.mxu0 0
    %585 = vmatpush1.bf16.msra.mxu0 0
    %586 = vmatprep.subr.bf16.mxu0 0
    %587 = vmatpush1.bf16.msra.mxu0 0
    %588 = vmatprep.subr.bf16.mxu0 0
    %589 = vmatpush1.bf16.msra.mxu0 0
    %590 = vmatprep.subr.bf16.mxu0 0
    %591 = vmatpush1.bf16.msra.mxu0 0
    %592 = vmatprep.subr.bf16.mxu0 0
    %593 = vmatpush1.bf16.msra.mxu0 0
    %594 = vmatprep.subr.bf16.mxu0 0
    %595 = vmatpush1.bf16.msra.mxu0 0
    %596 = vmatprep.subr.bf16.mxu0 0
    %597 = vmatpush1.bf16.msra.mxu0 0
    %598 = vmatprep.subr.bf16.mxu0 0
    %599 = vmatpush1.bf16.msra.mxu0 0
    %600 = vmatprep.subr.bf16.mxu0 0
    %601 = vmatpush1.bf16.msra.mxu0 0
    %602 = vmatprep.subr.bf16.mxu0 0
    %603 = vmatpush1.bf16.msra.mxu0 0
    %604 = vmatprep.subr.bf16.mxu0 0
    %605 = vmatpush1.bf16.msra.mxu0 0
    %606 = vmatprep.mubr.bf16.mxu0 0
    %607 = vmatmul.mubr.bf16.gmra.mrb[0].mxu0 %v490
    %v608 = vpop.f32.mrb[0].mxu0
    %v609 = vadd.f32 %v419, %v608
    %v610 = vpop.f32.mrb[0].mxu0
    %v611 = vadd.f32 %v423, %v610
    %v612 = vpop.f32.mrb[0].mxu0
    %v613 = vadd.f32 %v419, %v612
    %v614 = vpop.f32.mrb[0].mxu0
    %v615 = vadd.f32 %v423, %v614
    %616 = vmatprep.mubr.bf16.mxu0 0
    %617 = vmatmul.mubr.bf16.gmra.mrb[0].mxu0 %v493
    %v618 = vpop.f32.mrb[0].mxu0
    %v619 = vadd.f32 %v419, %v618
    %v620 = vpop.f32.mrb[0].mxu0
    %v621 = vadd.f32 %v423, %v620
    %v622 = vpop.f32.mrb[0].mxu0
    %v623 = vadd.f32 %v419, %v622
    %v624 = vpop.f32.mrb[0].mxu0
    %v625 = vadd.f32 %v423, %v624
    %626 = vmatprep.mubr.bf16.mxu0 0
    %627 = vmatmul.mubr.bf16.gmra.mrb[0].mxu0 %v496
    %v628 = vpop.f32.mrb[0].mxu0
    %v629 = vadd.f32 %v419, %v628
    %v630 = vpop.f32.mrb[0].mxu0
    %v631 = vadd.f32 %v423, %v630
    %v632 = vpop.f32.mrb[0].mxu0
    %v633 = vadd.f32 %v419, %v632
    %v634 = vpop.f32.mrb[0].mxu0
    %v635 = vadd.f32 %v423, %v634
    %636 = vmatprep.mubr.bf16.mxu0 0
    %637 = vmatmul.mubr.bf16.gmra.mrb[0].mxu0 %v499
    %v638 = vpop.f32.mrb[0].mxu0
    %v639 = vadd.f32 %v419, %v638
    %v640 = vpop.f32.mrb[0].mxu0
    %v641 = vadd.f32 %v423, %v640
    %v642 = vpop.f32.mrb[0].mxu0
    %v643 = vadd.f32 %v419, %v642
    %v644 = vpop.f32.mrb[0].mxu0
    %v645 = vadd.f32 %v423, %v644
    %646 = vdwg.mxu0
    %647 = vst [vmem:[#allocation2] sm:$0xff] %v536
    %648 = vst [vmem:[#allocation2 + $0x8] sm:$0xff] %v538
    %649 = vst [vmem:[#allocation2 + $0x10] sm:$0xff] %v609
    %650 = vst [vmem:[#allocation2 + $0x18] sm:$0xff] %v611
    %651 = vst [vmem:[#allocation2 + $0x20] sm:$0xff] %v540
    %652 = vst [vmem:[#allocation2 + $0x28] sm:$0xff] %v542
    %653 = vst [vmem:[#allocation2 + $0x30] sm:$0xff] %v613
    %654 = vst [vmem:[#allocation2 + $0x38] sm:$0xff] %v615
    %655 = vst [vmem:[#allocation2 + $0x40] sm:$0xff] %v546
    %656 = vst [vmem:[#allocation2 + $0x48] sm:$0xff] %v548
    %657 = vst [vmem:[#allocation2 + $0x50] sm:$0xff] %v619
    %658 = vst [vmem:[#allocation2 + $0x58] sm:$0xff] %v621
    %659 = vst [vmem:[#allocation2 + $0x60] sm:$0xff] %v550
    %660 = vst [vmem:[#allocation2 + $0x68] sm:$0xff] %v552
    %661 = vst [vmem:[#allocation2 + $0x70] sm:$0xff] %v623
    %662 = vst [vmem:[#allocation2 + $0x78] sm:$0xff] %v625
    %663 = vst [vmem:[#allocation2 + $0x80] sm:$0xff] %v556
    %664 = vst [vmem:[#allocation2 + $0x88] sm:$0xff] %v558
    %665 = vst [vmem:[#allocation2 + $0x90] sm:$0xff] %v629
    %666 = vst [vmem:[#allocation2 + $0x98] sm:$0xff] %v631
    %667 = vst [vmem:[#allocation2 + $0xa0] sm:$0xff] %v560
    %668 = vst [vmem:[#allocation2 + $0xa8] sm:$0xff] %v562
    %669 = vst [vmem:[#allocation2 + $0xb0] sm:$0xff] %v633
    %670 = vst [vmem:[#allocation2 + $0xb8] sm:$0xff] %v635
    %671 = vst [vmem:[#allocation2 + $0xc0] sm:$0xff] %v566
    %672 = vst [vmem:[#allocation2 + $0xc8] sm:$0xff] %v568
    %673 = vst [vmem:[#allocation2 + $0xd0] sm:$0xff] %v639
    %674 = vst [vmem:[#allocation2 + $0xd8] sm:$0xff] %v641
    %675 = vst [vmem:[#allocation2 + $0xe0] sm:$0xff] %v570
    %676 = vst [vmem:[#allocation2 + $0xe8] sm:$0xff] %v572
    %677 = vst [vmem:[#allocation2 + $0xf0] sm:$0xff] %v643
    %678 = vst [vmem:[#allocation2 + $0xf8] sm:$0xff] %v645
    %s679 = smul.u32 4, 16
    %s680 = smul.u32 %s679, 4
    %s681 = sshll.u32 %s680, 4
    %682 = dma.done [#allocation6], %s681
    %s683 = smul.u32 4, 32
    %s684 = smul.u32 %s683, 4
    %s685 = sshll.u32 %s684, 4
    %686 = dma.done %s342, %s685
    %s687 = smul.u32 %s679, 1
    %s688 = sshll.u32 %s687, 4
    %689 = dma.done %s378, %s688
    %v690 = vld [vmem:[%s5] sm:$0xf]
    %v692 = vlaneseq
    %v693 = vshrl.u32 %v692, 7
    %v694 = vsub.s32 0, %v693
    %v695 = vrot.slane %v690, %v694
    %v696 = vlaneseq
    %v697 = vshrl.u32 %v696, 7
    %v698 = vsub.s32 1, %v697
    %v699 = vrot.slane %v690, %v698
    %v700 = vlaneseq
    %v701 = vshrl.u32 %v700, 7
    %v702 = vsub.s32 2, %v701
    %v703 = vrot.slane %v690, %v702
    %v704 = vlaneseq
    %v705 = vshrl.u32 %v704, 7
    %v706 = vsub.s32 3, %v705
    %v707 = vrot.slane %v690, %v706
    %v712 = vld [vmem:[#allocation2] sm:$0xff]
    %v713 = vld [vmem:[#allocation2 + $0x8] sm:$0xff]
    %v714 = vld [vmem:[#allocation2 + $0x10] sm:$0xff]
    %v715 = vld [vmem:[#allocation2 + $0x18] sm:$0xff]
    %v716 = vxor.u32 %v712, 2147483648
    %v717 = vxor.u32 %v713, 2147483648
    %v718 = vxor.u32 %v714, 2147483648
    %v719 = vmul.f32 %v716, 1.442695
    %v720 = vpow.pop %v719
    %v721 = vmul.f32 %v717, 1.442695
    %v722 = vpow.pop %v721
    %v723 = vmul.f32 %v718, 1.442695
    %v724 = vpow.pop %v723
    %v725 = vadd.f32 %v720, 1.0
    %v726 = vadd.f32 %v722, 1.0
    %v727 = vadd.f32 %v724, 1.0
    %v728 = vrcp.pop %v725
    %v729 = vmul.f32 1.0, %v728
    %v730 = vrcp.pop %v726
    %v731 = vmul.f32 1.0, %v730
    %v732 = vrcp.pop %v727
    %v733 = vmul.f32 1.0, %v732
    %v734 = vtanh.pop %v715
    %v735 = vmul.f32 %v731, 0.0
    %v736 = vmul.f32 %v729, %v734
    %v737 = vadd.f32 %v735, %v736
    %v738 = vtanh.pop %v737
    %v739 = vmul.f32 %v733, %v738
    %s740 = smul.u32 1, 4
    %s741 = smul.addr %s740, 8
    %s742 = scalar_lea.vmem [#allocation2], %s741
    %v743 = vld [vmem:[%s742] sm:$0xff]
    %v744 = vld [vmem:[%s742 + $0x8] sm:$0xff]
    %v745 = vld [vmem:[%s742 + $0x10] sm:$0xff]
    %v746 = vld [vmem:[%s742 + $0x18] sm:$0xff]
    %v747 = vpack.c.bf16 %v739, %v739
    %v748 = vld [vmem:[#allocation3] sm:$0xff]
    %v749 = vld [vmem:[#allocation3 + $0x8] sm:$0xff]
    %v750 = vld [vmem:[#allocation3 + $0x10] sm:$0xff]
    %v751 = vld [vmem:[#allocation3 + $0x18] sm:$0xff]
    %v752 = vld [vmem:[#allocation3 + $0x20] sm:$0xff]
    %v753 = vld [vmem:[#allocation3 + $0x28] sm:$0xff]
    %v754 = vld [vmem:[#allocation3 + $0x30] sm:$0xff]
    %v755 = vld [vmem:[#allocation3 + $0x38] sm:$0xff]
    %v756 = vld [vmem:[#allocation3 + $0x40] sm:$0xff]
    %v757 = vld [vmem:[#allocation3 + $0x48] sm:$0xff]
    %v758 = vld [vmem:[#allocation3 + $0x50] sm:$0xff]
    %v759 = vld [vmem:[#allocation3 + $0x58] sm:$0xff]
    %v760 = vld [vmem:[#allocation3 + $0x60] sm:$0xff]
    %v761 = vld [vmem:[#allocation3 + $0x68] sm:$0xff]
    %v762 = vld [vmem:[#allocation3 + $0x70] sm:$0xff]
    %v763 = vld [vmem:[#allocation3 + $0x78] sm:$0xff]
    %v764 = vld [vmem:[#allocation3 + $0x80] sm:$0xff]
    %v765 = vld [vmem:[#allocation3 + $0x88] sm:$0xff]
    %v766 = vld [vmem:[#allocation3 + $0x90] sm:$0xff]
    %v767 = vld [vmem:[#allocation3 + $0x98] sm:$0xff]
    %v768 = vld [vmem:[#allocation3 + $0xa0] sm:$0xff]
    %v769 = vld [vmem:[#allocation3 + $0xa8] sm:$0xff]
    %v770 = vld [vmem:[#allocation3 + $0xb0] sm:$0xff]
    %v771 = vld [vmem:[#allocation3 + $0xb8] sm:$0xff]
    %v772 = vld [vmem:[#allocation3 + $0xc0] sm:$0xff]
    %v773 = vld [vmem:[#allocation3 + $0xc8] sm:$0xff]
    %v774 = vld [vmem:[#allocation3 + $0xd0] sm:$0xff]
    %v775 = vld [vmem:[#allocation3 + $0xd8] sm:$0xff]
    %v776 = vld [vmem:[#allocation3 + $0xe0] sm:$0xff]
    %v777 = vld [vmem:[#allocation3 + $0xe8] sm:$0xff]
    %v778 = vld [vmem:[#allocation3 + $0xf0] sm:$0xff]
    %v779 = vld [vmem:[#allocation3 + $0xf8] sm:$0xff]
    %780 = vmatprep.subr.bf16.mxu0 %v749
    %781 = vmatpush1.bf16.msra.mxu0 %v748
    %782 = vmatprep.subr.bf16.mxu0 %v753
    %783 = vmatpush1.bf16.msra.mxu0 %v752
    %784 = vmatprep.subr.bf16.mxu0 %v757
    %785 = vmatpush1.bf16.msra.mxu0 %v756
    %786 = vmatprep.subr.bf16.mxu0 %v761
    %787 = vmatpush1.bf16.msra.mxu0 %v760
    %788 = vmatprep.subr.bf16.mxu0 %v765
    %789 = vmatpush1.bf16.msra.mxu0 %v764
    %790 = vmatprep.subr.bf16.mxu0 %v769
    %791 = vmatpush1.bf16.msra.mxu0 %v768
    %792 = vmatprep.subr.bf16.mxu0 %v773
    %793 = vmatpush1.bf16.msra.mxu0 %v772
    %794 = vmatprep.subr.bf16.mxu0 %v777
    %795 = vmatpush1.bf16.msra.mxu0 %v776
    %796 = vmatprep.subr.bf16.mxu0 0
    %797 = vmatpush1.bf16.msra.mxu0 0
    %798 = vmatprep.subr.bf16.mxu0 0
    %799 = vmatpush1.bf16.msra.mxu0 0
    %800 = vmatprep.subr.bf16.mxu0 0
    %801 = vmatpush1.bf16.msra.mxu0 0
    %802 = vmatprep.subr.bf16.mxu0 0
    %803 = vmatpush1.bf16.msra.mxu0 0
    %804 = vmatprep.subr.bf16.mxu0 0
    %805 = vmatpush1.bf16.msra.mxu0 0
    %806 = vmatprep.subr.bf16.mxu0 0
    %807 = vmatpush1.bf16.msra.mxu0 0
    %808 = vmatprep.subr.bf16.mxu0 0
    %809 = vmatpush1.bf16.msra.mxu0 0
    %810 = vmatprep.subr.bf16.mxu0 0
    %811 = vmatpush1.bf16.msra.mxu0 0
    %812 = vmatprep.mubr.bf16.mxu0 0
    %813 = vmatmul.mubr.bf16.gmra.mrb[0].mxu0 %v747
    %v814 = vpop.f32.mrb[0].mxu0
    %v815 = vadd.f32 0.0, %v814
    %v816 = vpop.f32.mrb[0].mxu0
    %v817 = vadd.f32 0.0, %v816
    %v818 = vpop.f32.mrb[0].mxu0
    %v819 = vpop.f32.mrb[0].mxu0
    %820 = vdwg.mxu0
    %821 = vmatprep.subr.bf16.mxu0 %v751
    %822 = vmatpush1.bf16.msra.mxu0 %v750
    %823 = vmatprep.subr.bf16.mxu0 %v755
    %824 = vmatpush1.bf16.msra.mxu0 %v754
    %825 = vmatprep.subr.bf16.mxu0 %v759
    %826 = vmatpush1.bf16.msra.mxu0 %v758
    %827 = vmatprep.subr.bf16.mxu0 %v763
    %828 = vmatpush1.bf16.msra.mxu0 %v762
    %829 = vmatprep.subr.bf16.mxu0 %v767
    %830 = vmatpush1.bf16.msra.mxu0 %v766
    %831 = vmatprep.subr.bf16.mxu0 %v771
    %832 = vmatpush1.bf16.msra.mxu0 %v770
    %833 = vmatprep.subr.bf16.mxu0 %v775
    %834 = vmatpush1.bf16.msra.mxu0 %v774
    %835 = vmatprep.subr.bf16.mxu0 %v779
    %836 = vmatpush1.bf16.msra.mxu0 %v778
    %837 = vmatprep.subr.bf16.mxu0 0
    %838 = vmatpush1.bf16.msra.mxu0 0
    %839 = vmatprep.subr.bf16.mxu0 0
    %840 = vmatpush1.bf16.msra.mxu0 0
    %841 = vmatprep.subr.bf16.mxu0 0
    %842 = vmatpush1.bf16.msra.mxu0 0
    %843 = vmatprep.subr.bf16.mxu0 0
    %844 = vmatpush1.bf16.msra.mxu0 0
    %845 = vmatprep.subr.bf16.mxu0 0
    %846 = vmatpush1.bf16.msra.mxu0 0
    %847 = vmatprep.subr.bf16.mxu0 0
    %848 = vmatpush1.bf16.msra.mxu0 0
    %849 = vmatprep.subr.bf16.mxu0 0
    %850 = vmatpush1.bf16.msra.mxu0 0
    %851 = vmatprep.subr.bf16.mxu0 0
    %852 = vmatpush1.bf16.msra.mxu0 0
    %853 = vmatprep.mubr.bf16.mxu0 0
    %854 = vmatmul.mubr.bf16.gmra.mrb[0].mxu0 %v747
    %v855 = vpop.f32.mrb[0].mxu0
    %v856 = vadd.f32 0.0, %v855
    %v857 = vpop.f32.mrb[0].mxu0
    %v858 = vadd.f32 0.0, %v857
    %v859 = vpop.f32.mrb[0].mxu0
    %v860 = vpop.f32.mrb[0].mxu0
    %861 = vdwg.mxu0
    %v862 = vadd.f32 %v743, %v815
    %v863 = vadd.f32 %v744, %v817
    %v864 = vadd.f32 %v745, %v856
    %v865 = vadd.f32 %v746, %v858
    %v866 = vpack.c.bf16 0.0, 0.0
    %v867 = vld [vmem:[#allocation4] sm:$0xff]
    %v868 = vld [vmem:[#allocation4 + $0x8] sm:$0xff]
    %v869 = vld [vmem:[#allocation4 + $0x10] sm:$0xff]
    %v870 = vld [vmem:[#allocation4 + $0x18] sm:$0xff]
    %v871 = vld [vmem:[#allocation4 + $0x20] sm:$0xff]
    %v872 = vld [vmem:[#allocation4 + $0x28] sm:$0xff]
    %v873 = vld [vmem:[#allocation4 + $0x30] sm:$0xff]
    %v874 = vld [vmem:[#allocation4 + $0x38] sm:$0xff]
    %v875 = vld [vmem:[#allocation4 + $0x40] sm:$0xff]
    %v876 = vld [vmem:[#allocation4 + $0x48] sm:$0xff]
    %v877 = vld [vmem:[#allocation4 + $0x50] sm:$0xff]
    %v878 = vld [vmem:[#allocation4 + $0x58] sm:$0xff]
    %v879 = vld [vmem:[#allocation4 + $0x60] sm:$0xff]
    %v880 = vld [vmem:[#allocation4 + $0x68] sm:$0xff]
    %v881 = vld [vmem:[#allocation4 + $0x70] sm:$0xff]
    %v882 = vld [vmem:[#allocation4 + $0x78] sm:$0xff]
    %v883 = vld [vmem:[#allocation4 + $0x80] sm:$0xff]
    %v884 = vld [vmem:[#allocation4 + $0x88] sm:$0xff]
    %v885 = vld [vmem:[#allocation4 + $0x90] sm:$0xff]
    %v886 = vld [vmem:[#allocation4 + $0x98] sm:$0xff]
    %v887 = vld [vmem:[#allocation4 + $0xa0] sm:$0xff]
    %v888 = vld [vmem:[#allocation4 + $0xa8] sm:$0xff]
    %v889 = vld [vmem:[#allocation4 + $0xb0] sm:$0xff]
    %v890 = vld [vmem:[#allocation4 + $0xb8] sm:$0xff]
    %v891 = vld [vmem:[#allocation4 + $0xc0] sm:$0xff]
    %v892 = vld [vmem:[#allocation4 + $0xc8] sm:$0xff]
    %v893 = vld [vmem:[#allocation4 + $0xd0] sm:$0xff]
    %v894 = vld [vmem:[#allocation4 + $0xd8] sm:$0xff]
    %v895 = vld [vmem:[#allocation4 + $0xe0] sm:$0xff]
    %v896 = vld [vmem:[#allocation4 + $0xe8] sm:$0xff]
    %v897 = vld [vmem:[#allocation4 + $0xf0] sm:$0xff]
    %v898 = vld [vmem:[#allocation4 + $0xf8] sm:$0xff]
    %v899 = vld [vmem:[#allocation4 + $0x100] sm:$0xff]
    %v900 = vld [vmem:[#allocation4 + $0x108] sm:$0xff]
    %v901 = vld [vmem:[#allocation4 + $0x110] sm:$0xff]
    %v902 = vld [vmem:[#allocation4 + $0x118] sm:$0xff]
    %v903 = vld [vmem:[#allocation4 + $0x120] sm:$0xff]
    %v904 = vld [vmem:[#allocation4 + $0x128] sm:$0xff]
    %v905 = vld [vmem:[#allocation4 + $0x130] sm:$0xff]
    %v906 = vld [vmem:[#allocation4 + $0x138] sm:$0xff]
    %v907 = vld [vmem:[#allocation4 + $0x140] sm:$0xff]
    %v908 = vld [vmem:[#allocation4 + $0x148] sm:$0xff]
    %v909 = vld [vmem:[#allocation4 + $0x150] sm:$0xff]
    %v910 = vld [vmem:[#allocation4 + $0x158] sm:$0xff]
    %v911 = vld [vmem:[#allocation4 + $0x160] sm:$0xff]
    %v912 = vld [vmem:[#allocation4 + $0x168] sm:$0xff]
    %v913 = vld [vmem:[#allocation4 + $0x170] sm:$0xff]
    %v914 = vld [vmem:[#allocation4 + $0x178] sm:$0xff]
    %v915 = vld [vmem:[#allocation4 + $0x180] sm:$0xff]
    %v916 = vld [vmem:[#allocation4 + $0x188] sm:$0xff]
    %v917 = vld [vmem:[#allocation4 + $0x190] sm:$0xff]
    %v918 = vld [vmem:[#allocation4 + $0x198] sm:$0xff]
    %v919 = vld [vmem:[#allocation4 + $0x1a0] sm:$0xff]
    %v920 = vld [vmem:[#allocation4 + $0x1a8] sm:$0xff]
    %v921 = vld [vmem:[#allocation4 + $0x1b0] sm:$0xff]
    %v922 = vld [vmem:[#allocation4 + $0x1b8] sm:$0xff]
    %v923 = vld [vmem:[#allocation4 + $0x1c0] sm:$0xff]
    %v924 = vld [vmem:[#allocation4 + $0x1c8] sm:$0xff]
    %v925 = vld [vmem:[#allocation4 + $0x1d0] sm:$0xff]
    %v926 = vld [vmem:[#allocation4 + $0x1d8] sm:$0xff]
    %v927 = vld [vmem:[#allocation4 + $0x1e0] sm:$0xff]
    %v928 = vld [vmem:[#allocation4 + $0x1e8] sm:$0xff]
    %v929 = vld [vmem:[#allocation4 + $0x1f0] sm:$0xff]
    %v930 = vld [vmem:[#allocation4 + $0x1f8] sm:$0xff]
    %931 = vmatprep.subr.bf16.mxu0 %v868
    %932 = vmatpush1.bf16.msra.mxu0 %v867
    %933 = vmatprep.subr.bf16.mxu0 %v872
    %934 = vmatpush1.bf16.msra.mxu0 %v871
    %935 = vmatprep.subr.bf16.mxu0 %v876
    %936 = vmatpush1.bf16.msra.mxu0 %v875
    %937 = vmatprep.subr.bf16.mxu0 %v880
    %938 = vmatpush1.bf16.msra.mxu0 %v879
    %939 = vmatprep.subr.bf16.mxu0 %v884
    %940 = vmatpush1.bf16.msra.mxu0 %v883
    %941 = vmatprep.subr.bf16.mxu0 %v888
    %942 = vmatpush1.bf16.msra.mxu0 %v887
    %943 = vmatprep.subr.bf16.mxu0 %v892
    %944 = vmatpush1.bf16.msra.mxu0 %v891
    %945 = vmatprep.subr.bf16.mxu0 %v896
    %946 = vmatpush1.bf16.msra.mxu0 %v895
    %947 = vmatprep.subr.bf16.mxu0 %v900
    %948 = vmatpush1.bf16.msra.mxu0 %v899
    %949 = vmatprep.subr.bf16.mxu0 %v904
    %950 = vmatpush1.bf16.msra.mxu0 %v903
    %951 = vmatprep.subr.bf16.mxu0 %v908
    %952 = vmatpush1.bf16.msra.mxu0 %v907
    %953 = vmatprep.subr.bf16.mxu0 %v912
    %954 = vmatpush1.bf16.msra.mxu0 %v911
    %955 = vmatprep.subr.bf16.mxu0 %v916
    %956 = vmatpush1.bf16.msra.mxu0 %v915
    %957 = vmatprep.subr.bf16.mxu0 %v920
    %958 = vmatpush1.bf16.msra.mxu0 %v919
    %959 = vmatprep.subr.bf16.mxu0 %v924
    %960 = vmatpush1.bf16.msra.mxu0 %v923
    %961 = vmatprep.subr.bf16.mxu0 %v928
    %962 = vmatpush1.bf16.msra.mxu0 %v927
    %963 = vmatprep.mubr.bf16.mxu0 %v866
    %964 = vmatmul.mubr.bf16.gmra.mrb[0].mxu0 %v747
    %v965 = vpop.f32.mrb[0].mxu0
    %v966 = vadd.f32 %v695, %v965
    %v967 = vpop.f32.mrb[0].mxu0
    %v968 = vadd.f32 %v699, %v967
    %v969 = vpop.f32.mrb[0].mxu0
    %v970 = vpop.f32.mrb[0].mxu0
    %971 = vdwg.mxu0
    %972 = vmatprep.subr.bf16.mxu0 %v870
    %973 = vmatpush1.bf16.msra.mxu0 %v869
    %974 = vmatprep.subr.bf16.mxu0 %v874
    %975 = vmatpush1.bf16.msra.mxu0 %v873
    %976 = vmatprep.subr.bf16.mxu0 %v878
    %977 = vmatpush1.bf16.msra.mxu0 %v877
    %978 = vmatprep.subr.bf16.mxu0 %v882
    %979 = vmatpush1.bf16.msra.mxu0 %v881
    %980 = vmatprep.subr.bf16.mxu0 %v886
    %981 = vmatpush1.bf16.msra.mxu0 %v885
    %982 = vmatprep.subr.bf16.mxu0 %v890
    %983 = vmatpush1.bf16.msra.mxu0 %v889
    %984 = vmatprep.subr.bf16.mxu0 %v894
    %985 = vmatpush1.bf16.msra.mxu0 %v893
    %986 = vmatprep.subr.bf16.mxu0 %v898
    %987 = vmatpush1.bf16.msra.mxu0 %v897
    %988 = vmatprep.subr.bf16.mxu0 %v902
    %989 = vmatpush1.bf16.msra.mxu0 %v901
    %990 = vmatprep.subr.bf16.mxu0 %v906
    %991 = vmatpush1.bf16.msra.mxu0 %v905
    %992 = vmatprep.subr.bf16.mxu0 %v910
    %993 = vmatpush1.bf16.msra.mxu0 %v909
    %994 = vmatprep.subr.bf16.mxu0 %v914
    %995 = vmatpush1.bf16.msra.mxu0 %v913
    %996 = vmatprep.subr.bf16.mxu0 %v918
    %997 = vmatpush1.bf16.msra.mxu0 %v917
    %998 = vmatprep.subr.bf16.mxu0 %v922
    %999 = vmatpush1.bf16.msra.mxu0 %v921
    %1000 = vmatprep.subr.bf16.mxu0 %v926
    %1001 = vmatpush1.bf16.msra.mxu0 %v925
    %1002 = vmatprep.subr.bf16.mxu0 %v930
    %1003 = vmatpush1.bf16.msra.mxu0 %v929
    %1004 = vmatprep.mubr.bf16.mxu0 %v866
    %1005 = vmatmul.mubr.bf16.gmra.mrb[0].mxu0 %v747
    %v1006 = vpop.f32.mrb[0].mxu0
    %v1007 = vadd.f32 %v703, %v1006
    %v1008 = vpop.f32.mrb[0].mxu0
    %v1009 = vadd.f32 %v707, %v1008
    %v1010 = vpop.f32.mrb[0].mxu0
    %v1011 = vpop.f32.mrb[0].mxu0
    %1012 = vdwg.mxu0
    %v1013 = vxor.u32 %v966, 2147483648
    %v1014 = vxor.u32 %v968, 2147483648
    %v1015 = vxor.u32 %v1007, 2147483648
    %v1016 = vmul.f32 %v1013, 1.442695
    %v1017 = vpow.pop %v1016
    %v1018 = vmul.f32 %v1014, 1.442695
    %v1019 = vpow.pop %v1018
    %v1020 = vmul.f32 %v1015, 1.442695
    %v1021 = vpow.pop %v1020
    %v1022 = vadd.f32 %v1017, 1.0
    %v1023 = vadd.f32 %v1019, 1.0
    %v1024 = vadd.f32 %v1021, 1.0
    %v1025 = vrcp.pop %v1022
    %v1026 = vmul.f32 1.0, %v1025
    %v1027 = vrcp.pop %v1023
    %v1028 = vmul.f32 1.0, %v1027
    %v1029 = vrcp.pop %v1024
    %v1030 = vmul.f32 1.0, %v1029
    %v1031 = vtanh.pop %v1009
    %v1032 = vmul.f32 %v1028, 0.0
    %v1033 = vmul.f32 %v1026, %v1031
    %v1034 = vadd.f32 %v1032, %v1033
    %v1035 = vtanh.pop %v1034
    %v1036 = vmul.f32 %v1030, %v1035
    %v1037 = vxor.u32 %v862, 2147483648
    %v1038 = vxor.u32 %v863, 2147483648
    %v1039 = vxor.u32 %v864, 2147483648
    %v1040 = vmul.f32 %v1037, 1.442695
    %v1041 = vpow.pop %v1040
    %v1042 = vmul.f32 %v1038, 1.442695
    %v1043 = vpow.pop %v1042
    %v1044 = vmul.f32 %v1039, 1.442695
    %v1045 = vpow.pop %v1044
    %v1046 = vadd.f32 %v1041, 1.0
    %v1047 = vadd.f32 %v1043, 1.0
    %v1048 = vadd.f32 %v1045, 1.0
    %v1049 = vrcp.pop %v1046
    %v1050 = vmul.f32 1.0, %v1049
    %v1051 = vrcp.pop %v1047
    %v1052 = vmul.f32 1.0, %v1051
    %v1053 = vrcp.pop %v1048
    %v1054 = vmul.f32 1.0, %v1053
    %v1055 = vtanh.pop %v865
    %v1056 = vmul.f32 %v1052, %v737
    %v1057 = vmul.f32 %v1050, %v1055
    %v1058 = vadd.f32 %v1056, %v1057
    %v1059 = vtanh.pop %v1058
    %v1060 = vmul.f32 %v1054, %v1059
    %s1061 = smul.u32 2, 4
    %s1062 = smul.addr %s1061, 8
    %s1063 = scalar_lea.vmem [#allocation2], %s1062
    %v1064 = vld [vmem:[%s1063] sm:$0xff]
    %v1065 = vld [vmem:[%s1063 + $0x8] sm:$0xff]
    %v1066 = vld [vmem:[%s1063 + $0x10] sm:$0xff]
    %v1067 = vld [vmem:[%s1063 + $0x18] sm:$0xff]
    %v1068 = vpack.c.bf16 %v1060, %v1060
    %1069 = vmatprep.subr.bf16.mxu0 %v749
    %1070 = vmatpush1.bf16.msra.mxu0 %v748
    %1071 = vmatprep.subr.bf16.mxu0 %v753
    %1072 = vmatpush1.bf16.msra.mxu0 %v752
    %1073 = vmatprep.subr.bf16.mxu0 %v757
    %1074 = vmatpush1.bf16.msra.mxu0 %v756
    %1075 = vmatprep.subr.bf16.mxu0 %v761
    %1076 = vmatpush1.bf16.msra.mxu0 %v760
    %1077 = vmatprep.subr.bf16.mxu0 %v765
    %1078 = vmatpush1.bf16.msra.mxu0 %v764
    %1079 = vmatprep.subr.bf16.mxu0 %v769
    %1080 = vmatpush1.bf16.msra.mxu0 %v768
    %1081 = vmatprep.subr.bf16.mxu0 %v773
    %1082 = vmatpush1.bf16.msra.mxu0 %v772
    %1083 = vmatprep.subr.bf16.mxu0 %v777
    %1084 = vmatpush1.bf16.msra.mxu0 %v776
    %1085 = vmatprep.subr.bf16.mxu0 0
    %1086 = vmatpush1.bf16.msra.mxu0 0
    %1087 = vmatprep.subr.bf16.mxu0 0
    %1088 = vmatpush1.bf16.msra.mxu0 0
    %1089 = vmatprep.subr.bf16.mxu0 0
    %1090 = vmatpush1.bf16.msra.mxu0 0
    %1091 = vmatprep.subr.bf16.mxu0 0
    %1092 = vmatpush1.bf16.msra.mxu0 0
    %1093 = vmatprep.subr.bf16.mxu0 0
    %1094 = vmatpush1.bf16.msra.mxu0 0
    %1095 = vmatprep.subr.bf16.mxu0 0
    %1096 = vmatpush1.bf16.msra.mxu0 0
    %1097 = vmatprep.subr.bf16.mxu0 0
    %1098 = vmatpush1.bf16.msra.mxu0 0
    %1099 = vmatprep.subr.bf16.mxu0 0
    %1100 = vmatpush1.bf16.msra.mxu0 0
    %1101 = vmatprep.mubr.bf16.mxu0 0
    %1102 = vmatmul.mubr.bf16.gmra.mrb[0].mxu0 %v1068
    %v1103 = vpop.f32.mrb[0].mxu0
    %v1104 = vadd.f32 0.0, %v1103
    %v1105 = vpop.f32.mrb[0].mxu0
    %v1106 = vadd.f32 0.0, %v1105
    %v1107 = vpop.f32.mrb[0].mxu0
    %v1108 = vpop.f32.mrb[0].mxu0
    %1109 = vdwg.mxu0
    %1110 = vmatprep.subr.bf16.mxu0 %v751
    %1111 = vmatpush1.bf16.msra.mxu0 %v750
    %1112 = vmatprep.subr.bf16.mxu0 %v755
    %1113 = vmatpush1.bf16.msra.mxu0 %v754
    %1114 = vmatprep.subr.bf16.mxu0 %v759
    %1115 = vmatpush1.bf16.msra.mxu0 %v758
    %1116 = vmatprep.subr.bf16.mxu0 %v763
    %1117 = vmatpush1.bf16.msra.mxu0 %v762
    %1118 = vmatprep.subr.bf16.mxu0 %v767
    %1119 = vmatpush1.bf16.msra.mxu0 %v766
    %1120 = vmatprep.subr.bf16.mxu0 %v771
    %1121 = vmatpush1.bf16.msra.mxu0 %v770
    %1122 = vmatprep.subr.bf16.mxu0 %v775
    %1123 = vmatpush1.bf16.msra.mxu0 %v774
    %1124 = vmatprep.subr.bf16.mxu0 %v779
    %1125 = vmatpush1.bf16.msra.mxu0 %v778
    %1126 = vmatprep.subr.bf16.mxu0 0
    %1127 = vmatpush1.bf16.msra.mxu0 0
    %1128 = vmatprep.subr.bf16.mxu0 0
    %1129 = vmatpush1.bf16.msra.mxu0 0
    %1130 = vmatprep.subr.bf16.mxu0 0
    %1131 = vmatpush1.bf16.msra.mxu0 0
    %1132 = vmatprep.subr.bf16.mxu0 0
    %1133 = vmatpush1.bf16.msra.mxu0 0
    %1134 = vmatprep.subr.bf16.mxu0 0
    %1135 = vmatpush1.bf16.msra.mxu0 0
    %1136 = vmatprep.subr.bf16.mxu0 0
    %1137 = vmatpush1.bf16.msra.mxu0 0
    %1138 = vmatprep.subr.bf16.mxu0 0
    %1139 = vmatpush1.bf16.msra.mxu0 0
    %1140 = vmatprep.subr.bf16.mxu0 0
    %1141 = vmatpush1.bf16.msra.mxu0 0
    %1142 = vmatprep.mubr.bf16.mxu0 0
    %1143 = vmatmul.mubr.bf16.gmra.mrb[0].mxu0 %v1068
    %v1144 = vpop.f32.mrb[0].mxu0
    %v1145 = vadd.f32 0.0, %v1144
    %v1146 = vpop.f32.mrb[0].mxu0
    %v1147 = vadd.f32 0.0, %v1146
    %v1148 = vpop.f32.mrb[0].mxu0
    %v1149 = vpop.f32.mrb[0].mxu0
    %1150 = vdwg.mxu0
    %v1151 = vadd.f32 %v1064, %v1104
    %v1152 = vadd.f32 %v1065, %v1106
    %v1153 = vadd.f32 %v1066, %v1145
    %v1154 = vadd.f32 %v1067, %v1147
    %v1155 = vpack.c.bf16 %v1036, %v1036
    %1156 = vmatprep.subr.bf16.mxu0 %v868
    %1157 = vmatpush1.bf16.msra.mxu0 %v867
    %1158 = vmatprep.subr.bf16.mxu0 %v872
    %1159 = vmatpush1.bf16.msra.mxu0 %v871
    %1160 = vmatprep.subr.bf16.mxu0 %v876
    %1161 = vmatpush1.bf16.msra.mxu0 %v875
    %1162 = vmatprep.subr.bf16.mxu0 %v880
    %1163 = vmatpush1.bf16.msra.mxu0 %v879
    %1164 = vmatprep.subr.bf16.mxu0 %v884
    %1165 = vmatpush1.bf16.msra.mxu0 %v883
    %1166 = vmatprep.subr.bf16.mxu0 %v888
    %1167 = vmatpush1.bf16.msra.mxu0 %v887
    %1168 = vmatprep.subr.bf16.mxu0 %v892
    %1169 = vmatpush1.bf16.msra.mxu0 %v891
    %1170 = vmatprep.subr.bf16.mxu0 %v896
    %1171 = vmatpush1.bf16.msra.mxu0 %v895
    %1172 = vmatprep.subr.bf16.mxu0 %v900
    %1173 = vmatpush1.bf16.msra.mxu0 %v899
    %1174 = vmatprep.subr.bf16.mxu0 %v904
    %1175 = vmatpush1.bf16.msra.mxu0 %v903
    %1176 = vmatprep.subr.bf16.mxu0 %v908
    %1177 = vmatpush1.bf16.msra.mxu0 %v907
    %1178 = vmatprep.subr.bf16.mxu0 %v912
    %1179 = vmatpush1.bf16.msra.mxu0 %v911
    %1180 = vmatprep.subr.bf16.mxu0 %v916
    %1181 = vmatpush1.bf16.msra.mxu0 %v915
    %1182 = vmatprep.subr.bf16.mxu0 %v920
    %1183 = vmatpush1.bf16.msra.mxu0 %v919
    %1184 = vmatprep.subr.bf16.mxu0 %v924
    %1185 = vmatpush1.bf16.msra.mxu0 %v923
    %1186 = vmatprep.subr.bf16.mxu0 %v928
    %1187 = vmatpush1.bf16.msra.mxu0 %v927
    %1188 = vmatprep.mubr.bf16.mxu0 %v1155
    %1189 = vmatmul.mubr.bf16.gmra.mrb[0].mxu0 %v1068
    %v1190 = vpop.f32.mrb[0].mxu0
    %v1191 = vadd.f32 %v695, %v1190
    %v1192 = vpop.f32.mrb[0].mxu0
    %v1193 = vadd.f32 %v699, %v1192
    %v1194 = vpop.f32.mrb[0].mxu0
    %v1195 = vpop.f32.mrb[0].mxu0
    %1196 = vdwg.mxu0
    %1197 = vmatprep.subr.bf16.mxu0 %v870
    %1198 = vmatpush1.bf16.msra.mxu0 %v869
    %1199 = vmatprep.subr.bf16.mxu0 %v874
    %1200 = vmatpush1.bf16.msra.mxu0 %v873
    %1201 = vmatprep.subr.bf16.mxu0 %v878
    %1202 = vmatpush1.bf16.msra.mxu0 %v877
    %1203 = vmatprep.subr.bf16.mxu0 %v882
    %1204 = vmatpush1.bf16.msra.mxu0 %v881
    %1205 = vmatprep.subr.bf16.mxu0 %v886
    %1206 = vmatpush1.bf16.msra.mxu0 %v885
    %1207 = vmatprep.subr.bf16.mxu0 %v890
    %1208 = vmatpush1.bf16.msra.mxu0 %v889
    %1209 = vmatprep.subr.bf16.mxu0 %v894
    %1210 = vmatpush1.bf16.msra.mxu0 %v893
    %1211 = vmatprep.subr.bf16.mxu0 %v898
    %1212 = vmatpush1.bf16.msra.mxu0 %v897
    %1213 = vmatprep.subr.bf16.mxu0 %v902
    %1214 = vmatpush1.bf16.msra.mxu0 %v901
    %1215 = vmatprep.subr.bf16.mxu0 %v906
    %1216 = vmatpush1.bf16.msra.mxu0 %v905
    %1217 = vmatprep.subr.bf16.mxu0 %v910
    %1218 = vmatpush1.bf16.msra.mxu0 %v909
    %1219 = vmatprep.subr.bf16.mxu0 %v914
    %1220 = vmatpush1.bf16.msra.mxu0 %v913
    %1221 = vmatprep.subr.bf16.mxu0 %v918
    %1222 = vmatpush1.bf16.msra.mxu0 %v917
    %1223 = vmatprep.subr.bf16.mxu0 %v922
    %1224 = vmatpush1.bf16.msra.mxu0 %v921
    %1225 = vmatprep.subr.bf16.mxu0 %v926
    %1226 = vmatpush1.bf16.msra.mxu0 %v925
    %1227 = vmatprep.subr.bf16.mxu0 %v930
    %1228 = vmatpush1.bf16.msra.mxu0 %v929
    %1229 = vmatprep.mubr.bf16.mxu0 %v1155
    %1230 = vmatmul.mubr.bf16.gmra.mrb[0].mxu0 %v1068
    %v1231 = vpop.f32.mrb[0].mxu0
    %v1232 = vadd.f32 %v703, %v1231
    %v1233 = vpop.f32.mrb[0].mxu0
    %v1234 = vadd.f32 %v707, %v1233
    %v1235 = vpop.f32.mrb[0].mxu0
    %v1236 = vpop.f32.mrb[0].mxu0
    %1237 = vdwg.mxu0
    %v1238 = vxor.u32 %v1191, 2147483648
    %v1239 = vxor.u32 %v1193, 2147483648
    %v1240 = vxor.u32 %v1232, 2147483648
    %v1241 = vmul.f32 %v1238, 1.442695
    %v1242 = vpow.pop %v1241
    %v1243 = vmul.f32 %v1239, 1.442695
    %v1244 = vpow.pop %v1243
    %v1245 = vmul.f32 %v1240, 1.442695
    %v1246 = vpow.pop %v1245
    %v1247 = vadd.f32 %v1242, 1.0
    %v1248 = vadd.f32 %v1244, 1.0
    %v1249 = vadd.f32 %v1246, 1.0
    %v1250 = vrcp.pop %v1247
    %v1251 = vmul.f32 1.0, %v1250
    %v1252 = vrcp.pop %v1248
    %v1253 = vmul.f32 1.0, %v1252
    %v1254 = vrcp.pop %v1249
    %v1255 = vmul.f32 1.0, %v1254
    %v1256 = vtanh.pop %v1234
    %v1257 = vmul.f32 %v1253, %v1034
    %v1258 = vmul.f32 %v1251, %v1256
    %v1259 = vadd.f32 %v1257, %v1258
    %v1260 = vtanh.pop %v1259
    %v1261 = vmul.f32 %v1255, %v1260
    %v1262 = vxor.u32 %v1151, 2147483648
    %v1263 = vxor.u32 %v1152, 2147483648
    %v1264 = vxor.u32 %v1153, 2147483648
    %v1265 = vmul.f32 %v1262, 1.442695
    %v1266 = vpow.pop %v1265
    %v1267 = vmul.f32 %v1263, 1.442695
    %v1268 = vpow.pop %v1267
    %v1269 = vmul.f32 %v1264, 1.442695
    %v1270 = vpow.pop %v1269
    %v1271 = vadd.f32 %v1266, 1.0
    %v1272 = vadd.f32 %v1268, 1.0
    %v1273 = vadd.f32 %v1270, 1.0
    %v1274 = vrcp.pop %v1271
    %v1275 = vmul.f32 1.0, %v1274
    %v1276 = vrcp.pop %v1272
    %v1277 = vmul.f32 1.0, %v1276
    %v1278 = vrcp.pop %v1273
    %v1279 = vmul.f32 1.0, %v1278
    %v1280 = vtanh.pop %v1154
    %v1281 = vmul.f32 %v1277, %v1058
    %v1282 = vmul.f32 %v1275, %v1280
    %v1283 = vadd.f32 %v1281, %v1282
    %v1284 = vtanh.pop %v1283
    %v1285 = vmul.f32 %v1279, %v1284
    %s1286 = smul.u32 3, 4
    %s1287 = smul.addr %s1286, 8
    %s1288 = scalar_lea.vmem [#allocation2], %s1287
    %v1289 = vld [vmem:[%s1288] sm:$0xff]
    %v1290 = vld [vmem:[%s1288 + $0x8] sm:$0xff]
    %v1291 = vld [vmem:[%s1288 + $0x10] sm:$0xff]
    %v1292 = vld [vmem:[%s1288 + $0x18] sm:$0xff]
    %v1293 = vpack.c.bf16 %v1285, %v1285
    %1294 = vmatprep.subr.bf16.mxu0 %v749
    %1295 = vmatpush1.bf16.msra.mxu0 %v748
    %1296 = vmatprep.subr.bf16.mxu0 %v753
    %1297 = vmatpush1.bf16.msra.mxu0 %v752
    %1298 = vmatprep.subr.bf16.mxu0 %v757
    %1299 = vmatpush1.bf16.msra.mxu0 %v756
    %1300 = vmatprep.subr.bf16.mxu0 %v761
    %1301 = vmatpush1.bf16.msra.mxu0 %v760
    %1302 = vmatprep.subr.bf16.mxu0 %v765
    %1303 = vmatpush1.bf16.msra.mxu0 %v764
    %1304 = vmatprep.subr.bf16.mxu0 %v769
    %1305 = vmatpush1.bf16.msra.mxu0 %v768
    %1306 = vmatprep.subr.bf16.mxu0 %v773
    %1307 = vmatpush1.bf16.msra.mxu0 %v772
    %1308 = vmatprep.subr.bf16.mxu0 %v777
    %1309 = vmatpush1.bf16.msra.mxu0 %v776
    %1310 = vmatprep.subr.bf16.mxu0 0
    %1311 = vmatpush1.bf16.msra.mxu0 0
    %1312 = vmatprep.subr.bf16.mxu0 0
    %1313 = vmatpush1.bf16.msra.mxu0 0
    %1314 = vmatprep.subr.bf16.mxu0 0
    %1315 = vmatpush1.bf16.msra.mxu0 0
    %1316 = vmatprep.subr.bf16.mxu0 0
    %1317 = vmatpush1.bf16.msra.mxu0 0
    %1318 = vmatprep.subr.bf16.mxu0 0
    %1319 = vmatpush1.bf16.msra.mxu0 0
    %1320 = vmatprep.subr.bf16.mxu0 0
    %1321 = vmatpush1.bf16.msra.mxu0 0
    %1322 = vmatprep.subr.bf16.mxu0 0
    %1323 = vmatpush1.bf16.msra.mxu0 0
    %1324 = vmatprep.subr.bf16.mxu0 0
    %1325 = vmatpush1.bf16.msra.mxu0 0
    %1326 = vmatprep.mubr.bf16.mxu0 0
    %1327 = vmatmul.mubr.bf16.gmra.mrb[0].mxu0 %v1293
    %v1328 = vpop.f32.mrb[0].mxu0
    %v1329 = vadd.f32 0.0, %v1328
    %v1330 = vpop.f32.mrb[0].mxu0
    %v1331 = vadd.f32 0.0, %v1330
    %v1332 = vpop.f32.mrb[0].mxu0
    %v1333 = vpop.f32.mrb[0].mxu0
    %1334 = vdwg.mxu0
    %1335 = vmatprep.subr.bf16.mxu0 %v751
    %1336 = vmatpush1.bf16.msra.mxu0 %v750
    %1337 = vmatprep.subr.bf16.mxu0 %v755
    %1338 = vmatpush1.bf16.msra.mxu0 %v754
    %1339 = vmatprep.subr.bf16.mxu0 %v759
    %1340 = vmatpush1.bf16.msra.mxu0 %v758
    %1341 = vmatprep.subr.bf16.mxu0 %v763
    %1342 = vmatpush1.bf16.msra.mxu0 %v762
    %1343 = vmatprep.subr.bf16.mxu0 %v767
    %1344 = vmatpush1.bf16.msra.mxu0 %v766
    %1345 = vmatprep.subr.bf16.mxu0 %v771
    %1346 = vmatpush1.bf16.msra.mxu0 %v770
    %1347 = vmatprep.subr.bf16.mxu0 %v775
    %1348 = vmatpush1.bf16.msra.mxu0 %v774
    %1349 = vmatprep.subr.bf16.mxu0 %v779
    %1350 = vmatpush1.bf16.msra.mxu0 %v778
    %1351 = vmatprep.subr.bf16.mxu0 0
    %1352 = vmatpush1.bf16.msra.mxu0 0
    %1353 = vmatprep.subr.bf16.mxu0 0
    %1354 = vmatpush1.bf16.msra.mxu0 0
    %1355 = vmatprep.subr.bf16.mxu0 0
    %1356 = vmatpush1.bf16.msra.mxu0 0
    %1357 = vmatprep.subr.bf16.mxu0 0
    %1358 = vmatpush1.bf16.msra.mxu0 0
    %1359 = vmatprep.subr.bf16.mxu0 0
    %1360 = vmatpush1.bf16.msra.mxu0 0
    %1361 = vmatprep.subr.bf16.mxu0 0
    %1362 = vmatpush1.bf16.msra.mxu0 0
    %1363 = vmatprep.subr.bf16.mxu0 0
    %1364 = vmatpush1.bf16.msra.mxu0 0
    %1365 = vmatprep.subr.bf16.mxu0 0
    %1366 = vmatpush1.bf16.msra.mxu0 0
    %1367 = vmatprep.mubr.bf16.mxu0 0
    %1368 = vmatmul.mubr.bf16.gmra.mrb[0].mxu0 %v1293
    %v1369 = vpop.f32.mrb[0].mxu0
    %v1370 = vadd.f32 0.0, %v1369
    %v1371 = vpop.f32.mrb[0].mxu0
    %v1372 = vadd.f32 0.0, %v1371
    %v1373 = vpop.f32.mrb[0].mxu0
    %v1374 = vpop.f32.mrb[0].mxu0
    %1375 = vdwg.mxu0
    %v1376 = vadd.f32 %v1289, %v1329
    %v1377 = vadd.f32 %v1290, %v1331
    %v1378 = vadd.f32 %v1291, %v1370
    %v1379 = vadd.f32 %v1292, %v1372
    %v1380 = vpack.c.bf16 %v1261, %v1261
    %1381 = vmatprep.subr.bf16.mxu0 %v868
    %1382 = vmatpush1.bf16.msra.mxu0 %v867
    %1383 = vmatprep.subr.bf16.mxu0 %v872
    %1384 = vmatpush1.bf16.msra.mxu0 %v871
    %1385 = vmatprep.subr.bf16.mxu0 %v876
    %1386 = vmatpush1.bf16.msra.mxu0 %v875
    %1387 = vmatprep.subr.bf16.mxu0 %v880
    %1388 = vmatpush1.bf16.msra.mxu0 %v879
    %1389 = vmatprep.subr.bf16.mxu0 %v884
    %1390 = vmatpush1.bf16.msra.mxu0 %v883
    %1391 = vmatprep.subr.bf16.mxu0 %v888
    %1392 = vmatpush1.bf16.msra.mxu0 %v887
    %1393 = vmatprep.subr.bf16.mxu0 %v892
    %1394 = vmatpush1.bf16.msra.mxu0 %v891
    %1395 = vmatprep.subr.bf16.mxu0 %v896
    %1396 = vmatpush1.bf16.msra.mxu0 %v895
    %1397 = vmatprep.subr.bf16.mxu0 %v900
    %1398 = vmatpush1.bf16.msra.mxu0 %v899
    %1399 = vmatprep.subr.bf16.mxu0 %v904
    %1400 = vmatpush1.bf16.msra.mxu0 %v903
    %1401 = vmatprep.subr.bf16.mxu0 %v908
    %1402 = vmatpush1.bf16.msra.mxu0 %v907
    %1403 = vmatprep.subr.bf16.mxu0 %v912
    %1404 = vmatpush1.bf16.msra.mxu0 %v911
    %1405 = vmatprep.subr.bf16.mxu0 %v916
    %1406 = vmatpush1.bf16.msra.mxu0 %v915
    %1407 = vmatprep.subr.bf16.mxu0 %v920
    %1408 = vmatpush1.bf16.msra.mxu0 %v919
    %1409 = vmatprep.subr.bf16.mxu0 %v924
    %1410 = vmatpush1.bf16.msra.mxu0 %v923
    %1411 = vmatprep.subr.bf16.mxu0 %v928
    %1412 = vmatpush1.bf16.msra.mxu0 %v927
    %1413 = vmatprep.mubr.bf16.mxu0 %v1380
    %1414 = vmatmul.mubr.bf16.gmra.mrb[0].mxu0 %v1293
    %v1415 = vpop.f32.mrb[0].mxu0
    %v1416 = vadd.f32 %v695, %v1415
    %v1417 = vpop.f32.mrb[0].mxu0
    %v1418 = vadd.f32 %v699, %v1417
    %v1419 = vpop.f32.mrb[0].mxu0
    %v1420 = vpop.f32.mrb[0].mxu0
    %1421 = vdwg.mxu0
    %1422 = vmatprep.subr.bf16.mxu0 %v870
    %1423 = vmatpush1.bf16.msra.mxu0 %v869
    %1424 = vmatprep.subr.bf16.mxu0 %v874
    %1425 = vmatpush1.bf16.msra.mxu0 %v873
    %1426 = vmatprep.subr.bf16.mxu0 %v878
    %1427 = vmatpush1.bf16.msra.mxu0 %v877
    %1428 = vmatprep.subr.bf16.mxu0 %v882
    %1429 = vmatpush1.bf16.msra.mxu0 %v881
    %1430 = vmatprep.subr.bf16.mxu0 %v886
    %1431 = vmatpush1.bf16.msra.mxu0 %v885
    %1432 = vmatprep.subr.bf16.mxu0 %v890
    %1433 = vmatpush1.bf16.msra.mxu0 %v889
    %1434 = vmatprep.subr.bf16.mxu0 %v894
    %1435 = vmatpush1.bf16.msra.mxu0 %v893
    %1436 = vmatprep.subr.bf16.mxu0 %v898
    %1437 = vmatpush1.bf16.msra.mxu0 %v897
    %1438 = vmatprep.subr.bf16.mxu0 %v902
    %1439 = vmatpush1.bf16.msra.mxu0 %v901
    %1440 = vmatprep.subr.bf16.mxu0 %v906
    %1441 = vmatpush1.bf16.msra.mxu0 %v905
    %1442 = vmatprep.subr.bf16.mxu0 %v910
    %1443 = vmatpush1.bf16.msra.mxu0 %v909
    %1444 = vmatprep.subr.bf16.mxu0 %v914
    %1445 = vmatpush1.bf16.msra.mxu0 %v913
    %1446 = vmatprep.subr.bf16.mxu0 %v918
    %1447 = vmatpush1.bf16.msra.mxu0 %v917
    %1448 = vmatprep.subr.bf16.mxu0 %v922
    %1449 = vmatpush1.bf16.msra.mxu0 %v921
    %1450 = vmatprep.subr.bf16.mxu0 %v926
    %1451 = vmatpush1.bf16.msra.mxu0 %v925
    %1452 = vmatprep.subr.bf16.mxu0 %v930
    %1453 = vmatpush1.bf16.msra.mxu0 %v929
    %1454 = vmatprep.mubr.bf16.mxu0 %v1380
    %1455 = vmatmul.mubr.bf16.gmra.mrb[0].mxu0 %v1293
    %v1456 = vpop.f32.mrb[0].mxu0
    %v1457 = vadd.f32 %v703, %v1456
    %v1458 = vpop.f32.mrb[0].mxu0
    %v1459 = vadd.f32 %v707, %v1458
    %v1460 = vpop.f32.mrb[0].mxu0
    %v1461 = vpop.f32.mrb[0].mxu0
    %1462 = vdwg.mxu0
    %v1463 = vxor.u32 %v1416, 2147483648
    %v1464 = vxor.u32 %v1418, 2147483648
    %v1465 = vxor.u32 %v1457, 2147483648
    %v1466 = vmul.f32 %v1463, 1.442695
    %v1467 = vpow.pop %v1466
    %v1468 = vmul.f32 %v1464, 1.442695
    %v1469 = vpow.pop %v1468
    %v1470 = vmul.f32 %v1465, 1.442695
    %v1471 = vpow.pop %v1470
    %v1472 = vadd.f32 %v1467, 1.0
    %v1473 = vadd.f32 %v1469, 1.0
    %v1474 = vadd.f32 %v1471, 1.0
    %v1475 = vrcp.pop %v1472
    %v1476 = vmul.f32 1.0, %v1475
    %v1477 = vrcp.pop %v1473
    %v1478 = vmul.f32 1.0, %v1477
    %v1479 = vrcp.pop %v1474
    %v1480 = vmul.f32 1.0, %v1479
    %v1481 = vtanh.pop %v1459
    %v1482 = vmul.f32 %v1478, %v1259
    %v1483 = vmul.f32 %v1476, %v1481
    %v1484 = vadd.f32 %v1482, %v1483
    %v1485 = vtanh.pop %v1484
    %v1486 = vmul.f32 %v1480, %v1485
    %v1487 = vxor.u32 %v1376, 2147483648
    %v1488 = vxor.u32 %v1377, 2147483648
    %v1489 = vxor.u32 %v1378, 2147483648
    %v1490 = vmul.f32 %v1487, 1.442695
    %v1491 = vpow.pop %v1490
    %v1492 = vmul.f32 %v1488, 1.442695
    %v1493 = vpow.pop %v1492
    %v1494 = vmul.f32 %v1489, 1.442695
    %v1495 = vpow.pop %v1494
    %v1496 = vadd.f32 %v1491, 1.0
    %v1497 = vadd.f32 %v1493, 1.0
    %v1498 = vadd.f32 %v1495, 1.0
    %v1499 = vrcp.pop %v1496
    %v1500 = vmul.f32 1.0, %v1499
    %v1501 = vrcp.pop %v1497
    %v1502 = vmul.f32 1.0, %v1501
    %v1503 = vrcp.pop %v1498
    %v1504 = vmul.f32 1.0, %v1503
    %v1505 = vtanh.pop %v1379
    %v1506 = vmul.f32 %v1502, %v1283
    %v1507 = vmul.f32 %v1500, %v1505
    %v1508 = vadd.f32 %v1506, %v1507
    %v1509 = vtanh.pop %v1508
    %v1510 = vmul.f32 %v1504, %v1509
    %s1511 = smul.u32 4, 4
    %s1512 = smul.addr %s1511, 8
    %s1513 = scalar_lea.vmem [#allocation2], %s1512
    %v1514 = vld [vmem:[%s1513] sm:$0xff]
    %v1515 = vld [vmem:[%s1513 + $0x8] sm:$0xff]
    %v1516 = vld [vmem:[%s1513 + $0x10] sm:$0xff]
    %v1517 = vld [vmem:[%s1513 + $0x18] sm:$0xff]
    %v1518 = vpack.c.bf16 %v1510, %v1510
    %1519 = vmatprep.subr.bf16.mxu0 %v749
    %1520 = vmatpush1.bf16.msra.mxu0 %v748
    %1521 = vmatprep.subr.bf16.mxu0 %v753
    %1522 = vmatpush1.bf16.msra.mxu0 %v752
    %1523 = vmatprep.subr.bf16.mxu0 %v757
    %1524 = vmatpush1.bf16.msra.mxu0 %v756
    %1525 = vmatprep.subr.bf16.mxu0 %v761
    %1526 = vmatpush1.bf16.msra.mxu0 %v760
    %1527 = vmatprep.subr.bf16.mxu0 %v765
    %1528 = vmatpush1.bf16.msra.mxu0 %v764
    %1529 = vmatprep.subr.bf16.mxu0 %v769
    %1530 = vmatpush1.bf16.msra.mxu0 %v768
    %1531 = vmatprep.subr.bf16.mxu0 %v773
    %1532 = vmatpush1.bf16.msra.mxu0 %v772
    %1533 = vmatprep.subr.bf16.mxu0 %v777
    %1534 = vmatpush1.bf16.msra.mxu0 %v776
    %1535 = vmatprep.subr.bf16.mxu0 0
    %1536 = vmatpush1.bf16.msra.mxu0 0
    %1537 = vmatprep.subr.bf16.mxu0 0
    %1538 = vmatpush1.bf16.msra.mxu0 0
    %1539 = vmatprep.subr.bf16.mxu0 0
    %1540 = vmatpush1.bf16.msra.mxu0 0
    %1541 = vmatprep.subr.bf16.mxu0 0
    %1542 = vmatpush1.bf16.msra.mxu0 0
    %1543 = vmatprep.subr.bf16.mxu0 0
    %1544 = vmatpush1.bf16.msra.mxu0 0
    %1545 = vmatprep.subr.bf16.mxu0 0
    %1546 = vmatpush1.bf16.msra.mxu0 0
    %1547 = vmatprep.subr.bf16.mxu0 0
    %1548 = vmatpush1.bf16.msra.mxu0 0
    %1549 = vmatprep.subr.bf16.mxu0 0
    %1550 = vmatpush1.bf16.msra.mxu0 0
    %1551 = vmatprep.mubr.bf16.mxu0 0
    %1552 = vmatmul.mubr.bf16.gmra.mrb[0].mxu0 %v1518
    %v1553 = vpop.f32.mrb[0].mxu0
    %v1554 = vadd.f32 0.0, %v1553
    %v1555 = vpop.f32.mrb[0].mxu0
    %v1556 = vadd.f32 0.0, %v1555
    %v1557 = vpop.f32.mrb[0].mxu0
    %v1558 = vpop.f32.mrb[0].mxu0
    %1559 = vdwg.mxu0
    %1560 = vmatprep.subr.bf16.mxu0 %v751
    %1561 = vmatpush1.bf16.msra.mxu0 %v750
    %1562 = vmatprep.subr.bf16.mxu0 %v755
    %1563 = vmatpush1.bf16.msra.mxu0 %v754
    %1564 = vmatprep.subr.bf16.mxu0 %v759
    %1565 = vmatpush1.bf16.msra.mxu0 %v758
    %1566 = vmatprep.subr.bf16.mxu0 %v763
    %1567 = vmatpush1.bf16.msra.mxu0 %v762
    %1568 = vmatprep.subr.bf16.mxu0 %v767
    %1569 = vmatpush1.bf16.msra.mxu0 %v766
    %1570 = vmatprep.subr.bf16.mxu0 %v771
    %1571 = vmatpush1.bf16.msra.mxu0 %v770
    %1572 = vmatprep.subr.bf16.mxu0 %v775
    %1573 = vmatpush1.bf16.msra.mxu0 %v774
    %1574 = vmatprep.subr.bf16.mxu0 %v779
    %1575 = vmatpush1.bf16.msra.mxu0 %v778
    %1576 = vmatprep.subr.bf16.mxu0 0
    %1577 = vmatpush1.bf16.msra.mxu0 0
    %1578 = vmatprep.subr.bf16.mxu0 0
    %1579 = vmatpush1.bf16.msra.mxu0 0
    %1580 = vmatprep.subr.bf16.mxu0 0
    %1581 = vmatpush1.bf16.msra.mxu0 0
    %1582 = vmatprep.subr.bf16.mxu0 0
    %1583 = vmatpush1.bf16.msra.mxu0 0
    %1584 = vmatprep.subr.bf16.mxu0 0
    %1585 = vmatpush1.bf16.msra.mxu0 0
    %1586 = vmatprep.subr.bf16.mxu0 0
    %1587 = vmatpush1.bf16.msra.mxu0 0
    %1588 = vmatprep.subr.bf16.mxu0 0
    %1589 = vmatpush1.bf16.msra.mxu0 0
    %1590 = vmatprep.subr.bf16.mxu0 0
    %1591 = vmatpush1.bf16.msra.mxu0 0
    %1592 = vmatprep.mubr.bf16.mxu0 0
    %1593 = vmatmul.mubr.bf16.gmra.mrb[0].mxu0 %v1518
    %v1594 = vpop.f32.mrb[0].mxu0
    %v1595 = vadd.f32 0.0, %v1594
    %v1596 = vpop.f32.mrb[0].mxu0
    %v1597 = vadd.f32 0.0, %v1596
    %v1598 = vpop.f32.mrb[0].mxu0
    %v1599 = vpop.f32.mrb[0].mxu0
    %1600 = vdwg.mxu0
    %v1601 = vadd.f32 %v1514, %v1554
    %v1602 = vadd.f32 %v1515, %v1556
    %v1603 = vadd.f32 %v1516, %v1595
    %v1604 = vadd.f32 %v1517, %v1597
    %v1605 = vpack.c.bf16 %v1486, %v1486
    %1606 = vmatprep.subr.bf16.mxu0 %v868
    %1607 = vmatpush1.bf16.msra.mxu0 %v867
    %1608 = vmatprep.subr.bf16.mxu0 %v872
    %1609 = vmatpush1.bf16.msra.mxu0 %v871
    %1610 = vmatprep.subr.bf16.mxu0 %v876
    %1611 = vmatpush1.bf16.msra.mxu0 %v875
    %1612 = vmatprep.subr.bf16.mxu0 %v880
    %1613 = vmatpush1.bf16.msra.mxu0 %v879
    %1614 = vmatprep.subr.bf16.mxu0 %v884
    %1615 = vmatpush1.bf16.msra.mxu0 %v883
    %1616 = vmatprep.subr.bf16.mxu0 %v888
    %1617 = vmatpush1.bf16.msra.mxu0 %v887
    %1618 = vmatprep.subr.bf16.mxu0 %v892
    %1619 = vmatpush1.bf16.msra.mxu0 %v891
    %1620 = vmatprep.subr.bf16.mxu0 %v896
    %1621 = vmatpush1.bf16.msra.mxu0 %v895
    %1622 = vmatprep.subr.bf16.mxu0 %v900
    %1623 = vmatpush1.bf16.msra.mxu0 %v899
    %1624 = vmatprep.subr.bf16.mxu0 %v904
    %1625 = vmatpush1.bf16.msra.mxu0 %v903
    %1626 = vmatprep.subr.bf16.mxu0 %v908
    %1627 = vmatpush1.bf16.msra.mxu0 %v907
    %1628 = vmatprep.subr.bf16.mxu0 %v912
    %1629 = vmatpush1.bf16.msra.mxu0 %v911
    %1630 = vmatprep.subr.bf16.mxu0 %v916
    %1631 = vmatpush1.bf16.msra.mxu0 %v915
    %1632 = vmatprep.subr.bf16.mxu0 %v920
    %1633 = vmatpush1.bf16.msra.mxu0 %v919
    %1634 = vmatprep.subr.bf16.mxu0 %v924
    %1635 = vmatpush1.bf16.msra.mxu0 %v923
    %1636 = vmatprep.subr.bf16.mxu0 %v928
    %1637 = vmatpush1.bf16.msra.mxu0 %v927
    %1638 = vmatprep.mubr.bf16.mxu0 %v1605
    %1639 = vmatmul.mubr.bf16.gmra.mrb[0].mxu0 %v1518
    %v1640 = vpop.f32.mrb[0].mxu0
    %v1641 = vadd.f32 %v695, %v1640
    %v1642 = vpop.f32.mrb[0].mxu0
    %v1643 = vadd.f32 %v699, %v1642
    %v1644 = vpop.f32.mrb[0].mxu0
    %v1645 = vpop.f32.mrb[0].mxu0
    %1646 = vdwg.mxu0
    %1647 = vmatprep.subr.bf16.mxu0 %v870
    %1648 = vmatpush1.bf16.msra.mxu0 %v869
    %1649 = vmatprep.subr.bf16.mxu0 %v874
    %1650 = vmatpush1.bf16.msra.mxu0 %v873
    %1651 = vmatprep.subr.bf16.mxu0 %v878
    %1652 = vmatpush1.bf16.msra.mxu0 %v877
    %1653 = vmatprep.subr.bf16.mxu0 %v882
    %1654 = vmatpush1.bf16.msra.mxu0 %v881
    %1655 = vmatprep.subr.bf16.mxu0 %v886
    %1656 = vmatpush1.bf16.msra.mxu0 %v885
    %1657 = vmatprep.subr.bf16.mxu0 %v890
    %1658 = vmatpush1.bf16.msra.mxu0 %v889
    %1659 = vmatprep.subr.bf16.mxu0 %v894
    %1660 = vmatpush1.bf16.msra.mxu0 %v893
    %1661 = vmatprep.subr.bf16.mxu0 %v898
    %1662 = vmatpush1.bf16.msra.mxu0 %v897
    %1663 = vmatprep.subr.bf16.mxu0 %v902
    %1664 = vmatpush1.bf16.msra.mxu0 %v901
    %1665 = vmatprep.subr.bf16.mxu0 %v906
    %1666 = vmatpush1.bf16.msra.mxu0 %v905
    %1667 = vmatprep.subr.bf16.mxu0 %v910
    %1668 = vmatpush1.bf16.msra.mxu0 %v909
    %1669 = vmatprep.subr.bf16.mxu0 %v914
    %1670 = vmatpush1.bf16.msra.mxu0 %v913
    %1671 = vmatprep.subr.bf16.mxu0 %v918
    %1672 = vmatpush1.bf16.msra.mxu0 %v917
    %1673 = vmatprep.subr.bf16.mxu0 %v922
    %1674 = vmatpush1.bf16.msra.mxu0 %v921
    %1675 = vmatprep.subr.bf16.mxu0 %v926
    %1676 = vmatpush1.bf16.msra.mxu0 %v925
    %1677 = vmatprep.subr.bf16.mxu0 %v930
    %1678 = vmatpush1.bf16.msra.mxu0 %v929
    %1679 = vmatprep.mubr.bf16.mxu0 %v1605
    %1680 = vmatmul.mubr.bf16.gmra.mrb[0].mxu0 %v1518
    %v1681 = vpop.f32.mrb[0].mxu0
    %v1682 = vadd.f32 %v703, %v1681
    %v1683 = vpop.f32.mrb[0].mxu0
    %v1684 = vadd.f32 %v707, %v1683
    %v1685 = vpop.f32.mrb[0].mxu0
    %v1686 = vpop.f32.mrb[0].mxu0
    %1687 = vdwg.mxu0
    %v1688 = vxor.u32 %v1641, 2147483648
    %v1689 = vxor.u32 %v1643, 2147483648
    %v1690 = vxor.u32 %v1682, 2147483648
    %v1691 = vmul.f32 %v1688, 1.442695
    %v1692 = vpow.pop %v1691
    %v1693 = vmul.f32 %v1689, 1.442695
    %v1694 = vpow.pop %v1693
    %v1695 = vmul.f32 %v1690, 1.442695
    %v1696 = vpow.pop %v1695
    %v1697 = vadd.f32 %v1692, 1.0
    %v1698 = vadd.f32 %v1694, 1.0
    %v1699 = vadd.f32 %v1696, 1.0
    %v1700 = vrcp.pop %v1697
    %v1701 = vmul.f32 1.0, %v1700
    %v1702 = vrcp.pop %v1698
    %v1703 = vmul.f32 1.0, %v1702
    %v1704 = vrcp.pop %v1699
    %v1705 = vmul.f32 1.0, %v1704
    %v1706 = vtanh.pop %v1684
    %v1707 = vmul.f32 %v1703, %v1484
    %v1708 = vmul.f32 %v1701, %v1706
    %v1709 = vadd.f32 %v1707, %v1708
    %v1710 = vtanh.pop %v1709
    %v1711 = vmul.f32 %v1705, %v1710
    %v1712 = vxor.u32 %v1601, 2147483648
    %v1713 = vxor.u32 %v1602, 2147483648
    %v1714 = vxor.u32 %v1603, 2147483648
    %v1715 = vmul.f32 %v1712, 1.442695
    %v1716 = vpow.pop %v1715
    %v1717 = vmul.f32 %v1713, 1.442695
    %v1718 = vpow.pop %v1717
    %v1719 = vmul.f32 %v1714, 1.442695
    %v1720 = vpow.pop %v1719
    %v1721 = vadd.f32 %v1716, 1.0
    %v1722 = vadd.f32 %v1718, 1.0
    %v1723 = vadd.f32 %v1720, 1.0
    %v1724 = vrcp.pop %v1721
    %v1725 = vmul.f32 1.0, %v1724
    %v1726 = vrcp.pop %v1722
    %v1727 = vmul.f32 1.0, %v1726
    %v1728 = vrcp.pop %v1723
    %v1729 = vmul.f32 1.0, %v1728
    %v1730 = vtanh.pop %v1604
    %v1731 = vmul.f32 %v1727, %v1508
    %v1732 = vmul.f32 %v1725, %v1730
    %v1733 = vadd.f32 %v1731, %v1732
    %v1734 = vtanh.pop %v1733
    %v1735 = vmul.f32 %v1729, %v1734
    %s1736 = smul.u32 5, 4
    %s1737 = smul.addr %s1736, 8
    %s1738 = scalar_lea.vmem [#allocation2], %s1737
    %v1739 = vld [vmem:[%s1738] sm:$0xff]
    %v1740 = vld [vmem:[%s1738 + $0x8] sm:$0xff]
    %v1741 = vld [vmem:[%s1738 + $0x10] sm:$0xff]
    %v1742 = vld [vmem:[%s1738 + $0x18] sm:$0xff]
    %v1743 = vpack.c.bf16 %v1735, %v1735
    %1744 = vmatprep.subr.bf16.mxu0 %v749
    %1745 = vmatpush1.bf16.msra.mxu0 %v748
    %1746 = vmatprep.subr.bf16.mxu0 %v753
    %1747 = vmatpush1.bf16.msra.mxu0 %v752
    %1748 = vmatprep.subr.bf16.mxu0 %v757
    %1749 = vmatpush1.bf16.msra.mxu0 %v756
    %1750 = vmatprep.subr.bf16.mxu0 %v761
    %1751 = vmatpush1.bf16.msra.mxu0 %v760
    %1752 = vmatprep.subr.bf16.mxu0 %v765
    %1753 = vmatpush1.bf16.msra.mxu0 %v764
    %1754 = vmatprep.subr.bf16.mxu0 %v769
    %1755 = vmatpush1.bf16.msra.mxu0 %v768
    %1756 = vmatprep.subr.bf16.mxu0 %v773
    %1757 = vmatpush1.bf16.msra.mxu0 %v772
    %1758 = vmatprep.subr.bf16.mxu0 %v777
    %1759 = vmatpush1.bf16.msra.mxu0 %v776
    %1760 = vmatprep.subr.bf16.mxu0 0
    %1761 = vmatpush1.bf16.msra.mxu0 0
    %1762 = vmatprep.subr.bf16.mxu0 0
    %1763 = vmatpush1.bf16.msra.mxu0 0
    %1764 = vmatprep.subr.bf16.mxu0 0
    %1765 = vmatpush1.bf16.msra.mxu0 0
    %1766 = vmatprep.subr.bf16.mxu0 0
    %1767 = vmatpush1.bf16.msra.mxu0 0
    %1768 = vmatprep.subr.bf16.mxu0 0
    %1769 = vmatpush1.bf16.msra.mxu0 0
    %1770 = vmatprep.subr.bf16.mxu0 0
    %1771 = vmatpush1.bf16.msra.mxu0 0
    %1772 = vmatprep.subr.bf16.mxu0 0
    %1773 = vmatpush1.bf16.msra.mxu0 0
    %1774 = vmatprep.subr.bf16.mxu0 0
    %1775 = vmatpush1.bf16.msra.mxu0 0
    %1776 = vmatprep.mubr.bf16.mxu0 0
    %1777 = vmatmul.mubr.bf16.gmra.mrb[0].mxu0 %v1743
    %v1778 = vpop.f32.mrb[0].mxu0
    %v1779 = vadd.f32 0.0, %v1778
    %v1780 = vpop.f32.mrb[0].mxu0
    %v1781 = vadd.f32 0.0, %v1780
    %v1782 = vpop.f32.mrb[0].mxu0
    %v1783 = vpop.f32.mrb[0].mxu0
    %1784 = vdwg.mxu0
    %1785 = vmatprep.subr.bf16.mxu0 %v751
    %1786 = vmatpush1.bf16.msra.mxu0 %v750
    %1787 = vmatprep.subr.bf16.mxu0 %v755
    %1788 = vmatpush1.bf16.msra.mxu0 %v754
    %1789 = vmatprep.subr.bf16.mxu0 %v759
    %1790 = vmatpush1.bf16.msra.mxu0 %v758
    %1791 = vmatprep.subr.bf16.mxu0 %v763
    %1792 = vmatpush1.bf16.msra.mxu0 %v762
    %1793 = vmatprep.subr.bf16.mxu0 %v767
    %1794 = vmatpush1.bf16.msra.mxu0 %v766
    %1795 = vmatprep.subr.bf16.mxu0 %v771
    %1796 = vmatpush1.bf16.msra.mxu0 %v770
    %1797 = vmatprep.subr.bf16.mxu0 %v775
    %1798 = vmatpush1.bf16.msra.mxu0 %v774
    %1799 = vmatprep.subr.bf16.mxu0 %v779
    %1800 = vmatpush1.bf16.msra.mxu0 %v778
    %1801 = vmatprep.subr.bf16.mxu0 0
    %1802 = vmatpush1.bf16.msra.mxu0 0
    %1803 = vmatprep.subr.bf16.mxu0 0
    %1804 = vmatpush1.bf16.msra.mxu0 0
    %1805 = vmatprep.subr.bf16.mxu0 0
    %1806 = vmatpush1.bf16.msra.mxu0 0
    %1807 = vmatprep.subr.bf16.mxu0 0
    %1808 = vmatpush1.bf16.msra.mxu0 0
    %1809 = vmatprep.subr.bf16.mxu0 0
    %1810 = vmatpush1.bf16.msra.mxu0 0
    %1811 = vmatprep.subr.bf16.mxu0 0
    %1812 = vmatpush1.bf16.msra.mxu0 0
    %1813 = vmatprep.subr.bf16.mxu0 0
    %1814 = vmatpush1.bf16.msra.mxu0 0
    %1815 = vmatprep.subr.bf16.mxu0 0
    %1816 = vmatpush1.bf16.msra.mxu0 0
    %1817 = vmatprep.mubr.bf16.mxu0 0
    %1818 = vmatmul.mubr.bf16.gmra.mrb[0].mxu0 %v1743
    %v1819 = vpop.f32.mrb[0].mxu0
    %v1820 = vadd.f32 0.0, %v1819
    %v1821 = vpop.f32.mrb[0].mxu0
    %v1822 = vadd.f32 0.0, %v1821
    %v1823 = vpop.f32.mrb[0].mxu0
    %v1824 = vpop.f32.mrb[0].mxu0
    %1825 = vdwg.mxu0
    %v1826 = vadd.f32 %v1739, %v1779
    %v1827 = vadd.f32 %v1740, %v1781
    %v1828 = vadd.f32 %v1741, %v1820
    %v1829 = vadd.f32 %v1742, %v1822
    %v1830 = vpack.c.bf16 %v1711, %v1711
    %1831 = vmatprep.subr.bf16.mxu0 %v868
    %1832 = vmatpush1.bf16.msra.mxu0 %v867
    %1833 = vmatprep.subr.bf16.mxu0 %v872
    %1834 = vmatpush1.bf16.msra.mxu0 %v871
    %1835 = vmatprep.subr.bf16.mxu0 %v876
    %1836 = vmatpush1.bf16.msra.mxu0 %v875
    %1837 = vmatprep.subr.bf16.mxu0 %v880
    %1838 = vmatpush1.bf16.msra.mxu0 %v879
    %1839 = vmatprep.subr.bf16.mxu0 %v884
    %1840 = vmatpush1.bf16.msra.mxu0 %v883
    %1841 = vmatprep.subr.bf16.mxu0 %v888
    %1842 = vmatpush1.bf16.msra.mxu0 %v887
    %1843 = vmatprep.subr.bf16.mxu0 %v892
    %1844 = vmatpush1.bf16.msra.mxu0 %v891
    %1845 = vmatprep.subr.bf16.mxu0 %v896
    %1846 = vmatpush1.bf16.msra.mxu0 %v895
    %1847 = vmatprep.subr.bf16.mxu0 %v900
    %1848 = vmatpush1.bf16.msra.mxu0 %v899
    %1849 = vmatprep.subr.bf16.mxu0 %v904
    %1850 = vmatpush1.bf16.msra.mxu0 %v903
    %1851 = vmatprep.subr.bf16.mxu0 %v908
    %1852 = vmatpush1.bf16.msra.mxu0 %v907
    %1853 = vmatprep.subr.bf16.mxu0 %v912
    %1854 = vmatpush1.bf16.msra.mxu0 %v911
    %1855 = vmatprep.subr.bf16.mxu0 %v916
    %1856 = vmatpush1.bf16.msra.mxu0 %v915
    %1857 = vmatprep.subr.bf16.mxu0 %v920
    %1858 = vmatpush1.bf16.msra.mxu0 %v919
    %1859 = vmatprep.subr.bf16.mxu0 %v924
    %1860 = vmatpush1.bf16.msra.mxu0 %v923
    %1861 = vmatprep.subr.bf16.mxu0 %v928
    %1862 = vmatpush1.bf16.msra.mxu0 %v927
    %1863 = vmatprep.mubr.bf16.mxu0 %v1830
    %1864 = vmatmul.mubr.bf16.gmra.mrb[0].mxu0 %v1743
    %v1865 = vpop.f32.mrb[0].mxu0
    %v1866 = vadd.f32 %v695, %v1865
    %v1867 = vpop.f32.mrb[0].mxu0
    %v1868 = vadd.f32 %v699, %v1867
    %v1869 = vpop.f32.mrb[0].mxu0
    %v1870 = vpop.f32.mrb[0].mxu0
    %1871 = vdwg.mxu0
    %1872 = vmatprep.subr.bf16.mxu0 %v870
    %1873 = vmatpush1.bf16.msra.mxu0 %v869
    %1874 = vmatprep.subr.bf16.mxu0 %v874
    %1875 = vmatpush1.bf16.msra.mxu0 %v873
    %1876 = vmatprep.subr.bf16.mxu0 %v878
    %1877 = vmatpush1.bf16.msra.mxu0 %v877
    %1878 = vmatprep.subr.bf16.mxu0 %v882
    %1879 = vmatpush1.bf16.msra.mxu0 %v881
    %1880 = vmatprep.subr.bf16.mxu0 %v886
    %1881 = vmatpush1.bf16.msra.mxu0 %v885
    %1882 = vmatprep.subr.bf16.mxu0 %v890
    %1883 = vmatpush1.bf16.msra.mxu0 %v889
    %1884 = vmatprep.subr.bf16.mxu0 %v894
    %1885 = vmatpush1.bf16.msra.mxu0 %v893
    %1886 = vmatprep.subr.bf16.mxu0 %v898
    %1887 = vmatpush1.bf16.msra.mxu0 %v897
    %1888 = vmatprep.subr.bf16.mxu0 %v902
    %1889 = vmatpush1.bf16.msra.mxu0 %v901
    %1890 = vmatprep.subr.bf16.mxu0 %v906
    %1891 = vmatpush1.bf16.msra.mxu0 %v905
    %1892 = vmatprep.subr.bf16.mxu0 %v910
    %1893 = vmatpush1.bf16.msra.mxu0 %v909
    %1894 = vmatprep.subr.bf16.mxu0 %v914
    %1895 = vmatpush1.bf16.msra.mxu0 %v913
    %1896 = vmatprep.subr.bf16.mxu0 %v918
    %1897 = vmatpush1.bf16.msra.mxu0 %v917
    %1898 = vmatprep.subr.bf16.mxu0 %v922
    %1899 = vmatpush1.bf16.msra.mxu0 %v921
    %1900 = vmatprep.subr.bf16.mxu0 %v926
    %1901 = vmatpush1.bf16.msra.mxu0 %v925
    %1902 = vmatprep.subr.bf16.mxu0 %v930
    %1903 = vmatpush1.bf16.msra.mxu0 %v929
    %1904 = vmatprep.mubr.bf16.mxu0 %v1830
    %1905 = vmatmul.mubr.bf16.gmra.mrb[0].mxu0 %v1743
    %v1906 = vpop.f32.mrb[0].mxu0
    %v1907 = vadd.f32 %v703, %v1906
    %v1908 = vpop.f32.mrb[0].mxu0
    %v1909 = vadd.f32 %v707, %v1908
    %v1910 = vpop.f32.mrb[0].mxu0
    %v1911 = vpop.f32.mrb[0].mxu0
    %1912 = vdwg.mxu0
    %v1913 = vxor.u32 %v1866, 2147483648
    %v1914 = vxor.u32 %v1868, 2147483648
    %v1915 = vxor.u32 %v1907, 2147483648
    %v1916 = vmul.f32 %v1913, 1.442695
    %v1917 = vpow.pop %v1916
    %v1918 = vmul.f32 %v1914, 1.442695
    %v1919 = vpow.pop %v1918
    %v1920 = vmul.f32 %v1915, 1.442695
    %v1921 = vpow.pop %v1920
    %v1922 = vadd.f32 %v1917, 1.0
    %v1923 = vadd.f32 %v1919, 1.0
    %v1924 = vadd.f32 %v1921, 1.0
    %v1925 = vrcp.pop %v1922
    %v1926 = vmul.f32 1.0, %v1925
    %v1927 = vrcp.pop %v1923
    %v1928 = vmul.f32 1.0, %v1927
    %v1929 = vrcp.pop %v1924
    %v1930 = vmul.f32 1.0, %v1929
    %v1931 = vtanh.pop %v1909
    %v1932 = vmul.f32 %v1928, %v1709
    %v1933 = vmul.f32 %v1926, %v1931
    %v1934 = vadd.f32 %v1932, %v1933
    %v1935 = vtanh.pop %v1934
    %v1936 = vmul.f32 %v1930, %v1935
    %v1937 = vxor.u32 %v1826, 2147483648
    %v1938 = vxor.u32 %v1827, 2147483648
    %v1939 = vxor.u32 %v1828, 2147483648
    %v1940 = vmul.f32 %v1937, 1.442695
    %v1941 = vpow.pop %v1940
    %v1942 = vmul.f32 %v1938, 1.442695
    %v1943 = vpow.pop %v1942
    %v1944 = vmul.f32 %v1939, 1.442695
    %v1945 = vpow.pop %v1944
    %v1946 = vadd.f32 %v1941, 1.0
    %v1947 = vadd.f32 %v1943, 1.0
    %v1948 = vadd.f32 %v1945, 1.0
    %v1949 = vrcp.pop %v1946
    %v1950 = vmul.f32 1.0, %v1949
    %v1951 = vrcp.pop %v1947
    %v1952 = vmul.f32 1.0, %v1951
    %v1953 = vrcp.pop %v1948
    %v1954 = vmul.f32 1.0, %v1953
    %v1955 = vtanh.pop %v1829
    %v1956 = vmul.f32 %v1952, %v1733
    %v1957 = vmul.f32 %v1950, %v1955
    %v1958 = vadd.f32 %v1956, %v1957
    %v1959 = vtanh.pop %v1958
    %v1960 = vmul.f32 %v1954, %v1959
    %s1961 = smul.u32 6, 4
    %s1962 = smul.addr %s1961, 8
    %s1963 = scalar_lea.vmem [#allocation2], %s1962
    %v1964 = vld [vmem:[%s1963] sm:$0xff]
    %v1965 = vld [vmem:[%s1963 + $0x8] sm:$0xff]
    %v1966 = vld [vmem:[%s1963 + $0x10] sm:$0xff]
    %v1967 = vld [vmem:[%s1963 + $0x18] sm:$0xff]
    %v1968 = vpack.c.bf16 %v1960, %v1960
    %1969 = vmatprep.subr.bf16.mxu0 %v749
    %1970 = vmatpush1.bf16.msra.mxu0 %v748
    %1971 = vmatprep.subr.bf16.mxu0 %v753
    %1972 = vmatpush1.bf16.msra.mxu0 %v752
    %1973 = vmatprep.subr.bf16.mxu0 %v757
    %1974 = vmatpush1.bf16.msra.mxu0 %v756
    %1975 = vmatprep.subr.bf16.mxu0 %v761
    %1976 = vmatpush1.bf16.msra.mxu0 %v760
    %1977 = vmatprep.subr.bf16.mxu0 %v765
    %1978 = vmatpush1.bf16.msra.mxu0 %v764
    %1979 = vmatprep.subr.bf16.mxu0 %v769
    %1980 = vmatpush1.bf16.msra.mxu0 %v768
    %1981 = vmatprep.subr.bf16.mxu0 %v773
    %1982 = vmatpush1.bf16.msra.mxu0 %v772
    %1983 = vmatprep.subr.bf16.mxu0 %v777
    %1984 = vmatpush1.bf16.msra.mxu0 %v776
    %1985 = vmatprep.subr.bf16.mxu0 0
    %1986 = vmatpush1.bf16.msra.mxu0 0
    %1987 = vmatprep.subr.bf16.mxu0 0
    %1988 = vmatpush1.bf16.msra.mxu0 0
    %1989 = vmatprep.subr.bf16.mxu0 0
    %1990 = vmatpush1.bf16.msra.mxu0 0
    %1991 = vmatprep.subr.bf16.mxu0 0
    %1992 = vmatpush1.bf16.msra.mxu0 0
    %1993 = vmatprep.subr.bf16.mxu0 0
    %1994 = vmatpush1.bf16.msra.mxu0 0
    %1995 = vmatprep.subr.bf16.mxu0 0
    %1996 = vmatpush1.bf16.msra.mxu0 0
    %1997 = vmatprep.subr.bf16.mxu0 0
    %1998 = vmatpush1.bf16.msra.mxu0 0
    %1999 = vmatprep.subr.bf16.mxu0 0
    %2000 = vmatpush1.bf16.msra.mxu0 0
    %2001 = vmatprep.mubr.bf16.mxu0 0
    %2002 = vmatmul.mubr.bf16.gmra.mrb[0].mxu0 %v1968
    %v2003 = vpop.f32.mrb[0].mxu0
    %v2004 = vadd.f32 0.0, %v2003
    %v2005 = vpop.f32.mrb[0].mxu0
    %v2006 = vadd.f32 0.0, %v2005
    %v2007 = vpop.f32.mrb[0].mxu0
    %v2008 = vpop.f32.mrb[0].mxu0
    %2009 = vdwg.mxu0
    %2010 = vmatprep.subr.bf16.mxu0 %v751
    %2011 = vmatpush1.bf16.msra.mxu0 %v750
    %2012 = vmatprep.subr.bf16.mxu0 %v755
    %2013 = vmatpush1.bf16.msra.mxu0 %v754
    %2014 = vmatprep.subr.bf16.mxu0 %v759
    %2015 = vmatpush1.bf16.msra.mxu0 %v758
    %2016 = vmatprep.subr.bf16.mxu0 %v763
    %2017 = vmatpush1.bf16.msra.mxu0 %v762
    %2018 = vmatprep.subr.bf16.mxu0 %v767
    %2019 = vmatpush1.bf16.msra.mxu0 %v766
    %2020 = vmatprep.subr.bf16.mxu0 %v771
    %2021 = vmatpush1.bf16.msra.mxu0 %v770
    %2022 = vmatprep.subr.bf16.mxu0 %v775
    %2023 = vmatpush1.bf16.msra.mxu0 %v774
    %2024 = vmatprep.subr.bf16.mxu0 %v779
    %2025 = vmatpush1.bf16.msra.mxu0 %v778
    %2026 = vmatprep.subr.bf16.mxu0 0
    %2027 = vmatpush1.bf16.msra.mxu0 0
    %2028 = vmatprep.subr.bf16.mxu0 0
    %2029 = vmatpush1.bf16.msra.mxu0 0
    %2030 = vmatprep.subr.bf16.mxu0 0
    %2031 = vmatpush1.bf16.msra.mxu0 0
    %2032 = vmatprep.subr.bf16.mxu0 0
    %2033 = vmatpush1.bf16.msra.mxu0 0
    %2034 = vmatprep.subr.bf16.mxu0 0
    %2035 = vmatpush1.bf16.msra.mxu0 0
    %2036 = vmatprep.subr.bf16.mxu0 0
    %2037 = vmatpush1.bf16.msra.mxu0 0
    %2038 = vmatprep.subr.bf16.mxu0 0
    %2039 = vmatpush1.bf16.msra.mxu0 0
    %2040 = vmatprep.subr.bf16.mxu0 0
    %2041 = vmatpush1.bf16.msra.mxu0 0
    %2042 = vmatprep.mubr.bf16.mxu0 0
    %2043 = vmatmul.mubr.bf16.gmra.mrb[0].mxu0 %v1968
    %v2044 = vpop.f32.mrb[0].mxu0
    %v2045 = vadd.f32 0.0, %v2044
    %v2046 = vpop.f32.mrb[0].mxu0
    %v2047 = vadd.f32 0.0, %v2046
    %v2048 = vpop.f32.mrb[0].mxu0
    %v2049 = vpop.f32.mrb[0].mxu0
    %2050 = vdwg.mxu0
    %v2051 = vadd.f32 %v1964, %v2004
    %v2052 = vadd.f32 %v1965, %v2006
    %v2053 = vadd.f32 %v1966, %v2045
    %v2054 = vadd.f32 %v1967, %v2047
    %v2055 = vpack.c.bf16 %v1936, %v1936
    %2056 = vmatprep.subr.bf16.mxu0 %v868
    %2057 = vmatpush1.bf16.msra.mxu0 %v867
    %2058 = vmatprep.subr.bf16.mxu0 %v872
    %2059 = vmatpush1.bf16.msra.mxu0 %v871
    %2060 = vmatprep.subr.bf16.mxu0 %v876
    %2061 = vmatpush1.bf16.msra.mxu0 %v875
    %2062 = vmatprep.subr.bf16.mxu0 %v880
    %2063 = vmatpush1.bf16.msra.mxu0 %v879
    %2064 = vmatprep.subr.bf16.mxu0 %v884
    %2065 = vmatpush1.bf16.msra.mxu0 %v883
    %2066 = vmatprep.subr.bf16.mxu0 %v888
    %2067 = vmatpush1.bf16.msra.mxu0 %v887
    %2068 = vmatprep.subr.bf16.mxu0 %v892
    %2069 = vmatpush1.bf16.msra.mxu0 %v891
    %2070 = vmatprep.subr.bf16.mxu0 %v896
    %2071 = vmatpush1.bf16.msra.mxu0 %v895
    %2072 = vmatprep.subr.bf16.mxu0 %v900
    %2073 = vmatpush1.bf16.msra.mxu0 %v899
    %2074 = vmatprep.subr.bf16.mxu0 %v904
    %2075 = vmatpush1.bf16.msra.mxu0 %v903
    %2076 = vmatprep.subr.bf16.mxu0 %v908
    %2077 = vmatpush1.bf16.msra.mxu0 %v907
    %2078 = vmatprep.subr.bf16.mxu0 %v912
    %2079 = vmatpush1.bf16.msra.mxu0 %v911
    %2080 = vmatprep.subr.bf16.mxu0 %v916
    %2081 = vmatpush1.bf16.msra.mxu0 %v915
    %2082 = vmatprep.subr.bf16.mxu0 %v920
    %2083 = vmatpush1.bf16.msra.mxu0 %v919
    %2084 = vmatprep.subr.bf16.mxu0 %v924
    %2085 = vmatpush1.bf16.msra.mxu0 %v923
    %2086 = vmatprep.subr.bf16.mxu0 %v928
    %2087 = vmatpush1.bf16.msra.mxu0 %v927
    %2088 = vmatprep.mubr.bf16.mxu0 %v2055
    %2089 = vmatmul.mubr.bf16.gmra.mrb[0].mxu0 %v1968
    %v2090 = vpop.f32.mrb[0].mxu0
    %v2091 = vadd.f32 %v695, %v2090
    %v2092 = vpop.f32.mrb[0].mxu0
    %v2093 = vadd.f32 %v699, %v2092
    %v2094 = vpop.f32.mrb[0].mxu0
    %v2095 = vpop.f32.mrb[0].mxu0
    %2096 = vdwg.mxu0
    %2097 = vmatprep.subr.bf16.mxu0 %v870
    %2098 = vmatpush1.bf16.msra.mxu0 %v869
    %2099 = vmatprep.subr.bf16.mxu0 %v874
    %2100 = vmatpush1.bf16.msra.mxu0 %v873
    %2101 = vmatprep.subr.bf16.mxu0 %v878
    %2102 = vmatpush1.bf16.msra.mxu0 %v877
    %2103 = vmatprep.subr.bf16.mxu0 %v882
    %2104 = vmatpush1.bf16.msra.mxu0 %v881
    %2105 = vmatprep.subr.bf16.mxu0 %v886
    %2106 = vmatpush1.bf16.msra.mxu0 %v885
    %2107 = vmatprep.subr.bf16.mxu0 %v890
    %2108 = vmatpush1.bf16.msra.mxu0 %v889
    %2109 = vmatprep.subr.bf16.mxu0 %v894
    %2110 = vmatpush1.bf16.msra.mxu0 %v893
    %2111 = vmatprep.subr.bf16.mxu0 %v898
    %2112 = vmatpush1.bf16.msra.mxu0 %v897
    %2113 = vmatprep.subr.bf16.mxu0 %v902
    %2114 = vmatpush1.bf16.msra.mxu0 %v901
    %2115 = vmatprep.subr.bf16.mxu0 %v906
    %2116 = vmatpush1.bf16.msra.mxu0 %v905
    %2117 = vmatprep.subr.bf16.mxu0 %v910
    %2118 = vmatpush1.bf16.msra.mxu0 %v909
    %2119 = vmatprep.subr.bf16.mxu0 %v914
    %2120 = vmatpush1.bf16.msra.mxu0 %v913
    %2121 = vmatprep.subr.bf16.mxu0 %v918
    %2122 = vmatpush1.bf16.msra.mxu0 %v917
    %2123 = vmatprep.subr.bf16.mxu0 %v922
    %2124 = vmatpush1.bf16.msra.mxu0 %v921
    %2125 = vmatprep.subr.bf16.mxu0 %v926
    %2126 = vmatpush1.bf16.msra.mxu0 %v925
    %2127 = vmatprep.subr.bf16.mxu0 %v930
    %2128 = vmatpush1.bf16.msra.mxu0 %v929
    %2129 = vmatprep.mubr.bf16.mxu0 %v2055
    %2130 = vmatmul.mubr.bf16.gmra.mrb[0].mxu0 %v1968
    %v2131 = vpop.f32.mrb[0].mxu0
    %v2132 = vadd.f32 %v703, %v2131
    %v2133 = vpop.f32.mrb[0].mxu0
    %v2134 = vadd.f32 %v707, %v2133
    %v2135 = vpop.f32.mrb[0].mxu0
    %v2136 = vpop.f32.mrb[0].mxu0
    %2137 = vdwg.mxu0
    %v2138 = vxor.u32 %v2091, 2147483648
    %v2139 = vxor.u32 %v2093, 2147483648
    %v2140 = vxor.u32 %v2132, 2147483648
    %v2141 = vmul.f32 %v2138, 1.442695
    %v2142 = vpow.pop %v2141
    %v2143 = vmul.f32 %v2139, 1.442695
    %v2144 = vpow.pop %v2143
    %v2145 = vmul.f32 %v2140, 1.442695
    %v2146 = vpow.pop %v2145
    %v2147 = vadd.f32 %v2142, 1.0
    %v2148 = vadd.f32 %v2144, 1.0
    %v2149 = vadd.f32 %v2146, 1.0
    %v2150 = vrcp.pop %v2147
    %v2151 = vmul.f32 1.0, %v2150
    %v2152 = vrcp.pop %v2148
    %v2153 = vmul.f32 1.0, %v2152
    %v2154 = vrcp.pop %v2149
    %v2155 = vmul.f32 1.0, %v2154
    %v2156 = vtanh.pop %v2134
    %v2157 = vmul.f32 %v2153, %v1934
    %v2158 = vmul.f32 %v2151, %v2156
    %v2159 = vadd.f32 %v2157, %v2158
    %v2160 = vtanh.pop %v2159
    %v2161 = vmul.f32 %v2155, %v2160
    %v2162 = vxor.u32 %v2051, 2147483648
    %v2163 = vxor.u32 %v2052, 2147483648
    %v2164 = vxor.u32 %v2053, 2147483648
    %v2165 = vmul.f32 %v2162, 1.442695
    %v2166 = vpow.pop %v2165
    %v2167 = vmul.f32 %v2163, 1.442695
    %v2168 = vpow.pop %v2167
    %v2169 = vmul.f32 %v2164, 1.442695
    %v2170 = vpow.pop %v2169
    %v2171 = vadd.f32 %v2166, 1.0
    %v2172 = vadd.f32 %v2168, 1.0
    %v2173 = vadd.f32 %v2170, 1.0
    %v2174 = vrcp.pop %v2171
    %v2175 = vmul.f32 1.0, %v2174
    %v2176 = vrcp.pop %v2172
    %v2177 = vmul.f32 1.0, %v2176
    %v2178 = vrcp.pop %v2173
    %v2179 = vmul.f32 1.0, %v2178
    %v2180 = vtanh.pop %v2054
    %v2181 = vmul.f32 %v2177, %v1958
    %v2182 = vmul.f32 %v2175, %v2180
    %v2183 = vadd.f32 %v2181, %v2182
    %v2184 = vtanh.pop %v2183
    %v2185 = vmul.f32 %v2179, %v2184
    %s2186 = smul.u32 7, 4
    %s2187 = smul.addr %s2186, 8
    %s2188 = scalar_lea.vmem [#allocation2], %s2187
    %v2189 = vld [vmem:[%s2188] sm:$0xff]
    %v2190 = vld [vmem:[%s2188 + $0x8] sm:$0xff]
    %v2191 = vld [vmem:[%s2188 + $0x10] sm:$0xff]
    %v2192 = vld [vmem:[%s2188 + $0x18] sm:$0xff]
    %v2193 = vpack.c.bf16 %v2185, %v2185
    %2194 = vmatprep.subr.bf16.mxu0 %v749
    %2195 = vmatpush1.bf16.msra.mxu0 %v748
    %2196 = vmatprep.subr.bf16.mxu0 %v753
    %2197 = vmatpush1.bf16.msra.mxu0 %v752
    %2198 = vmatprep.subr.bf16.mxu0 %v757
    %2199 = vmatpush1.bf16.msra.mxu0 %v756
    %2200 = vmatprep.subr.bf16.mxu0 %v761
    %2201 = vmatpush1.bf16.msra.mxu0 %v760
    %2202 = vmatprep.subr.bf16.mxu0 %v765
    %2203 = vmatpush1.bf16.msra.mxu0 %v764
    %2204 = vmatprep.subr.bf16.mxu0 %v769
    %2205 = vmatpush1.bf16.msra.mxu0 %v768
    %2206 = vmatprep.subr.bf16.mxu0 %v773
    %2207 = vmatpush1.bf16.msra.mxu0 %v772
    %2208 = vmatprep.subr.bf16.mxu0 %v777
    %2209 = vmatpush1.bf16.msra.mxu0 %v776
    %2210 = vmatprep.subr.bf16.mxu0 0
    %2211 = vmatpush1.bf16.msra.mxu0 0
    %2212 = vmatprep.subr.bf16.mxu0 0
    %2213 = vmatpush1.bf16.msra.mxu0 0
    %2214 = vmatprep.subr.bf16.mxu0 0
    %2215 = vmatpush1.bf16.msra.mxu0 0
    %2216 = vmatprep.subr.bf16.mxu0 0
    %2217 = vmatpush1.bf16.msra.mxu0 0
    %2218 = vmatprep.subr.bf16.mxu0 0
    %2219 = vmatpush1.bf16.msra.mxu0 0
    %2220 = vmatprep.subr.bf16.mxu0 0
    %2221 = vmatpush1.bf16.msra.mxu0 0
    %2222 = vmatprep.subr.bf16.mxu0 0
    %2223 = vmatpush1.bf16.msra.mxu0 0
    %2224 = vmatprep.subr.bf16.mxu0 0
    %2225 = vmatpush1.bf16.msra.mxu0 0
    %2226 = vmatprep.mubr.bf16.mxu0 0
    %2227 = vmatmul.mubr.bf16.gmra.mrb[0].mxu0 %v2193
    %v2228 = vpop.f32.mrb[0].mxu0
    %v2229 = vadd.f32 0.0, %v2228
    %v2230 = vpop.f32.mrb[0].mxu0
    %v2231 = vadd.f32 0.0, %v2230
    %v2232 = vpop.f32.mrb[0].mxu0
    %v2233 = vpop.f32.mrb[0].mxu0
    %2234 = vdwg.mxu0
    %2235 = vmatprep.subr.bf16.mxu0 %v751
    %2236 = vmatpush1.bf16.msra.mxu0 %v750
    %2237 = vmatprep.subr.bf16.mxu0 %v755
    %2238 = vmatpush1.bf16.msra.mxu0 %v754
    %2239 = vmatprep.subr.bf16.mxu0 %v759
    %2240 = vmatpush1.bf16.msra.mxu0 %v758
    %2241 = vmatprep.subr.bf16.mxu0 %v763
    %2242 = vmatpush1.bf16.msra.mxu0 %v762
    %2243 = vmatprep.subr.bf16.mxu0 %v767
    %2244 = vmatpush1.bf16.msra.mxu0 %v766
    %2245 = vmatprep.subr.bf16.mxu0 %v771
    %2246 = vmatpush1.bf16.msra.mxu0 %v770
    %2247 = vmatprep.subr.bf16.mxu0 %v775
    %2248 = vmatpush1.bf16.msra.mxu0 %v774
    %2249 = vmatprep.subr.bf16.mxu0 %v779
    %2250 = vmatpush1.bf16.msra.mxu0 %v778
    %2251 = vmatprep.subr.bf16.mxu0 0
    %2252 = vmatpush1.bf16.msra.mxu0 0
    %2253 = vmatprep.subr.bf16.mxu0 0
    %2254 = vmatpush1.bf16.msra.mxu0 0
    %2255 = vmatprep.subr.bf16.mxu0 0
    %2256 = vmatpush1.bf16.msra.mxu0 0
    %2257 = vmatprep.subr.bf16.mxu0 0
    %2258 = vmatpush1.bf16.msra.mxu0 0
    %2259 = vmatprep.subr.bf16.mxu0 0
    %2260 = vmatpush1.bf16.msra.mxu0 0
    %2261 = vmatprep.subr.bf16.mxu0 0
    %2262 = vmatpush1.bf16.msra.mxu0 0
    %2263 = vmatprep.subr.bf16.mxu0 0
    %2264 = vmatpush1.bf16.msra.mxu0 0
    %2265 = vmatprep.subr.bf16.mxu0 0
    %2266 = vmatpush1.bf16.msra.mxu0 0
    %2267 = vmatprep.mubr.bf16.mxu0 0
    %2268 = vmatmul.mubr.bf16.gmra.mrb[0].mxu0 %v2193
    %v2269 = vpop.f32.mrb[0].mxu0
    %v2270 = vadd.f32 0.0, %v2269
    %v2271 = vpop.f32.mrb[0].mxu0
    %v2272 = vadd.f32 0.0, %v2271
    %v2273 = vpop.f32.mrb[0].mxu0
    %v2274 = vpop.f32.mrb[0].mxu0
    %2275 = vdwg.mxu0
    %v2276 = vadd.f32 %v2189, %v2229
    %v2277 = vadd.f32 %v2190, %v2231
    %v2278 = vadd.f32 %v2191, %v2270
    %v2279 = vadd.f32 %v2192, %v2272
    %v2280 = vpack.c.bf16 %v2161, %v2161
    %2281 = vmatprep.subr.bf16.mxu0 %v868
    %2282 = vmatpush1.bf16.msra.mxu0 %v867
    %2283 = vmatprep.subr.bf16.mxu0 %v872
    %2284 = vmatpush1.bf16.msra.mxu0 %v871
    %2285 = vmatprep.subr.bf16.mxu0 %v876
    %2286 = vmatpush1.bf16.msra.mxu0 %v875
    %2287 = vmatprep.subr.bf16.mxu0 %v880
    %2288 = vmatpush1.bf16.msra.mxu0 %v879
    %2289 = vmatprep.subr.bf16.mxu0 %v884
    %2290 = vmatpush1.bf16.msra.mxu0 %v883
    %2291 = vmatprep.subr.bf16.mxu0 %v888
    %2292 = vmatpush1.bf16.msra.mxu0 %v887
    %2293 = vmatprep.subr.bf16.mxu0 %v892
    %2294 = vmatpush1.bf16.msra.mxu0 %v891
    %2295 = vmatprep.subr.bf16.mxu0 %v896
    %2296 = vmatpush1.bf16.msra.mxu0 %v895
    %2297 = vmatprep.subr.bf16.mxu0 %v900
    %2298 = vmatpush1.bf16.msra.mxu0 %v899
    %2299 = vmatprep.subr.bf16.mxu0 %v904
    %2300 = vmatpush1.bf16.msra.mxu0 %v903
    %2301 = vmatprep.subr.bf16.mxu0 %v908
    %2302 = vmatpush1.bf16.msra.mxu0 %v907
    %2303 = vmatprep.subr.bf16.mxu0 %v912
    %2304 = vmatpush1.bf16.msra.mxu0 %v911
    %2305 = vmatprep.subr.bf16.mxu0 %v916
    %2306 = vmatpush1.bf16.msra.mxu0 %v915
    %2307 = vmatprep.subr.bf16.mxu0 %v920
    %2308 = vmatpush1.bf16.msra.mxu0 %v919
    %2309 = vmatprep.subr.bf16.mxu0 %v924
    %2310 = vmatpush1.bf16.msra.mxu0 %v923
    %2311 = vmatprep.subr.bf16.mxu0 %v928
    %2312 = vmatpush1.bf16.msra.mxu0 %v927
    %2313 = vmatprep.mubr.bf16.mxu0 %v2280
    %2314 = vmatmul.mubr.bf16.gmra.mrb[0].mxu0 %v2193
    %v2315 = vpop.f32.mrb[0].mxu0
    %v2316 = vadd.f32 %v695, %v2315
    %v2317 = vpop.f32.mrb[0].mxu0
    %v2318 = vadd.f32 %v699, %v2317
    %v2319 = vpop.f32.mrb[0].mxu0
    %v2320 = vpop.f32.mrb[0].mxu0
    %2321 = vdwg.mxu0
    %2322 = vmatprep.subr.bf16.mxu0 %v870
    %2323 = vmatpush1.bf16.msra.mxu0 %v869
    %2324 = vmatprep.subr.bf16.mxu0 %v874
    %2325 = vmatpush1.bf16.msra.mxu0 %v873
    %2326 = vmatprep.subr.bf16.mxu0 %v878
    %2327 = vmatpush1.bf16.msra.mxu0 %v877
    %2328 = vmatprep.subr.bf16.mxu0 %v882
    %2329 = vmatpush1.bf16.msra.mxu0 %v881
    %2330 = vmatprep.subr.bf16.mxu0 %v886
    %2331 = vmatpush1.bf16.msra.mxu0 %v885
    %2332 = vmatprep.subr.bf16.mxu0 %v890
    %2333 = vmatpush1.bf16.msra.mxu0 %v889
    %2334 = vmatprep.subr.bf16.mxu0 %v894
    %2335 = vmatpush1.bf16.msra.mxu0 %v893
    %2336 = vmatprep.subr.bf16.mxu0 %v898
    %2337 = vmatpush1.bf16.msra.mxu0 %v897
    %2338 = vmatprep.subr.bf16.mxu0 %v902
    %2339 = vmatpush1.bf16.msra.mxu0 %v901
    %2340 = vmatprep.subr.bf16.mxu0 %v906
    %2341 = vmatpush1.bf16.msra.mxu0 %v905
    %2342 = vmatprep.subr.bf16.mxu0 %v910
    %2343 = vmatpush1.bf16.msra.mxu0 %v909
    %2344 = vmatprep.subr.bf16.mxu0 %v914
    %2345 = vmatpush1.bf16.msra.mxu0 %v913
    %2346 = vmatprep.subr.bf16.mxu0 %v918
    %2347 = vmatpush1.bf16.msra.mxu0 %v917
    %2348 = vmatprep.subr.bf16.mxu0 %v922
    %2349 = vmatpush1.bf16.msra.mxu0 %v921
    %2350 = vmatprep.subr.bf16.mxu0 %v926
    %2351 = vmatpush1.bf16.msra.mxu0 %v925
    %2352 = vmatprep.subr.bf16.mxu0 %v930
    %2353 = vmatpush1.bf16.msra.mxu0 %v929
    %2354 = vmatprep.mubr.bf16.mxu0 %v2280
    %2355 = vmatmul.mubr.bf16.gmra.mrb[0].mxu0 %v2193
    %v2356 = vpop.f32.mrb[0].mxu0
    %v2357 = vadd.f32 %v703, %v2356
    %v2358 = vpop.f32.mrb[0].mxu0
    %v2359 = vadd.f32 %v707, %v2358
    %v2360 = vpop.f32.mrb[0].mxu0
    %v2361 = vpop.f32.mrb[0].mxu0
    %2362 = vdwg.mxu0
    %v2363 = vxor.u32 %v2316, 2147483648
    %v2364 = vxor.u32 %v2318, 2147483648
    %v2365 = vxor.u32 %v2357, 2147483648
    %v2366 = vmul.f32 %v2363, 1.442695
    %v2367 = vpow.pop %v2366
    %v2368 = vmul.f32 %v2364, 1.442695
    %v2369 = vpow.pop %v2368
    %v2370 = vmul.f32 %v2365, 1.442695
    %v2371 = vpow.pop %v2370
    %v2372 = vadd.f32 %v2367, 1.0
    %v2373 = vadd.f32 %v2369, 1.0
    %v2374 = vadd.f32 %v2371, 1.0
    %v2375 = vrcp.pop %v2372
    %v2376 = vmul.f32 1.0, %v2375
    %v2377 = vrcp.pop %v2373
    %v2378 = vmul.f32 1.0, %v2377
    %v2379 = vrcp.pop %v2374
    %v2380 = vmul.f32 1.0, %v2379
    %v2381 = vtanh.pop %v2359
    %v2382 = vmul.f32 %v2378, %v2159
    %v2383 = vmul.f32 %v2376, %v2381
    %v2384 = vadd.f32 %v2382, %v2383
    %v2385 = vtanh.pop %v2384
    %v2386 = vmul.f32 %v2380, %v2385
    %v2387 = vxor.u32 %v2276, 2147483648
    %v2388 = vxor.u32 %v2277, 2147483648
    %v2389 = vxor.u32 %v2278, 2147483648
    %v2390 = vmul.f32 %v2387, 1.442695
    %v2391 = vpow.pop %v2390
    %v2392 = vmul.f32 %v2388, 1.442695
    %v2393 = vpow.pop %v2392
    %v2394 = vmul.f32 %v2389, 1.442695
    %v2395 = vpow.pop %v2394
    %v2396 = vadd.f32 %v2391, 1.0
    %v2397 = vadd.f32 %v2393, 1.0
    %v2398 = vadd.f32 %v2395, 1.0
    %v2399 = vrcp.pop %v2396
    %v2400 = vmul.f32 1.0, %v2399
    %v2401 = vrcp.pop %v2397
    %v2402 = vmul.f32 1.0, %v2401
    %v2403 = vrcp.pop %v2398
    %v2404 = vmul.f32 1.0, %v2403
    %v2405 = vtanh.pop %v2279
    %v2406 = vmul.f32 %v2402, %v2183
    %v2407 = vmul.f32 %v2400, %v2405
    %v2408 = vadd.f32 %v2406, %v2407
    %v2409 = vtanh.pop %v2408
    %v2410 = vmul.f32 %v2404, %v2409
    %v2411 = vpack.c.bf16 %v2410, %v2410
    %v2412 = vpack.c.bf16 %v2386, %v2386
    %2413 = vmatprep.subr.bf16.mxu0 %v868
    %2414 = vmatpush1.bf16.msra.mxu0 %v867
    %2415 = vmatprep.subr.bf16.mxu0 %v872
    %2416 = vmatpush1.bf16.msra.mxu0 %v871
    %2417 = vmatprep.subr.bf16.mxu0 %v876
    %2418 = vmatpush1.bf16.msra.mxu0 %v875
    %2419 = vmatprep.subr.bf16.mxu0 %v880
    %2420 = vmatpush1.bf16.msra.mxu0 %v879
    %2421 = vmatprep.subr.bf16.mxu0 %v884
    %2422 = vmatpush1.bf16.msra.mxu0 %v883
    %2423 = vmatprep.subr.bf16.mxu0 %v888
    %2424 = vmatpush1.bf16.msra.mxu0 %v887
    %2425 = vmatprep.subr.bf16.mxu0 %v892
    %2426 = vmatpush1.bf16.msra.mxu0 %v891
    %2427 = vmatprep.subr.bf16.mxu0 %v896
    %2428 = vmatpush1.bf16.msra.mxu0 %v895
    %2429 = vmatprep.subr.bf16.mxu0 %v900
    %2430 = vmatpush1.bf16.msra.mxu0 %v899
    %2431 = vmatprep.subr.bf16.mxu0 %v904
    %2432 = vmatpush1.bf16.msra.mxu0 %v903
    %2433 = vmatprep.subr.bf16.mxu0 %v908
    %2434 = vmatpush1.bf16.msra.mxu0 %v907
    %2435 = vmatprep.subr.bf16.mxu0 %v912
    %2436 = vmatpush1.bf16.msra.mxu0 %v911
    %2437 = vmatprep.subr.bf16.mxu0 %v916
    %2438 = vmatpush1.bf16.msra.mxu0 %v915
    %2439 = vmatprep.subr.bf16.mxu0 %v920
    %2440 = vmatpush1.bf16.msra.mxu0 %v919
    %2441 = vmatprep.subr.bf16.mxu0 %v924
    %2442 = vmatpush1.bf16.msra.mxu0 %v923
    %2443 = vmatprep.subr.bf16.mxu0 %v928
    %2444 = vmatpush1.bf16.msra.mxu0 %v927
    %2445 = vmatprep.mubr.bf16.mxu0 %v2412
    %2446 = vmatmul.mubr.bf16.gmra.mrb[0].mxu0 %v2411
    %v2447 = vpop.f32.mrb[0].mxu0
    %v2448 = vadd.f32 %v695, %v2447
    %v2449 = vpop.f32.mrb[0].mxu0
    %v2450 = vadd.f32 %v699, %v2449
    %v2451 = vpop.f32.mrb[0].mxu0
    %v2452 = vpop.f32.mrb[0].mxu0
    %2453 = vdwg.mxu0
    %2454 = vmatprep.subr.bf16.mxu0 %v870
    %2455 = vmatpush1.bf16.msra.mxu0 %v869
    %2456 = vmatprep.subr.bf16.mxu0 %v874
    %2457 = vmatpush1.bf16.msra.mxu0 %v873
    %2458 = vmatprep.subr.bf16.mxu0 %v878
    %2459 = vmatpush1.bf16.msra.mxu0 %v877
    %2460 = vmatprep.subr.bf16.mxu0 %v882
    %2461 = vmatpush1.bf16.msra.mxu0 %v881
    %2462 = vmatprep.subr.bf16.mxu0 %v886
    %2463 = vmatpush1.bf16.msra.mxu0 %v885
    %2464 = vmatprep.subr.bf16.mxu0 %v890
    %2465 = vmatpush1.bf16.msra.mxu0 %v889
    %2466 = vmatprep.subr.bf16.mxu0 %v894
    %2467 = vmatpush1.bf16.msra.mxu0 %v893
    %2468 = vmatprep.subr.bf16.mxu0 %v898
    %2469 = vmatpush1.bf16.msra.mxu0 %v897
    %2470 = vmatprep.subr.bf16.mxu0 %v902
    %2471 = vmatpush1.bf16.msra.mxu0 %v901
    %2472 = vmatprep.subr.bf16.mxu0 %v906
    %2473 = vmatpush1.bf16.msra.mxu0 %v905
    %2474 = vmatprep.subr.bf16.mxu0 %v910
    %2475 = vmatpush1.bf16.msra.mxu0 %v909
    %2476 = vmatprep.subr.bf16.mxu0 %v914
    %2477 = vmatpush1.bf16.msra.mxu0 %v913
    %2478 = vmatprep.subr.bf16.mxu0 %v918
    %2479 = vmatpush1.bf16.msra.mxu0 %v917
    %2480 = vmatprep.subr.bf16.mxu0 %v922
    %2481 = vmatpush1.bf16.msra.mxu0 %v921
    %2482 = vmatprep.subr.bf16.mxu0 %v926
    %2483 = vmatpush1.bf16.msra.mxu0 %v925
    %2484 = vmatprep.subr.bf16.mxu0 %v930
    %2485 = vmatpush1.bf16.msra.mxu0 %v929
    %2486 = vmatprep.mubr.bf16.mxu0 %v2412
    %2487 = vmatmul.mubr.bf16.gmra.mrb[0].mxu0 %v2411
    %v2488 = vpop.f32.mrb[0].mxu0
    %v2489 = vadd.f32 %v703, %v2488
    %v2490 = vpop.f32.mrb[0].mxu0
    %v2491 = vadd.f32 %v707, %v2490
    %v2492 = vpop.f32.mrb[0].mxu0
    %v2493 = vpop.f32.mrb[0].mxu0
    %2494 = vdwg.mxu0
    %v2495 = vxor.u32 %v2448, 2147483648
    %v2496 = vxor.u32 %v2450, 2147483648
    %v2497 = vxor.u32 %v2489, 2147483648
    %v2498 = vmul.f32 %v2495, 1.442695
    %v2499 = vpow.pop %v2498
    %v2500 = vmul.f32 %v2496, 1.442695
    %v2501 = vpow.pop %v2500
    %v2502 = vmul.f32 %v2497, 1.442695
    %v2503 = vpow.pop %v2502
    %v2504 = vadd.f32 %v2499, 1.0
    %v2505 = vadd.f32 %v2501, 1.0
    %v2506 = vadd.f32 %v2503, 1.0
    %v2507 = vrcp.pop %v2504
    %v2508 = vmul.f32 1.0, %v2507
    %v2509 = vrcp.pop %v2505
    %v2510 = vmul.f32 1.0, %v2509
    %v2511 = vrcp.pop %v2506
    %v2512 = vmul.f32 1.0, %v2511
    %v2513 = vtanh.pop %v2491
    %v2514 = vmul.f32 %v2510, %v2384
    %v2515 = vmul.f32 %v2508, %v2513
    %v2516 = vadd.f32 %v2514, %v2515
    %v2517 = vtanh.pop %v2516
    %v2518 = vmul.f32 %v2512, %v2517
    %v2519 = vpack.c.bf16 %v2518, %v2518
    %v2520 = vld [vmem:[#allocation5] sm:$0xff]
    %v2521 = vld [vmem:[#allocation5 + $0x8] sm:$0xff]
    %v2522 = vld [vmem:[#allocation5 + $0x10] sm:$0xff]
    %v2523 = vld [vmem:[#allocation5 + $0x18] sm:$0xff]
    %v2524 = vld [vmem:[#allocation5 + $0x20] sm:$0xff]
    %v2525 = vld [vmem:[#allocation5 + $0x28] sm:$0xff]
    %v2526 = vld [vmem:[#allocation5 + $0x30] sm:$0xff]
    %v2527 = vld [vmem:[#allocation5 + $0x38] sm:$0xff]
    %v2528 = vld [vmem:[%s7] sm:$0x1]
    %v2530 = vlaneseq
    %v2531 = vshrl.u32 %v2530, 7
    %v2532 = vsub.s32 0, %v2531
    %v2533 = vrot.slane %v2528, %v2532
    %2535 = vmatprep.subr.bf16.mxu0 0
    %2536 = vmatpush1.bf16.msra.mxu0 %v2520
    %2537 = vmatprep.subr.bf16.mxu0 0
    %2538 = vmatpush1.bf16.msra.mxu0 %v2521
    %2539 = vmatprep.subr.bf16.mxu0 0
    %2540 = vmatpush1.bf16.msra.mxu0 %v2522
    %2541 = vmatprep.subr.bf16.mxu0 0
    %2542 = vmatpush1.bf16.msra.mxu0 %v2523
    %2543 = vmatprep.subr.bf16.mxu0 0
    %2544 = vmatpush1.bf16.msra.mxu0 %v2524
    %2545 = vmatprep.subr.bf16.mxu0 0
    %2546 = vmatpush1.bf16.msra.mxu0 %v2525
    %2547 = vmatprep.subr.bf16.mxu0 0
    %2548 = vmatpush1.bf16.msra.mxu0 %v2526
    %2549 = vmatprep.subr.bf16.mxu0 0
    %2550 = vmatpush1.bf16.msra.mxu0 %v2527
    %2551 = vmatprep.subr.bf16.mxu0 0
    %2552 = vmatpush1.bf16.msra.mxu0 0
    %2553 = vmatprep.subr.bf16.mxu0 0
    %2554 = vmatpush1.bf16.msra.mxu0 0
    %2555 = vmatprep.subr.bf16.mxu0 0
    %2556 = vmatpush1.bf16.msra.mxu0 0
    %2557 = vmatprep.subr.bf16.mxu0 0
    %2558 = vmatpush1.bf16.msra.mxu0 0
    %2559 = vmatprep.subr.bf16.mxu0 0
    %2560 = vmatpush1.bf16.msra.mxu0 0
    %2561 = vmatprep.subr.bf16.mxu0 0
    %2562 = vmatpush1.bf16.msra.mxu0 0
    %2563 = vmatprep.subr.bf16.mxu0 0
    %2564 = vmatpush1.bf16.msra.mxu0 0
    %2565 = vmatprep.subr.bf16.mxu0 0
    %2566 = vmatpush1.bf16.msra.mxu0 0
    %2567 = vmatprep.mubr.bf16.mxu0 0
    %2568 = vmatmul.mubr.bf16.gmra.mrb[0].mxu0 %v2519
    %v2569 = vpop.f32.mrb[0].mxu0
    %v2570 = vadd.f32 %v2533, %v2569
    %v2571 = vpop.f32.mrb[0].mxu0
    %v2572 = vpop.f32.mrb[0].mxu0
    %v2573 = vpop.f32.mrb[0].mxu0
    %2574 = vdwg.mxu0
    %2575 = vst [vmem:[%s8] sm:$0xff] %v2570
    // Predicated region
    $region67: #{rnn_with_embed_forward.1} parent=1 // pred_check
      _
    $region68: #{rnn_with_embed_forward.1} parent=1 // pred_check_branch
      %2577 = sbr.rel (0) target = $region70
    $region69: #{rnn_with_embed_forward.1} parent=1 // pred_region
      _
    $region70: #{rnn_with_embed_forward.1} parent=1 // pred_fallthru
      _
    // Predicated region
    $region71: #{rnn_with_embed_forward.1} parent=1 // pred_check
      _
    $region72: #{rnn_with_embed_forward.1} parent=1 // pred_check_branch
      %2579 = sbr.rel (0) target = $region74
    $region73: #{rnn_with_embed_forward.1} parent=1 // pred_region
      _
    $region74: #{rnn_with_embed_forward.1} parent=1 // pred_fallthru
      _
    %2580 = vsyncpa [#allocation8], 1
  %2581 = vsyncmov [#allocation6]
  %s2582 = vpop.sfrf %2581
  %p2583 = scmp.eq.s32.totalorder %s2582, 0
  %p2584 = pneg %p2583
  %2586 = shalt.err (%p2584)
  %s2587 = scalar_lea.sflag [#allocation6], 1
  %2588 = vsyncmov %s2587
  %s2589 = vpop.sfrf %2588
  %p2590 = scmp.eq.s32.totalorder %s2589, 0
  %p2591 = pneg %p2590
  %2593 = shalt.err (%p2591)
  %s2594 = scalar_lea.sflag [#allocation6], 2
  %2595 = vsyncmov %s2594
  %s2596 = vpop.sfrf %2595
  %p2597 = scmp.eq.s32.totalorder %s2596, 0
  %p2598 = pneg %p2597
  %2600 = shalt.err (%p2598)

</llo_original>
